<compile_context>
chip_gen: v5e
topology: v5e:2x2
jax: 0.10.0
libtpu: 0.0.40
codegen_flags: <defaults>
</compile_context>

<pallas_src>
import math
import functools

import jax
import jax.numpy as jnp
from jax.experimental import pallas as pl
from jax.experimental.pallas import tpu as pltpu


# ----------------------------------------------------------------------------
# Helpers shared by the kernel and the pure-JAX reference.
# ----------------------------------------------------------------------------
def _sigmoid(x):
    # explicit form (exp on the EUP, divide on the VPU) — avoids relying on
    # lax.logistic lowering and keeps kernel/reference math identical.
    return 1.0 / (1.0 + jnp.exp(-x))


def _lstm_step(x_t, h, c, wi, wh, b):
    """One LSTM(1 -> 1) step, vectorized over the batch tile.

    x_t, h, c: (TB, 1);  wi, wh, b: (1, 4) with PyTorch gate order [i, f, g, o].
    """
    g = x_t * wi + h * wh + b                 # (TB, 4) gate pre-activations
    i_ = _sigmoid(g[:, 0:1])
    f_ = _sigmoid(g[:, 1:2])
    g_ = jnp.tanh(g[:, 2:3])
    o_ = _sigmoid(g[:, 3:4])
    c_new = f_ * c + i_ * g_
    h_new = o_ * jnp.tanh(c_new)
    return h_new, c_new


# ----------------------------------------------------------------------------
# Fused Pallas kernel: one batch tile does the whole forward pass in VMEM.
# ----------------------------------------------------------------------------
def _attn_birnn_kernel(x_ref, mask_ref, ctx_ref, wi_ref, wh_ref, b_ref,
                       min_ref, a_ref):
    TB, S, F = x_ref.shape
    x = x_ref[...]                                        # (TB, S, F) f32

    # 1) temp[b, s] = x[b, s, :] @ context_vector.  The projection is rank-1
    #    (output width 1), so a VPU multiply + lane reduction beats an almost
    #    empty MXU matmul.
    ctx = ctx_ref[...].reshape(1, 1, F)                   # (1, 1, F)
    temp = jnp.sum(x * ctx, axis=-1)                      # (TB, S)
    # TODO(synk): Dropout2d(p=0.5) on temp is a training-time op; the forward
    # pass here implements eval/inference mode where it is the identity.

    # 2) Bidirectional LSTM(input=1, hidden=1), unrolled over the (small,
    #    static) step dimension.  Parameters stay resident (constant index_map).
    wi = wi_ref[...]
    wh = wh_ref[...]
    b = b_ref[...]                                        # (2, 4) each
    wi_f, wi_b = wi[0:1, :], wi[1:2, :]
    wh_f, wh_b = wh[0:1, :], wh[1:2, :]
    b_f, b_b = b[0:1, :], b[1:2, :]

    zero = jnp.zeros((TB, 1), jnp.float32)
    h_f = c_f = zero
    h_b = c_b = zero
    fwd = [None] * S
    bwd = [None] * S
    for i in range(S):
        h_f, c_f = _lstm_step(temp[:, i:i + 1], h_f, c_f, wi_f, wh_f, b_f)
        fwd[i] = h_f
        j = S - 1 - i
        h_b, c_b = _lstm_step(temp[:, j:j + 1], h_b, c_b, wi_b, wh_b, b_b)
        bwd[j] = h_b

    # scores[b, t] = h_fwd[b, t] + h_bwd[b, t], assembled with lane selects
    # (avoids minor-dim concatenation / dynamic lane stores).
    col = jax.lax.broadcasted_iota(jnp.int32, (1, S), 1)
    scores = jnp.zeros((TB, S), jnp.float32)
    for t in range(S):
        scores = scores + jnp.where(col == t, fwd[t] + bwd[t], 0.0)

    # 3) Mask + softmax over the step dimension.  A large finite negative is
    #    used instead of -inf so an all-masked row cannot produce NaN.
    valid = mask_ref[...] != 0
    scores = jnp.where(valid, scores, jnp.float32(-1e30))
    smax = jnp.max(scores, axis=1, keepdims=True)
    p = jnp.exp(scores - smax)
    denom = jnp.sum(p, axis=1, keepdims=True)
    # approx=True would push this onto the EUP, but the softmax here is only
    # (TB, S); keep the exact reciprocal so the correctness check stays tight.
    a = p * pl.reciprocal(denom, approx=False)            # (TB, S)
    a_ref[...] = a

    # 4) Weighted input and min over the step dimension (masked steps have
    #    a == 0 and therefore contribute 0, exactly as in the PyTorch module).
    weighted = x * a[:, :, None]                          # (TB, S, F)
    min_ref[...] = jnp.min(weighted, axis=1)              # (TB, F)


# ----------------------------------------------------------------------------
# Wrapper: grid over the batch dimension, weights resident across tiles.
# ----------------------------------------------------------------------------
@functools.partial(jax.jit, static_argnames=("tb",))
def attention_birnn_forward(x, mask_i32, ctx_row, wi, wh, bsum, *, tb=None):
    B, S, F = x.shape
    if tb is None:
        tb = 8 if B % 8 == 0 else B        # TB multiple of 8 (sublane tiling)
    assert B % tb == 0, "batch must be divisible by the batch tile"

    out_shape = (jax.ShapeDtypeStruct((B, F), jnp.float32),   # min over steps
                 jax.ShapeDtypeStruct((B, S), jnp.float32))   # attention a

    return pl.pallas_call(
        _attn_birnn_kernel,
        out_shape=out_shape,
        grid=(B // tb,),
        in_specs=[
            pl.BlockSpec((tb, S, F), lambda i: (i, 0, 0)),    # x (tiled batch)
            pl.BlockSpec((tb, S), lambda i: (i, 0)),          # mask
            pl.BlockSpec((1, F), lambda i: (0, 0)),           # context (resident)
            pl.BlockSpec((2, 4), lambda i: (0, 0)),           # LSTM w_ih
            pl.BlockSpec((2, 4), lambda i: (0, 0)),           # LSTM w_hh
            pl.BlockSpec((2, 4), lambda i: (0, 0)),           # LSTM bias (ih+hh)
        ],
        out_specs=(pl.BlockSpec((tb, F), lambda i: (i, 0)),
                   pl.BlockSpec((tb, S), lambda i: (i, 0))),
        compiler_params=pltpu.CompilerParams(
            dimension_semantics=("parallel",),                # shard TB tiles
            vmem_limit_bytes=48 * 1024 * 1024),               # safe on v5e/v6e/v7x
    )(x, mask_i32, ctx_row, wi, wh, bsum)


# ----------------------------------------------------------------------------
# Pure-JAX reference mirroring the PyTorch forward (eval mode).
# ----------------------------------------------------------------------------
def ref_forward(x, mask_bool, ctx_vec, wi, wh, bsum):
    B, S, F = x.shape
    temp = jnp.einsum("bsf,f->bs", x, ctx_vec)            # Dropout2d(eval) = id

    def run(direction):
        w_i, w_h, b = wi[direction], wh[direction], bsum[direction]
        h = jnp.zeros((B,), jnp.float32)
        c = jnp.zeros((B,), jnp.float32)
        order = range(S) if direction == 0 else range(S - 1, -1, -1)
        hs = [None] * S
        for t in order:
            g = (temp[:, t][:, None] * w_i[None, :]
                 + h[:, None] * w_h[None, :] + b[None, :])
            i_ = _sigmoid(g[:, 0])
            f_ = _sigmoid(g[:, 1])
            g_ = jnp.tanh(g[:, 2])
            o_ = _sigmoid(g[:, 3])
            c = f_ * c + i_ * g_
            h = o_ * jnp.tanh(c)
            hs[t] = h
        return jnp.stack(hs, axis=1)                      # (B, S)

    scores = run(0) + run(1)
    scores = jnp.where(mask_bool, scores, -jnp.inf)
    a = jax.nn.softmax(scores, axis=1)
    weighted = x * a[..., None]
    return jnp.min(weighted, axis=1), a


# ----------------------------------------------------------------------------
# Example run + correctness check.
# ----------------------------------------------------------------------------
if __name__ == "__main__":
    key = jax.random.PRNGKey(0)
    B, S, F = 16, 8, 128        # batch, step_dim, feature_dim (lane-dense F)

    k1, k2, k3, k4, k5, k6, k7 = jax.random.split(key, 7)
    x = jax.random.normal(k1, (B, S, F), jnp.float32)

    # mask: valid length per row, at least one True per row.
    lengths = jax.random.randint(k2, (B,), 1, S + 1)
    mask_bool = jnp.arange(S)[None, :] < lengths[:, None]        # (B, S) bool
    mask_i32 = mask_bool.astype(jnp.int32)

    # context_vector: xavier_uniform_ on zeros(F, 1), as in the module.
    bound = math.sqrt(6.0 / (F + 1))
    ctx_col = jax.random.uniform(k3, (F, 1), jnp.float32, -bound, bound)
    ctx_row = ctx_col.T.reshape(1, F)                            # lane-dense

    # nn.LSTM(1, 1, bidirectional) params; PyTorch init is U(-1, 1) (hidden=1).
    wi = jax.random.uniform(k4, (2, 4), jnp.float32, -1.0, 1.0)  # [dir, gate]
    wh = jax.random.uniform(k5, (2, 4), jnp.float32, -1.0, 1.0)
    b_ih = jax.random.uniform(k6, (2, 4), jnp.float32, -1.0, 1.0)
    b_hh = jax.random.uniform(k7, (2, 4), jnp.float32, -1.0, 1.0)
    bsum = b_ih + b_hh

    min_out, att = attention_birnn_forward(x, mask_i32, ctx_row, wi, wh, bsum)
    jax.block_until_ready((min_out, att))

    ref_min, ref_att = ref_forward(x, mask_bool, ctx_col[:, 0], wi, wh, bsum)
    assert jnp.allclose(att, ref_att, atol=2e-4, rtol=2e-4), "attention mismatch"
    assert jnp.allclose(min_out, ref_min, atol=2e-4, rtol=2e-4), "min output mismatch"

    print("KERNEL_OK")
</pallas_src>

<mosaic_0001>
module attributes {stable_mosaic.version = 11 : i64} {
  func.func @_attn_birnn_kernel(%arg0: i32, %arg1: memref<8x8x128xf32, #tpu.memory_space<vmem>>, %arg2: memref<8x8xi32, #tpu.memory_space<vmem>>, %arg3: memref<1x128xf32, #tpu.memory_space<vmem>>, %arg4: memref<2x4xf32, #tpu.memory_space<vmem>>, %arg5: memref<2x4xf32, #tpu.memory_space<vmem>>, %arg6: memref<2x4xf32, #tpu.memory_space<vmem>>, %arg7: memref<8x128xf32, #tpu.memory_space<vmem>>, %arg8: memref<8x8xf32, #tpu.memory_space<vmem>>) attributes {dimension_semantics = [#tpu.dimension_semantics<parallel>], iteration_bounds = array<i64: 2>, scalar_prefetch = 0 : i64, scratch_operands = 0 : i64, tpu.core_type = #tpu.core_type<tc>, window_params = [{transform_indices = @transform_0, window_bounds = array<i64: 8, 8, 128>}, {transform_indices = @transform_1, window_bounds = array<i64: 8, 8>}, {pipeline_mode = #tpu.pipeline_mode<synchronous>, transform_indices = @transform_2, window_bounds = array<i64: 1, 128>}, {pipeline_mode = #tpu.pipeline_mode<synchronous>, transform_indices = @transform_3, window_bounds = array<i64: 2, 4>}, {pipeline_mode = #tpu.pipeline_mode<synchronous>, transform_indices = @transform_4, window_bounds = array<i64: 2, 4>}, {pipeline_mode = #tpu.pipeline_mode<synchronous>, transform_indices = @transform_5, window_bounds = array<i64: 2, 4>}, {transform_indices = @transform_6, window_bounds = array<i64: 8, 128>}, {transform_indices = @transform_7, window_bounds = array<i64: 8, 8>}]} {
    %c0 = arith.constant 0 : index
    %c0_0 = arith.constant 0 : index
    %c0_1 = arith.constant 0 : index
    %0 = vector.load %arg1[%c0, %c0_0, %c0_1] : memref<8x8x128xf32, #tpu.memory_space<vmem>>, vector<8x8x128xf32>
    %c0_2 = arith.constant 0 : index
    %c0_3 = arith.constant 0 : index
    %1 = vector.load %arg3[%c0_2, %c0_3] : memref<1x128xf32, #tpu.memory_space<vmem>>, vector<1x128xf32>
    %2 = vector.shape_cast %1 : vector<1x128xf32> to vector<1x1x128xf32>
    %3 = vector.broadcast %2 : vector<1x1x128xf32> to vector<8x8x128xf32>
    %4 = arith.mulf %0, %3 : vector<8x8x128xf32>
    %cst = arith.constant dense<0.000000e+00> : vector<8x8xf32>
    %5 = vector.multi_reduction <add>, %4, %cst [2] : vector<8x8x128xf32> to vector<8x8xf32>
    %c0_4 = arith.constant 0 : index
    %c0_5 = arith.constant 0 : index
    %6 = vector.load %arg4[%c0_4, %c0_5] : memref<2x4xf32, #tpu.memory_space<vmem>>, vector<2x4xf32>
    %c0_6 = arith.constant 0 : index
    %c0_7 = arith.constant 0 : index
    %7 = vector.load %arg5[%c0_6, %c0_7] : memref<2x4xf32, #tpu.memory_space<vmem>>, vector<2x4xf32>
    %c0_8 = arith.constant 0 : index
    %c0_9 = arith.constant 0 : index
    %8 = vector.load %arg6[%c0_8, %c0_9] : memref<2x4xf32, #tpu.memory_space<vmem>>, vector<2x4xf32>
    %9 = vector.extract_strided_slice %6 {offsets = [0, 0], sizes = [1, 4], strides = [1, 1]} : vector<2x4xf32> to vector<1x4xf32>
    %10 = vector.extract_strided_slice %6 {offsets = [1, 0], sizes = [1, 4], strides = [1, 1]} : vector<2x4xf32> to vector<1x4xf32>
    %11 = vector.extract_strided_slice %7 {offsets = [0, 0], sizes = [1, 4], strides = [1, 1]} : vector<2x4xf32> to vector<1x4xf32>
    %12 = vector.extract_strided_slice %7 {offsets = [1, 0], sizes = [1, 4], strides = [1, 1]} : vector<2x4xf32> to vector<1x4xf32>
    %13 = vector.extract_strided_slice %8 {offsets = [0, 0], sizes = [1, 4], strides = [1, 1]} : vector<2x4xf32> to vector<1x4xf32>
    %14 = vector.extract_strided_slice %8 {offsets = [1, 0], sizes = [1, 4], strides = [1, 1]} : vector<2x4xf32> to vector<1x4xf32>
    %cst_10 = arith.constant 0.000000e+00 : f32
    %15 = vector.broadcast %cst_10 : f32 to vector<8x1xf32>
    %16 = vector.extract_strided_slice %5 {offsets = [0, 0], sizes = [8, 1], strides = [1, 1]} : vector<8x8xf32> to vector<8x1xf32>
    %17 = vector.broadcast %16 : vector<8x1xf32> to vector<8x4xf32>
    %18 = vector.broadcast %9 : vector<1x4xf32> to vector<8x4xf32>
    %19 = arith.mulf %17, %18 : vector<8x4xf32>
    %20 = vector.broadcast %15 : vector<8x1xf32> to vector<8x4xf32>
    %21 = vector.broadcast %11 : vector<1x4xf32> to vector<8x4xf32>
    %22 = arith.mulf %20, %21 : vector<8x4xf32>
    %23 = arith.addf %19, %22 : vector<8x4xf32>
    %24 = vector.broadcast %13 : vector<1x4xf32> to vector<8x4xf32>
    %25 = arith.addf %23, %24 : vector<8x4xf32>
    %26 = vector.extract_strided_slice %25 {offsets = [0, 0], sizes = [8, 1], strides = [1, 1]} : vector<8x4xf32> to vector<8x1xf32>
    %cst_11 = arith.constant 0.000000e+00 : f32
    %27 = vector.broadcast %cst_11 : f32 to vector<8x1xf32>
    %28 = arith.subf %27, %26 : vector<8x1xf32>
    %29 = math.exp %28 : vector<8x1xf32>
    %cst_12 = arith.constant 1.000000e+00 : f32
    %30 = vector.broadcast %cst_12 : f32 to vector<8x1xf32>
    %31 = arith.addf %30, %29 : vector<8x1xf32>
    %cst_13 = arith.constant 1.000000e+00 : f32
    %32 = vector.broadcast %cst_13 : f32 to vector<8x1xf32>
    %33 = arith.divf %32, %31 : vector<8x1xf32>
    %34 = vector.extract_strided_slice %25 {offsets = [0, 1], sizes = [8, 1], strides = [1, 1]} : vector<8x4xf32> to vector<8x1xf32>
    %cst_14 = arith.constant 0.000000e+00 : f32
    %35 = vector.broadcast %cst_14 : f32 to vector<8x1xf32>
    %36 = arith.subf %35, %34 : vector<8x1xf32>
    %37 = math.exp %36 : vector<8x1xf32>
    %cst_15 = arith.constant 1.000000e+00 : f32
    %38 = vector.broadcast %cst_15 : f32 to vector<8x1xf32>
    %39 = arith.addf %38, %37 : vector<8x1xf32>
    %cst_16 = arith.constant 1.000000e+00 : f32
    %40 = vector.broadcast %cst_16 : f32 to vector<8x1xf32>
    %41 = arith.divf %40, %39 : vector<8x1xf32>
    %42 = vector.extract_strided_slice %25 {offsets = [0, 2], sizes = [8, 1], strides = [1, 1]} : vector<8x4xf32> to vector<8x1xf32>
    %43 = math.tanh %42 : vector<8x1xf32>
    %44 = vector.extract_strided_slice %25 {offsets = [0, 3], sizes = [8, 1], strides = [1, 1]} : vector<8x4xf32> to vector<8x1xf32>
    %cst_17 = arith.constant 0.000000e+00 : f32
    %45 = vector.broadcast %cst_17 : f32 to vector<8x1xf32>
    %46 = arith.subf %45, %44 : vector<8x1xf32>
    %47 = math.exp %46 : vector<8x1xf32>
    %cst_18 = arith.constant 1.000000e+00 : f32
    %48 = vector.broadcast %cst_18 : f32 to vector<8x1xf32>
    %49 = arith.addf %48, %47 : vector<8x1xf32>
    %cst_19 = arith.constant 1.000000e+00 : f32
    %50 = vector.broadcast %cst_19 : f32 to vector<8x1xf32>
    %51 = arith.divf %50, %49 : vector<8x1xf32>
    %52 = arith.mulf %41, %15 : vector<8x1xf32>
    %53 = arith.mulf %33, %43 : vector<8x1xf32>
    %54 = arith.addf %52, %53 : vector<8x1xf32>
    %55 = math.tanh %54 : vector<8x1xf32>
    %56 = arith.mulf %51, %55 : vector<8x1xf32>
    %57 = vector.extract_strided_slice %5 {offsets = [0, 7], sizes = [8, 1], strides = [1, 1]} : vector<8x8xf32> to vector<8x1xf32>
    %58 = vector.broadcast %57 : vector<8x1xf32> to vector<8x4xf32>
    %59 = vector.broadcast %10 : vector<1x4xf32> to vector<8x4xf32>
    %60 = arith.mulf %58, %59 : vector<8x4xf32>
    %61 = vector.broadcast %15 : vector<8x1xf32> to vector<8x4xf32>
    %62 = vector.broadcast %12 : vector<1x4xf32> to vector<8x4xf32>
    %63 = arith.mulf %61, %62 : vector<8x4xf32>
    %64 = arith.addf %60, %63 : vector<8x4xf32>
    %65 = vector.broadcast %14 : vector<1x4xf32> to vector<8x4xf32>
    %66 = arith.addf %64, %65 : vector<8x4xf32>
    %67 = vector.extract_strided_slice %66 {offsets = [0, 0], sizes = [8, 1], strides = [1, 1]} : vector<8x4xf32> to vector<8x1xf32>
    %cst_20 = arith.constant 0.000000e+00 : f32
    %68 = vector.broadcast %cst_20 : f32 to vector<8x1xf32>
    %69 = arith.subf %68, %67 : vector<8x1xf32>
    %70 = math.exp %69 : vector<8x1xf32>
    %cst_21 = arith.constant 1.000000e+00 : f32
    %71 = vector.broadcast %cst_21 : f32 to vector<8x1xf32>
    %72 = arith.addf %71, %70 : vector<8x1xf32>
    %cst_22 = arith.constant 1.000000e+00 : f32
    %73 = vector.broadcast %cst_22 : f32 to vector<8x1xf32>
    %74 = arith.divf %73, %72 : vector<8x1xf32>
    %75 = vector.extract_strided_slice %66 {offsets = [0, 1], sizes = [8, 1], strides = [1, 1]} : vector<8x4xf32> to vector<8x1xf32>
    %cst_23 = arith.constant 0.000000e+00 : f32
    %76 = vector.broadcast %cst_23 : f32 to vector<8x1xf32>
    %77 = arith.subf %76, %75 : vector<8x1xf32>
    %78 = math.exp %77 : vector<8x1xf32>
    %cst_24 = arith.constant 1.000000e+00 : f32
    %79 = vector.broadcast %cst_24 : f32 to vector<8x1xf32>
    %80 = arith.addf %79, %78 : vector<8x1xf32>
    %cst_25 = arith.constant 1.000000e+00 : f32
    %81 = vector.broadcast %cst_25 : f32 to vector<8x1xf32>
    %82 = arith.divf %81, %80 : vector<8x1xf32>
    %83 = vector.extract_strided_slice %66 {offsets = [0, 2], sizes = [8, 1], strides = [1, 1]} : vector<8x4xf32> to vector<8x1xf32>
    %84 = math.tanh %83 : vector<8x1xf32>
    %85 = vector.extract_strided_slice %66 {offsets = [0, 3], sizes = [8, 1], strides = [1, 1]} : vector<8x4xf32> to vector<8x1xf32>
    %cst_26 = arith.constant 0.000000e+00 : f32
    %86 = vector.broadcast %cst_26 : f32 to vector<8x1xf32>
    %87 = arith.subf %86, %85 : vector<8x1xf32>
    %88 = math.exp %87 : vector<8x1xf32>
    %cst_27 = arith.constant 1.000000e+00 : f32
    %89 = vector.broadcast %cst_27 : f32 to vector<8x1xf32>
    %90 = arith.addf %89, %88 : vector<8x1xf32>
    %cst_28 = arith.constant 1.000000e+00 : f32
    %91 = vector.broadcast %cst_28 : f32 to vector<8x1xf32>
    %92 = arith.divf %91, %90 : vector<8x1xf32>
    %93 = arith.mulf %82, %15 : vector<8x1xf32>
    %94 = arith.mulf %74, %84 : vector<8x1xf32>
    %95 = arith.addf %93, %94 : vector<8x1xf32>
    %96 = math.tanh %95 : vector<8x1xf32>
    %97 = arith.mulf %92, %96 : vector<8x1xf32>
    %98 = vector.extract_strided_slice %5 {offsets = [0, 1], sizes = [8, 1], strides = [1, 1]} : vector<8x8xf32> to vector<8x1xf32>
    %99 = vector.broadcast %98 : vector<8x1xf32> to vector<8x4xf32>
    %100 = vector.broadcast %9 : vector<1x4xf32> to vector<8x4xf32>
    %101 = arith.mulf %99, %100 : vector<8x4xf32>
    %102 = vector.broadcast %56 : vector<8x1xf32> to vector<8x4xf32>
    %103 = vector.broadcast %11 : vector<1x4xf32> to vector<8x4xf32>
    %104 = arith.mulf %102, %103 : vector<8x4xf32>
    %105 = arith.addf %101, %104 : vector<8x4xf32>
    %106 = vector.broadcast %13 : vector<1x4xf32> to vector<8x4xf32>
    %107 = arith.addf %105, %106 : vector<8x4xf32>
    %108 = vector.extract_strided_slice %107 {offsets = [0, 0], sizes = [8, 1], strides = [1, 1]} : vector<8x4xf32> to vector<8x1xf32>
    %cst_29 = arith.constant 0.000000e+00 : f32
    %109 = vector.broadcast %cst_29 : f32 to vector<8x1xf32>
    %110 = arith.subf %109, %108 : vector<8x1xf32>
    %111 = math.exp %110 : vector<8x1xf32>
    %cst_30 = arith.constant 1.000000e+00 : f32
    %112 = vector.broadcast %cst_30 : f32 to vector<8x1xf32>
    %113 = arith.addf %112, %111 : vector<8x1xf32>
    %cst_31 = arith.constant 1.000000e+00 : f32
    %114 = vector.broadcast %cst_31 : f32 to vector<8x1xf32>
    %115 = arith.divf %114, %113 : vector<8x1xf32>
    %116 = vector.extract_strided_slice %107 {offsets = [0, 1], sizes = [8, 1], strides = [1, 1]} : vector<8x4xf32> to vector<8x1xf32>
    %cst_32 = arith.constant 0.000000e+00 : f32
    %117 = vector.broadcast %cst_32 : f32 to vector<8x1xf32>
    %118 = arith.subf %117, %116 : vector<8x1xf32>
    %119 = math.exp %118 : vector<8x1xf32>
    %cst_33 = arith.constant 1.000000e+00 : f32
    %120 = vector.broadcast %cst_33 : f32 to vector<8x1xf32>
    %121 = arith.addf %120, %119 : vector<8x1xf32>
    %cst_34 = arith.constant 1.000000e+00 : f32
    %122 = vector.broadcast %cst_34 : f32 to vector<8x1xf32>
    %123 = arith.divf %122, %121 : vector<8x1xf32>
    %124 = vector.extract_strided_slice %107 {offsets = [0, 2], sizes = [8, 1], strides = [1, 1]} : vector<8x4xf32> to vector<8x1xf32>
    %125 = math.tanh %124 : vector<8x1xf32>
    %126 = vector.extract_strided_slice %107 {offsets = [0, 3], sizes = [8, 1], strides = [1, 1]} : vector<8x4xf32> to vector<8x1xf32>
    %cst_35 = arith.constant 0.000000e+00 : f32
    %127 = vector.broadcast %cst_35 : f32 to vector<8x1xf32>
    %128 = arith.subf %127, %126 : vector<8x1xf32>
    %129 = math.exp %128 : vector<8x1xf32>
    %cst_36 = arith.constant 1.000000e+00 : f32
    %130 = vector.broadcast %cst_36 : f32 to vector<8x1xf32>
    %131 = arith.addf %130, %129 : vector<8x1xf32>
    %cst_37 = arith.constant 1.000000e+00 : f32
    %132 = vector.broadcast %cst_37 : f32 to vector<8x1xf32>
    %133 = arith.divf %132, %131 : vector<8x1xf32>
    %134 = arith.mulf %123, %54 : vector<8x1xf32>
    %135 = arith.mulf %115, %125 : vector<8x1xf32>
    %136 = arith.addf %134, %135 : vector<8x1xf32>
    %137 = math.tanh %136 : vector<8x1xf32>
    %138 = arith.mulf %133, %137 : vector<8x1xf32>
    %139 = vector.extract_strided_slice %5 {offsets = [0, 6], sizes = [8, 1], strides = [1, 1]} : vector<8x8xf32> to vector<8x1xf32>
    %140 = vector.broadcast %139 : vector<8x1xf32> to vector<8x4xf32>
    %141 = vector.broadcast %10 : vector<1x4xf32> to vector<8x4xf32>
    %142 = arith.mulf %140, %141 : vector<8x4xf32>
    %143 = vector.broadcast %97 : vector<8x1xf32> to vector<8x4xf32>
    %144 = vector.broadcast %12 : vector<1x4xf32> to vector<8x4xf32>
    %145 = arith.mulf %143, %144 : vector<8x4xf32>
    %146 = arith.addf %142, %145 : vector<8x4xf32>
    %147 = vector.broadcast %14 : vector<1x4xf32> to vector<8x4xf32>
    %148 = arith.addf %146, %147 : vector<8x4xf32>
    %149 = vector.extract_strided_slice %148 {offsets = [0, 0], sizes = [8, 1], strides = [1, 1]} : vector<8x4xf32> to vector<8x1xf32>
    %cst_38 = arith.constant 0.000000e+00 : f32
    %150 = vector.broadcast %cst_38 : f32 to vector<8x1xf32>
    %151 = arith.subf %150, %149 : vector<8x1xf32>
    %152 = math.exp %151 : vector<8x1xf32>
    %cst_39 = arith.constant 1.000000e+00 : f32
    %153 = vector.broadcast %cst_39 : f32 to vector<8x1xf32>
    %154 = arith.addf %153, %152 : vector<8x1xf32>
    %cst_40 = arith.constant 1.000000e+00 : f32
    %155 = vector.broadcast %cst_40 : f32 to vector<8x1xf32>
    %156 = arith.divf %155, %154 : vector<8x1xf32>
    %157 = vector.extract_strided_slice %148 {offsets = [0, 1], sizes = [8, 1], strides = [1, 1]} : vector<8x4xf32> to vector<8x1xf32>
    %cst_41 = arith.constant 0.000000e+00 : f32
    %158 = vector.broadcast %cst_41 : f32 to vector<8x1xf32>
    %159 = arith.subf %158, %157 : vector<8x1xf32>
    %160 = math.exp %159 : vector<8x1xf32>
    %cst_42 = arith.constant 1.000000e+00 : f32
    %161 = vector.broadcast %cst_42 : f32 to vector<8x1xf32>
    %162 = arith.addf %161, %160 : vector<8x1xf32>
    %cst_43 = arith.constant 1.000000e+00 : f32
    %163 = vector.broadcast %cst_43 : f32 to vector<8x1xf32>
    %164 = arith.divf %163, %162 : vector<8x1xf32>
    %165 = vector.extract_strided_slice %148 {offsets = [0, 2], sizes = [8, 1], strides = [1, 1]} : vector<8x4xf32> to vector<8x1xf32>
    %166 = math.tanh %165 : vector<8x1xf32>
    %167 = vector.extract_strided_slice %148 {offsets = [0, 3], sizes = [8, 1], strides = [1, 1]} : vector<8x4xf32> to vector<8x1xf32>
    %cst_44 = arith.constant 0.000000e+00 : f32
    %168 = vector.broadcast %cst_44 : f32 to vector<8x1xf32>
    %169 = arith.subf %168, %167 : vector<8x1xf32>
    %170 = math.exp %169 : vector<8x1xf32>
    %cst_45 = arith.constant 1.000000e+00 : f32
    %171 = vector.broadcast %cst_45 : f32 to vector<8x1xf32>
    %172 = arith.addf %171, %170 : vector<8x1xf32>
    %cst_46 = arith.constant 1.000000e+00 : f32
    %173 = vector.broadcast %cst_46 : f32 to vector<8x1xf32>
    %174 = arith.divf %173, %172 : vector<8x1xf32>
    %175 = arith.mulf %164, %95 : vector<8x1xf32>
    %176 = arith.mulf %156, %166 : vector<8x1xf32>
    %177 = arith.addf %175, %176 : vector<8x1xf32>
    %178 = math.tanh %177 : vector<8x1xf32>
    %179 = arith.mulf %174, %178 : vector<8x1xf32>
    %180 = vector.extract_strided_slice %5 {offsets = [0, 2], sizes = [8, 1], strides = [1, 1]} : vector<8x8xf32> to vector<8x1xf32>
    %181 = vector.broadcast %180 : vector<8x1xf32> to vector<8x4xf32>
    %182 = vector.broadcast %9 : vector<1x4xf32> to vector<8x4xf32>
    %183 = arith.mulf %181, %182 : vector<8x4xf32>
    %184 = vector.broadcast %138 : vector<8x1xf32> to vector<8x4xf32>
    %185 = vector.broadcast %11 : vector<1x4xf32> to vector<8x4xf32>
    %186 = arith.mulf %184, %185 : vector<8x4xf32>
    %187 = arith.addf %183, %186 : vector<8x4xf32>
    %188 = vector.broadcast %13 : vector<1x4xf32> to vector<8x4xf32>
    %189 = arith.addf %187, %188 : vector<8x4xf32>
    %190 = vector.extract_strided_slice %189 {offsets = [0, 0], sizes = [8, 1], strides = [1, 1]} : vector<8x4xf32> to vector<8x1xf32>
    %cst_47 = arith.constant 0.000000e+00 : f32
    %191 = vector.broadcast %cst_47 : f32 to vector<8x1xf32>
    %192 = arith.subf %191, %190 : vector<8x1xf32>
    %193 = math.exp %192 : vector<8x1xf32>
    %cst_48 = arith.constant 1.000000e+00 : f32
    %194 = vector.broadcast %cst_48 : f32 to vector<8x1xf32>
    %195 = arith.addf %194, %193 : vector<8x1xf32>
    %cst_49 = arith.constant 1.000000e+00 : f32
    %196 = vector.broadcast %cst_49 : f32 to vector<8x1xf32>
    %197 = arith.divf %196, %195 : vector<8x1xf32>
    %198 = vector.extract_strided_slice %189 {offsets = [0, 1], sizes = [8, 1], strides = [1, 1]} : vector<8x4xf32> to vector<8x1xf32>
    %cst_50 = arith.constant 0.000000e+00 : f32
    %199 = vector.broadcast %cst_50 : f32 to vector<8x1xf32>
    %200 = arith.subf %199, %198 : vector<8x1xf32>
    %201 = math.exp %200 : vector<8x1xf32>
    %cst_51 = arith.constant 1.000000e+00 : f32
    %202 = vector.broadcast %cst_51 : f32 to vector<8x1xf32>
    %203 = arith.addf %202, %201 : vector<8x1xf32>
    %cst_52 = arith.constant 1.000000e+00 : f32
    %204 = vector.broadcast %cst_52 : f32 to vector<8x1xf32>
    %205 = arith.divf %204, %203 : vector<8x1xf32>
    %206 = vector.extract_strided_slice %189 {offsets = [0, 2], sizes = [8, 1], strides = [1, 1]} : vector<8x4xf32> to vector<8x1xf32>
    %207 = math.tanh %206 : vector<8x1xf32>
    %208 = vector.extract_strided_slice %189 {offsets = [0, 3], sizes = [8, 1], strides = [1, 1]} : vector<8x4xf32> to vector<8x1xf32>
    %cst_53 = arith.constant 0.000000e+00 : f32
    %209 = vector.broadcast %cst_53 : f32 to vector<8x1xf32>
    %210 = arith.subf %209, %208 : vector<8x1xf32>
    %211 = math.exp %210 : vector<8x1xf32>
    %cst_54 = arith.constant 1.000000e+00 : f32
    %212 = vector.broadcast %cst_54 : f32 to vector<8x1xf32>
    %213 = arith.addf %212, %211 : vector<8x1xf32>
    %cst_55 = arith.constant 1.000000e+00 : f32
    %214 = vector.broadcast %cst_55 : f32 to vector<8x1xf32>
    %215 = arith.divf %214, %213 : vector<8x1xf32>
    %216 = arith.mulf %205, %136 : vector<8x1xf32>
    %217 = arith.mulf %197, %207 : vector<8x1xf32>
    %218 = arith.addf %216, %217 : vector<8x1xf32>
    %219 = math.tanh %218 : vector<8x1xf32>
    %220 = arith.mulf %215, %219 : vector<8x1xf32>
    %221 = vector.extract_strided_slice %5 {offsets = [0, 5], sizes = [8, 1], strides = [1, 1]} : vector<8x8xf32> to vector<8x1xf32>
    %222 = vector.broadcast %221 : vector<8x1xf32> to vector<8x4xf32>
    %223 = vector.broadcast %10 : vector<1x4xf32> to vector<8x4xf32>
    %224 = arith.mulf %222, %223 : vector<8x4xf32>
    %225 = vector.broadcast %179 : vector<8x1xf32> to vector<8x4xf32>
    %226 = vector.broadcast %12 : vector<1x4xf32> to vector<8x4xf32>
    %227 = arith.mulf %225, %226 : vector<8x4xf32>
    %228 = arith.addf %224, %227 : vector<8x4xf32>
    %229 = vector.broadcast %14 : vector<1x4xf32> to vector<8x4xf32>
    %230 = arith.addf %228, %229 : vector<8x4xf32>
    %231 = vector.extract_strided_slice %230 {offsets = [0, 0], sizes = [8, 1], strides = [1, 1]} : vector<8x4xf32> to vector<8x1xf32>
    %cst_56 = arith.constant 0.000000e+00 : f32
    %232 = vector.broadcast %cst_56 : f32 to vector<8x1xf32>
    %233 = arith.subf %232, %231 : vector<8x1xf32>
    %234 = math.exp %233 : vector<8x1xf32>
    %cst_57 = arith.constant 1.000000e+00 : f32
    %235 = vector.broadcast %cst_57 : f32 to vector<8x1xf32>
    %236 = arith.addf %235, %234 : vector<8x1xf32>
    %cst_58 = arith.constant 1.000000e+00 : f32
    %237 = vector.broadcast %cst_58 : f32 to vector<8x1xf32>
    %238 = arith.divf %237, %236 : vector<8x1xf32>
    %239 = vector.extract_strided_slice %230 {offsets = [0, 1], sizes = [8, 1], strides = [1, 1]} : vector<8x4xf32> to vector<8x1xf32>
    %cst_59 = arith.constant 0.000000e+00 : f32
    %240 = vector.broadcast %cst_59 : f32 to vector<8x1xf32>
    %241 = arith.subf %240, %239 : vector<8x1xf32>
    %242 = math.exp %241 : vector<8x1xf32>
    %cst_60 = arith.constant 1.000000e+00 : f32
    %243 = vector.broadcast %cst_60 : f32 to vector<8x1xf32>
    %244 = arith.addf %243, %242 : vector<8x1xf32>
    %cst_61 = arith.constant 1.000000e+00 : f32
    %245 = vector.broadcast %cst_61 : f32 to vector<8x1xf32>
    %246 = arith.divf %245, %244 : vector<8x1xf32>
    %247 = vector.extract_strided_slice %230 {offsets = [0, 2], sizes = [8, 1], strides = [1, 1]} : vector<8x4xf32> to vector<8x1xf32>
    %248 = math.tanh %247 : vector<8x1xf32>
    %249 = vector.extract_strided_slice %230 {offsets = [0, 3], sizes = [8, 1], strides = [1, 1]} : vector<8x4xf32> to vector<8x1xf32>
    %cst_62 = arith.constant 0.000000e+00 : f32
    %250 = vector.broadcast %cst_62 : f32 to vector<8x1xf32>
    %251 = arith.subf %250, %249 : vector<8x1xf32>
    %252 = math.exp %251 : vector<8x1xf32>
    %cst_63 = arith.constant 1.000000e+00 : f32
    %253 = vector.broadcast %cst_63 : f32 to vector<8x1xf32>
    %254 = arith.addf %253, %252 : vector<8x1xf32>
    %cst_64 = arith.constant 1.000000e+00 : f32
    %255 = vector.broadcast %cst_64 : f32 to vector<8x1xf32>
    %256 = arith.divf %255, %254 : vector<8x1xf32>
    %257 = arith.mulf %246, %177 : vector<8x1xf32>
    %258 = arith.mulf %238, %248 : vector<8x1xf32>
    %259 = arith.addf %257, %258 : vector<8x1xf32>
    %260 = math.tanh %259 : vector<8x1xf32>
    %261 = arith.mulf %256, %260 : vector<8x1xf32>
    %262 = vector.extract_strided_slice %5 {offsets = [0, 3], sizes = [8, 1], strides = [1, 1]} : vector<8x8xf32> to vector<8x1xf32>
    %263 = vector.broadcast %262 : vector<8x1xf32> to vector<8x4xf32>
    %264 = vector.broadcast %9 : vector<1x4xf32> to vector<8x4xf32>
    %265 = arith.mulf %263, %264 : vector<8x4xf32>
    %266 = vector.broadcast %220 : vector<8x1xf32> to vector<8x4xf32>
    %267 = vector.broadcast %11 : vector<1x4xf32> to vector<8x4xf32>
    %268 = arith.mulf %266, %267 : vector<8x4xf32>
    %269 = arith.addf %265, %268 : vector<8x4xf32>
    %270 = vector.broadcast %13 : vector<1x4xf32> to vector<8x4xf32>
    %271 = arith.addf %269, %270 : vector<8x4xf32>
    %272 = vector.extract_strided_slice %271 {offsets = [0, 0], sizes = [8, 1], strides = [1, 1]} : vector<8x4xf32> to vector<8x1xf32>
    %cst_65 = arith.constant 0.000000e+00 : f32
    %273 = vector.broadcast %cst_65 : f32 to vector<8x1xf32>
    %274 = arith.subf %273, %272 : vector<8x1xf32>
    %275 = math.exp %274 : vector<8x1xf32>
    %cst_66 = arith.constant 1.000000e+00 : f32
    %276 = vector.broadcast %cst_66 : f32 to vector<8x1xf32>
    %277 = arith.addf %276, %275 : vector<8x1xf32>
    %cst_67 = arith.constant 1.000000e+00 : f32
    %278 = vector.broadcast %cst_67 : f32 to vector<8x1xf32>
    %279 = arith.divf %278, %277 : vector<8x1xf32>
    %280 = vector.extract_strided_slice %271 {offsets = [0, 1], sizes = [8, 1], strides = [1, 1]} : vector<8x4xf32> to vector<8x1xf32>
    %cst_68 = arith.constant 0.000000e+00 : f32
    %281 = vector.broadcast %cst_68 : f32 to vector<8x1xf32>
    %282 = arith.subf %281, %280 : vector<8x1xf32>
    %283 = math.exp %282 : vector<8x1xf32>
    %cst_69 = arith.constant 1.000000e+00 : f32
    %284 = vector.broadcast %cst_69 : f32 to vector<8x1xf32>
    %285 = arith.addf %284, %283 : vector<8x1xf32>
    %cst_70 = arith.constant 1.000000e+00 : f32
    %286 = vector.broadcast %cst_70 : f32 to vector<8x1xf32>
    %287 = arith.divf %286, %285 : vector<8x1xf32>
    %288 = vector.extract_strided_slice %271 {offsets = [0, 2], sizes = [8, 1], strides = [1, 1]} : vector<8x4xf32> to vector<8x1xf32>
    %289 = math.tanh %288 : vector<8x1xf32>
    %290 = vector.extract_strided_slice %271 {offsets = [0, 3], sizes = [8, 1], strides = [1, 1]} : vector<8x4xf32> to vector<8x1xf32>
    %cst_71 = arith.constant 0.000000e+00 : f32
    %291 = vector.broadcast %cst_71 : f32 to vector<8x1xf32>
    %292 = arith.subf %291, %290 : vector<8x1xf32>
    %293 = math.exp %292 : vector<8x1xf32>
    %cst_72 = arith.constant 1.000000e+00 : f32
    %294 = vector.broadcast %cst_72 : f32 to vector<8x1xf32>
    %295 = arith.addf %294, %293 : vector<8x1xf32>
    %cst_73 = arith.constant 1.000000e+00 : f32
    %296 = vector.broadcast %cst_73 : f32 to vector<8x1xf32>
    %297 = arith.divf %296, %295 : vector<8x1xf32>
    %298 = arith.mulf %287, %218 : vector<8x1xf32>
    %299 = arith.mulf %279, %289 : vector<8x1xf32>
    %300 = arith.addf %298, %299 : vector<8x1xf32>
    %301 = math.tanh %300 : vector<8x1xf32>
    %302 = arith.mulf %297, %301 : vector<8x1xf32>
    %303 = vector.extract_strided_slice %5 {offsets = [0, 4], sizes = [8, 1], strides = [1, 1]} : vector<8x8xf32> to vector<8x1xf32>
    %304 = vector.broadcast %303 : vector<8x1xf32> to vector<8x4xf32>
    %305 = vector.broadcast %10 : vector<1x4xf32> to vector<8x4xf32>
    %306 = arith.mulf %304, %305 : vector<8x4xf32>
    %307 = vector.broadcast %261 : vector<8x1xf32> to vector<8x4xf32>
    %308 = vector.broadcast %12 : vector<1x4xf32> to vector<8x4xf32>
    %309 = arith.mulf %307, %308 : vector<8x4xf32>
    %310 = arith.addf %306, %309 : vector<8x4xf32>
    %311 = vector.broadcast %14 : vector<1x4xf32> to vector<8x4xf32>
    %312 = arith.addf %310, %311 : vector<8x4xf32>
    %313 = vector.extract_strided_slice %312 {offsets = [0, 0], sizes = [8, 1], strides = [1, 1]} : vector<8x4xf32> to vector<8x1xf32>
    %cst_74 = arith.constant 0.000000e+00 : f32
    %314 = vector.broadcast %cst_74 : f32 to vector<8x1xf32>
    %315 = arith.subf %314, %313 : vector<8x1xf32>
    %316 = math.exp %315 : vector<8x1xf32>
    %cst_75 = arith.constant 1.000000e+00 : f32
    %317 = vector.broadcast %cst_75 : f32 to vector<8x1xf32>
    %318 = arith.addf %317, %316 : vector<8x1xf32>
    %cst_76 = arith.constant 1.000000e+00 : f32
    %319 = vector.broadcast %cst_76 : f32 to vector<8x1xf32>
    %320 = arith.divf %319, %318 : vector<8x1xf32>
    %321 = vector.extract_strided_slice %312 {offsets = [0, 1], sizes = [8, 1], strides = [1, 1]} : vector<8x4xf32> to vector<8x1xf32>
    %cst_77 = arith.constant 0.000000e+00 : f32
    %322 = vector.broadcast %cst_77 : f32 to vector<8x1xf32>
    %323 = arith.subf %322, %321 : vector<8x1xf32>
    %324 = math.exp %323 : vector<8x1xf32>
    %cst_78 = arith.constant 1.000000e+00 : f32
    %325 = vector.broadcast %cst_78 : f32 to vector<8x1xf32>
    %326 = arith.addf %325, %324 : vector<8x1xf32>
    %cst_79 = arith.constant 1.000000e+00 : f32
    %327 = vector.broadcast %cst_79 : f32 to vector<8x1xf32>
    %328 = arith.divf %327, %326 : vector<8x1xf32>
    %329 = vector.extract_strided_slice %312 {offsets = [0, 2], sizes = [8, 1], strides = [1, 1]} : vector<8x4xf32> to vector<8x1xf32>
    %330 = math.tanh %329 : vector<8x1xf32>
    %331 = vector.extract_strided_slice %312 {offsets = [0, 3], sizes = [8, 1], strides = [1, 1]} : vector<8x4xf32> to vector<8x1xf32>
    %cst_80 = arith.constant 0.000000e+00 : f32
    %332 = vector.broadcast %cst_80 : f32 to vector<8x1xf32>
    %333 = arith.subf %332, %331 : vector<8x1xf32>
    %334 = math.exp %333 : vector<8x1xf32>
    %cst_81 = arith.constant 1.000000e+00 : f32
    %335 = vector.broadcast %cst_81 : f32 to vector<8x1xf32>
    %336 = arith.addf %335, %334 : vector<8x1xf32>
    %cst_82 = arith.constant 1.000000e+00 : f32
    %337 = vector.broadcast %cst_82 : f32 to vector<8x1xf32>
    %338 = arith.divf %337, %336 : vector<8x1xf32>
    %339 = arith.mulf %328, %259 : vector<8x1xf32>
    %340 = arith.mulf %320, %330 : vector<8x1xf32>
    %341 = arith.addf %339, %340 : vector<8x1xf32>
    %342 = math.tanh %341 : vector<8x1xf32>
    %343 = arith.mulf %338, %342 : vector<8x1xf32>
    %344 = vector.extract_strided_slice %5 {offsets = [0, 4], sizes = [8, 1], strides = [1, 1]} : vector<8x8xf32> to vector<8x1xf32>
    %345 = vector.broadcast %344 : vector<8x1xf32> to vector<8x4xf32>
    %346 = vector.broadcast %9 : vector<1x4xf32> to vector<8x4xf32>
    %347 = arith.mulf %345, %346 : vector<8x4xf32>
    %348 = vector.broadcast %302 : vector<8x1xf32> to vector<8x4xf32>
    %349 = vector.broadcast %11 : vector<1x4xf32> to vector<8x4xf32>
    %350 = arith.mulf %348, %349 : vector<8x4xf32>
    %351 = arith.addf %347, %350 : vector<8x4xf32>
    %352 = vector.broadcast %13 : vector<1x4xf32> to vector<8x4xf32>
    %353 = arith.addf %351, %352 : vector<8x4xf32>
    %354 = vector.extract_strided_slice %353 {offsets = [0, 0], sizes = [8, 1], strides = [1, 1]} : vector<8x4xf32> to vector<8x1xf32>
    %cst_83 = arith.constant 0.000000e+00 : f32
    %355 = vector.broadcast %cst_83 : f32 to vector<8x1xf32>
    %356 = arith.subf %355, %354 : vector<8x1xf32>
    %357 = math.exp %356 : vector<8x1xf32>
    %cst_84 = arith.constant 1.000000e+00 : f32
    %358 = vector.broadcast %cst_84 : f32 to vector<8x1xf32>
    %359 = arith.addf %358, %357 : vector<8x1xf32>
    %cst_85 = arith.constant 1.000000e+00 : f32
    %360 = vector.broadcast %cst_85 : f32 to vector<8x1xf32>
    %361 = arith.divf %360, %359 : vector<8x1xf32>
    %362 = vector.extract_strided_slice %353 {offsets = [0, 1], sizes = [8, 1], strides = [1, 1]} : vector<8x4xf32> to vector<8x1xf32>
    %cst_86 = arith.constant 0.000000e+00 : f32
    %363 = vector.broadcast %cst_86 : f32 to vector<8x1xf32>
    %364 = arith.subf %363, %362 : vector<8x1xf32>
    %365 = math.exp %364 : vector<8x1xf32>
    %cst_87 = arith.constant 1.000000e+00 : f32
    %366 = vector.broadcast %cst_87 : f32 to vector<8x1xf32>
    %367 = arith.addf %366, %365 : vector<8x1xf32>
    %cst_88 = arith.constant 1.000000e+00 : f32
    %368 = vector.broadcast %cst_88 : f32 to vector<8x1xf32>
    %369 = arith.divf %368, %367 : vector<8x1xf32>
    %370 = vector.extract_strided_slice %353 {offsets = [0, 2], sizes = [8, 1], strides = [1, 1]} : vector<8x4xf32> to vector<8x1xf32>
    %371 = math.tanh %370 : vector<8x1xf32>
    %372 = vector.extract_strided_slice %353 {offsets = [0, 3], sizes = [8, 1], strides = [1, 1]} : vector<8x4xf32> to vector<8x1xf32>
    %cst_89 = arith.constant 0.000000e+00 : f32
    %373 = vector.broadcast %cst_89 : f32 to vector<8x1xf32>
    %374 = arith.subf %373, %372 : vector<8x1xf32>
    %375 = math.exp %374 : vector<8x1xf32>
    %cst_90 = arith.constant 1.000000e+00 : f32
    %376 = vector.broadcast %cst_90 : f32 to vector<8x1xf32>
    %377 = arith.addf %376, %375 : vector<8x1xf32>
    %cst_91 = arith.constant 1.000000e+00 : f32
    %378 = vector.broadcast %cst_91 : f32 to vector<8x1xf32>
    %379 = arith.divf %378, %377 : vector<8x1xf32>
    %380 = arith.mulf %369, %300 : vector<8x1xf32>
    %381 = arith.mulf %361, %371 : vector<8x1xf32>
    %382 = arith.addf %380, %381 : vector<8x1xf32>
    %383 = math.tanh %382 : vector<8x1xf32>
    %384 = arith.mulf %379, %383 : vector<8x1xf32>
    %385 = vector.extract_strided_slice %5 {offsets = [0, 3], sizes = [8, 1], strides = [1, 1]} : vector<8x8xf32> to vector<8x1xf32>
    %386 = vector.broadcast %385 : vector<8x1xf32> to vector<8x4xf32>
    %387 = vector.broadcast %10 : vector<1x4xf32> to vector<8x4xf32>
    %388 = arith.mulf %386, %387 : vector<8x4xf32>
    %389 = vector.broadcast %343 : vector<8x1xf32> to vector<8x4xf32>
    %390 = vector.broadcast %12 : vector<1x4xf32> to vector<8x4xf32>
    %391 = arith.mulf %389, %390 : vector<8x4xf32>
    %392 = arith.addf %388, %391 : vector<8x4xf32>
    %393 = vector.broadcast %14 : vector<1x4xf32> to vector<8x4xf32>
    %394 = arith.addf %392, %393 : vector<8x4xf32>
    %395 = vector.extract_strided_slice %394 {offsets = [0, 0], sizes = [8, 1], strides = [1, 1]} : vector<8x4xf32> to vector<8x1xf32>
    %cst_92 = arith.constant 0.000000e+00 : f32
    %396 = vector.broadcast %cst_92 : f32 to vector<8x1xf32>
    %397 = arith.subf %396, %395 : vector<8x1xf32>
    %398 = math.exp %397 : vector<8x1xf32>
    %cst_93 = arith.constant 1.000000e+00 : f32
    %399 = vector.broadcast %cst_93 : f32 to vector<8x1xf32>
    %400 = arith.addf %399, %398 : vector<8x1xf32>
    %cst_94 = arith.constant 1.000000e+00 : f32
    %401 = vector.broadcast %cst_94 : f32 to vector<8x1xf32>
    %402 = arith.divf %401, %400 : vector<8x1xf32>
    %403 = vector.extract_strided_slice %394 {offsets = [0, 1], sizes = [8, 1], strides = [1, 1]} : vector<8x4xf32> to vector<8x1xf32>
    %cst_95 = arith.constant 0.000000e+00 : f32
    %404 = vector.broadcast %cst_95 : f32 to vector<8x1xf32>
    %405 = arith.subf %404, %403 : vector<8x1xf32>
    %406 = math.exp %405 : vector<8x1xf32>
    %cst_96 = arith.constant 1.000000e+00 : f32
    %407 = vector.broadcast %cst_96 : f32 to vector<8x1xf32>
    %408 = arith.addf %407, %406 : vector<8x1xf32>
    %cst_97 = arith.constant 1.000000e+00 : f32
    %409 = vector.broadcast %cst_97 : f32 to vector<8x1xf32>
    %410 = arith.divf %409, %408 : vector<8x1xf32>
    %411 = vector.extract_strided_slice %394 {offsets = [0, 2], sizes = [8, 1], strides = [1, 1]} : vector<8x4xf32> to vector<8x1xf32>
    %412 = math.tanh %411 : vector<8x1xf32>
    %413 = vector.extract_strided_slice %394 {offsets = [0, 3], sizes = [8, 1], strides = [1, 1]} : vector<8x4xf32> to vector<8x1xf32>
    %cst_98 = arith.constant 0.000000e+00 : f32
    %414 = vector.broadcast %cst_98 : f32 to vector<8x1xf32>
    %415 = arith.subf %414, %413 : vector<8x1xf32>
    %416 = math.exp %415 : vector<8x1xf32>
    %cst_99 = arith.constant 1.000000e+00 : f32
    %417 = vector.broadcast %cst_99 : f32 to vector<8x1xf32>
    %418 = arith.addf %417, %416 : vector<8x1xf32>
    %cst_100 = arith.constant 1.000000e+00 : f32
    %419 = vector.broadcast %cst_100 : f32 to vector<8x1xf32>
    %420 = arith.divf %419, %418 : vector<8x1xf32>
    %421 = arith.mulf %410, %341 : vector<8x1xf32>
    %422 = arith.mulf %402, %412 : vector<8x1xf32>
    %423 = arith.addf %421, %422 : vector<8x1xf32>
    %424 = math.tanh %423 : vector<8x1xf32>
    %425 = arith.mulf %420, %424 : vector<8x1xf32>
    %426 = vector.extract_strided_slice %5 {offsets = [0, 5], sizes = [8, 1], strides = [1, 1]} : vector<8x8xf32> to vector<8x1xf32>
    %427 = vector.broadcast %426 : vector<8x1xf32> to vector<8x4xf32>
    %428 = vector.broadcast %9 : vector<1x4xf32> to vector<8x4xf32>
    %429 = arith.mulf %427, %428 : vector<8x4xf32>
    %430 = vector.broadcast %384 : vector<8x1xf32> to vector<8x4xf32>
    %431 = vector.broadcast %11 : vector<1x4xf32> to vector<8x4xf32>
    %432 = arith.mulf %430, %431 : vector<8x4xf32>
    %433 = arith.addf %429, %432 : vector<8x4xf32>
    %434 = vector.broadcast %13 : vector<1x4xf32> to vector<8x4xf32>
    %435 = arith.addf %433, %434 : vector<8x4xf32>
    %436 = vector.extract_strided_slice %435 {offsets = [0, 0], sizes = [8, 1], strides = [1, 1]} : vector<8x4xf32> to vector<8x1xf32>
    %cst_101 = arith.constant 0.000000e+00 : f32
    %437 = vector.broadcast %cst_101 : f32 to vector<8x1xf32>
    %438 = arith.subf %437, %436 : vector<8x1xf32>
    %439 = math.exp %438 : vector<8x1xf32>
    %cst_102 = arith.constant 1.000000e+00 : f32
    %440 = vector.broadcast %cst_102 : f32 to vector<8x1xf32>
    %441 = arith.addf %440, %439 : vector<8x1xf32>
    %cst_103 = arith.constant 1.000000e+00 : f32
    %442 = vector.broadcast %cst_103 : f32 to vector<8x1xf32>
    %443 = arith.divf %442, %441 : vector<8x1xf32>
    %444 = vector.extract_strided_slice %435 {offsets = [0, 1], sizes = [8, 1], strides = [1, 1]} : vector<8x4xf32> to vector<8x1xf32>
    %cst_104 = arith.constant 0.000000e+00 : f32
    %445 = vector.broadcast %cst_104 : f32 to vector<8x1xf32>
    %446 = arith.subf %445, %444 : vector<8x1xf32>
    %447 = math.exp %446 : vector<8x1xf32>
    %cst_105 = arith.constant 1.000000e+00 : f32
    %448 = vector.broadcast %cst_105 : f32 to vector<8x1xf32>
    %449 = arith.addf %448, %447 : vector<8x1xf32>
    %cst_106 = arith.constant 1.000000e+00 : f32
    %450 = vector.broadcast %cst_106 : f32 to vector<8x1xf32>
    %451 = arith.divf %450, %449 : vector<8x1xf32>
    %452 = vector.extract_strided_slice %435 {offsets = [0, 2], sizes = [8, 1], strides = [1, 1]} : vector<8x4xf32> to vector<8x1xf32>
    %453 = math.tanh %452 : vector<8x1xf32>
    %454 = vector.extract_strided_slice %435 {offsets = [0, 3], sizes = [8, 1], strides = [1, 1]} : vector<8x4xf32> to vector<8x1xf32>
    %cst_107 = arith.constant 0.000000e+00 : f32
    %455 = vector.broadcast %cst_107 : f32 to vector<8x1xf32>
    %456 = arith.subf %455, %454 : vector<8x1xf32>
    %457 = math.exp %456 : vector<8x1xf32>
    %cst_108 = arith.constant 1.000000e+00 : f32
    %458 = vector.broadcast %cst_108 : f32 to vector<8x1xf32>
    %459 = arith.addf %458, %457 : vector<8x1xf32>
    %cst_109 = arith.constant 1.000000e+00 : f32
    %460 = vector.broadcast %cst_109 : f32 to vector<8x1xf32>
    %461 = arith.divf %460, %459 : vector<8x1xf32>
    %462 = arith.mulf %451, %382 : vector<8x1xf32>
    %463 = arith.mulf %443, %453 : vector<8x1xf32>
    %464 = arith.addf %462, %463 : vector<8x1xf32>
    %465 = math.tanh %464 : vector<8x1xf32>
    %466 = arith.mulf %461, %465 : vector<8x1xf32>
    %467 = vector.extract_strided_slice %5 {offsets = [0, 2], sizes = [8, 1], strides = [1, 1]} : vector<8x8xf32> to vector<8x1xf32>
    %468 = vector.broadcast %467 : vector<8x1xf32> to vector<8x4xf32>
    %469 = vector.broadcast %10 : vector<1x4xf32> to vector<8x4xf32>
    %470 = arith.mulf %468, %469 : vector<8x4xf32>
    %471 = vector.broadcast %425 : vector<8x1xf32> to vector<8x4xf32>
    %472 = vector.broadcast %12 : vector<1x4xf32> to vector<8x4xf32>
    %473 = arith.mulf %471, %472 : vector<8x4xf32>
    %474 = arith.addf %470, %473 : vector<8x4xf32>
    %475 = vector.broadcast %14 : vector<1x4xf32> to vector<8x4xf32>
    %476 = arith.addf %474, %475 : vector<8x4xf32>
    %477 = vector.extract_strided_slice %476 {offsets = [0, 0], sizes = [8, 1], strides = [1, 1]} : vector<8x4xf32> to vector<8x1xf32>
    %cst_110 = arith.constant 0.000000e+00 : f32
    %478 = vector.broadcast %cst_110 : f32 to vector<8x1xf32>
    %479 = arith.subf %478, %477 : vector<8x1xf32>
    %480 = math.exp %479 : vector<8x1xf32>
    %cst_111 = arith.constant 1.000000e+00 : f32
    %481 = vector.broadcast %cst_111 : f32 to vector<8x1xf32>
    %482 = arith.addf %481, %480 : vector<8x1xf32>
    %cst_112 = arith.constant 1.000000e+00 : f32
    %483 = vector.broadcast %cst_112 : f32 to vector<8x1xf32>
    %484 = arith.divf %483, %482 : vector<8x1xf32>
    %485 = vector.extract_strided_slice %476 {offsets = [0, 1], sizes = [8, 1], strides = [1, 1]} : vector<8x4xf32> to vector<8x1xf32>
    %cst_113 = arith.constant 0.000000e+00 : f32
    %486 = vector.broadcast %cst_113 : f32 to vector<8x1xf32>
    %487 = arith.subf %486, %485 : vector<8x1xf32>
    %488 = math.exp %487 : vector<8x1xf32>
    %cst_114 = arith.constant 1.000000e+00 : f32
    %489 = vector.broadcast %cst_114 : f32 to vector<8x1xf32>
    %490 = arith.addf %489, %488 : vector<8x1xf32>
    %cst_115 = arith.constant 1.000000e+00 : f32
    %491 = vector.broadcast %cst_115 : f32 to vector<8x1xf32>
    %492 = arith.divf %491, %490 : vector<8x1xf32>
    %493 = vector.extract_strided_slice %476 {offsets = [0, 2], sizes = [8, 1], strides = [1, 1]} : vector<8x4xf32> to vector<8x1xf32>
    %494 = math.tanh %493 : vector<8x1xf32>
    %495 = vector.extract_strided_slice %476 {offsets = [0, 3], sizes = [8, 1], strides = [1, 1]} : vector<8x4xf32> to vector<8x1xf32>
    %cst_116 = arith.constant 0.000000e+00 : f32
    %496 = vector.broadcast %cst_116 : f32 to vector<8x1xf32>
    %497 = arith.subf %496, %495 : vector<8x1xf32>
    %498 = math.exp %497 : vector<8x1xf32>
    %cst_117 = arith.constant 1.000000e+00 : f32
    %499 = vector.broadcast %cst_117 : f32 to vector<8x1xf32>
    %500 = arith.addf %499, %498 : vector<8x1xf32>
    %cst_118 = arith.constant 1.000000e+00 : f32
    %501 = vector.broadcast %cst_118 : f32 to vector<8x1xf32>
    %502 = arith.divf %501, %500 : vector<8x1xf32>
    %503 = arith.mulf %492, %423 : vector<8x1xf32>
    %504 = arith.mulf %484, %494 : vector<8x1xf32>
    %505 = arith.addf %503, %504 : vector<8x1xf32>
    %506 = math.tanh %505 : vector<8x1xf32>
    %507 = arith.mulf %502, %506 : vector<8x1xf32>
    %508 = vector.extract_strided_slice %5 {offsets = [0, 6], sizes = [8, 1], strides = [1, 1]} : vector<8x8xf32> to vector<8x1xf32>
    %509 = vector.broadcast %508 : vector<8x1xf32> to vector<8x4xf32>
    %510 = vector.broadcast %9 : vector<1x4xf32> to vector<8x4xf32>
    %511 = arith.mulf %509, %510 : vector<8x4xf32>
    %512 = vector.broadcast %466 : vector<8x1xf32> to vector<8x4xf32>
    %513 = vector.broadcast %11 : vector<1x4xf32> to vector<8x4xf32>
    %514 = arith.mulf %512, %513 : vector<8x4xf32>
    %515 = arith.addf %511, %514 : vector<8x4xf32>
    %516 = vector.broadcast %13 : vector<1x4xf32> to vector<8x4xf32>
    %517 = arith.addf %515, %516 : vector<8x4xf32>
    %518 = vector.extract_strided_slice %517 {offsets = [0, 0], sizes = [8, 1], strides = [1, 1]} : vector<8x4xf32> to vector<8x1xf32>
    %cst_119 = arith.constant 0.000000e+00 : f32
    %519 = vector.broadcast %cst_119 : f32 to vector<8x1xf32>
    %520 = arith.subf %519, %518 : vector<8x1xf32>
    %521 = math.exp %520 : vector<8x1xf32>
    %cst_120 = arith.constant 1.000000e+00 : f32
    %522 = vector.broadcast %cst_120 : f32 to vector<8x1xf32>
    %523 = arith.addf %522, %521 : vector<8x1xf32>
    %cst_121 = arith.constant 1.000000e+00 : f32
    %524 = vector.broadcast %cst_121 : f32 to vector<8x1xf32>
    %525 = arith.divf %524, %523 : vector<8x1xf32>
    %526 = vector.extract_strided_slice %517 {offsets = [0, 1], sizes = [8, 1], strides = [1, 1]} : vector<8x4xf32> to vector<8x1xf32>
    %cst_122 = arith.constant 0.000000e+00 : f32
    %527 = vector.broadcast %cst_122 : f32 to vector<8x1xf32>
    %528 = arith.subf %527, %526 : vector<8x1xf32>
    %529 = math.exp %528 : vector<8x1xf32>
    %cst_123 = arith.constant 1.000000e+00 : f32
    %530 = vector.broadcast %cst_123 : f32 to vector<8x1xf32>
    %531 = arith.addf %530, %529 : vector<8x1xf32>
    %cst_124 = arith.constant 1.000000e+00 : f32
    %532 = vector.broadcast %cst_124 : f32 to vector<8x1xf32>
    %533 = arith.divf %532, %531 : vector<8x1xf32>
    %534 = vector.extract_strided_slice %517 {offsets = [0, 2], sizes = [8, 1], strides = [1, 1]} : vector<8x4xf32> to vector<8x1xf32>
    %535 = math.tanh %534 : vector<8x1xf32>
    %536 = vector.extract_strided_slice %517 {offsets = [0, 3], sizes = [8, 1], strides = [1, 1]} : vector<8x4xf32> to vector<8x1xf32>
    %cst_125 = arith.constant 0.000000e+00 : f32
    %537 = vector.broadcast %cst_125 : f32 to vector<8x1xf32>
    %538 = arith.subf %537, %536 : vector<8x1xf32>
    %539 = math.exp %538 : vector<8x1xf32>
    %cst_126 = arith.constant 1.000000e+00 : f32
    %540 = vector.broadcast %cst_126 : f32 to vector<8x1xf32>
    %541 = arith.addf %540, %539 : vector<8x1xf32>
    %cst_127 = arith.constant 1.000000e+00 : f32
    %542 = vector.broadcast %cst_127 : f32 to vector<8x1xf32>
    %543 = arith.divf %542, %541 : vector<8x1xf32>
    %544 = arith.mulf %533, %464 : vector<8x1xf32>
    %545 = arith.mulf %525, %535 : vector<8x1xf32>
    %546 = arith.addf %544, %545 : vector<8x1xf32>
    %547 = math.tanh %546 : vector<8x1xf32>
    %548 = arith.mulf %543, %547 : vector<8x1xf32>
    %549 = vector.extract_strided_slice %5 {offsets = [0, 1], sizes = [8, 1], strides = [1, 1]} : vector<8x8xf32> to vector<8x1xf32>
    %550 = vector.broadcast %549 : vector<8x1xf32> to vector<8x4xf32>
    %551 = vector.broadcast %10 : vector<1x4xf32> to vector<8x4xf32>
    %552 = arith.mulf %550, %551 : vector<8x4xf32>
    %553 = vector.broadcast %507 : vector<8x1xf32> to vector<8x4xf32>
    %554 = vector.broadcast %12 : vector<1x4xf32> to vector<8x4xf32>
    %555 = arith.mulf %553, %554 : vector<8x4xf32>
    %556 = arith.addf %552, %555 : vector<8x4xf32>
    %557 = vector.broadcast %14 : vector<1x4xf32> to vector<8x4xf32>
    %558 = arith.addf %556, %557 : vector<8x4xf32>
    %559 = vector.extract_strided_slice %558 {offsets = [0, 0], sizes = [8, 1], strides = [1, 1]} : vector<8x4xf32> to vector<8x1xf32>
    %cst_128 = arith.constant 0.000000e+00 : f32
    %560 = vector.broadcast %cst_128 : f32 to vector<8x1xf32>
    %561 = arith.subf %560, %559 : vector<8x1xf32>
    %562 = math.exp %561 : vector<8x1xf32>
    %cst_129 = arith.constant 1.000000e+00 : f32
    %563 = vector.broadcast %cst_129 : f32 to vector<8x1xf32>
    %564 = arith.addf %563, %562 : vector<8x1xf32>
    %cst_130 = arith.constant 1.000000e+00 : f32
    %565 = vector.broadcast %cst_130 : f32 to vector<8x1xf32>
    %566 = arith.divf %565, %564 : vector<8x1xf32>
    %567 = vector.extract_strided_slice %558 {offsets = [0, 1], sizes = [8, 1], strides = [1, 1]} : vector<8x4xf32> to vector<8x1xf32>
    %cst_131 = arith.constant 0.000000e+00 : f32
    %568 = vector.broadcast %cst_131 : f32 to vector<8x1xf32>
    %569 = arith.subf %568, %567 : vector<8x1xf32>
    %570 = math.exp %569 : vector<8x1xf32>
    %cst_132 = arith.constant 1.000000e+00 : f32
    %571 = vector.broadcast %cst_132 : f32 to vector<8x1xf32>
    %572 = arith.addf %571, %570 : vector<8x1xf32>
    %cst_133 = arith.constant 1.000000e+00 : f32
    %573 = vector.broadcast %cst_133 : f32 to vector<8x1xf32>
    %574 = arith.divf %573, %572 : vector<8x1xf32>
    %575 = vector.extract_strided_slice %558 {offsets = [0, 2], sizes = [8, 1], strides = [1, 1]} : vector<8x4xf32> to vector<8x1xf32>
    %576 = math.tanh %575 : vector<8x1xf32>
    %577 = vector.extract_strided_slice %558 {offsets = [0, 3], sizes = [8, 1], strides = [1, 1]} : vector<8x4xf32> to vector<8x1xf32>
    %cst_134 = arith.constant 0.000000e+00 : f32
    %578 = vector.broadcast %cst_134 : f32 to vector<8x1xf32>
    %579 = arith.subf %578, %577 : vector<8x1xf32>
    %580 = math.exp %579 : vector<8x1xf32>
    %cst_135 = arith.constant 1.000000e+00 : f32
    %581 = vector.broadcast %cst_135 : f32 to vector<8x1xf32>
    %582 = arith.addf %581, %580 : vector<8x1xf32>
    %cst_136 = arith.constant 1.000000e+00 : f32
    %583 = vector.broadcast %cst_136 : f32 to vector<8x1xf32>
    %584 = arith.divf %583, %582 : vector<8x1xf32>
    %585 = arith.mulf %574, %505 : vector<8x1xf32>
    %586 = arith.mulf %566, %576 : vector<8x1xf32>
    %587 = arith.addf %585, %586 : vector<8x1xf32>
    %588 = math.tanh %587 : vector<8x1xf32>
    %589 = arith.mulf %584, %588 : vector<8x1xf32>
    %590 = vector.extract_strided_slice %5 {offsets = [0, 7], sizes = [8, 1], strides = [1, 1]} : vector<8x8xf32> to vector<8x1xf32>
    %591 = vector.broadcast %590 : vector<8x1xf32> to vector<8x4xf32>
    %592 = vector.broadcast %9 : vector<1x4xf32> to vector<8x4xf32>
    %593 = arith.mulf %591, %592 : vector<8x4xf32>
    %594 = vector.broadcast %548 : vector<8x1xf32> to vector<8x4xf32>
    %595 = vector.broadcast %11 : vector<1x4xf32> to vector<8x4xf32>
    %596 = arith.mulf %594, %595 : vector<8x4xf32>
    %597 = arith.addf %593, %596 : vector<8x4xf32>
    %598 = vector.broadcast %13 : vector<1x4xf32> to vector<8x4xf32>
    %599 = arith.addf %597, %598 : vector<8x4xf32>
    %600 = vector.extract_strided_slice %599 {offsets = [0, 0], sizes = [8, 1], strides = [1, 1]} : vector<8x4xf32> to vector<8x1xf32>
    %cst_137 = arith.constant 0.000000e+00 : f32
    %601 = vector.broadcast %cst_137 : f32 to vector<8x1xf32>
    %602 = arith.subf %601, %600 : vector<8x1xf32>
    %603 = math.exp %602 : vector<8x1xf32>
    %cst_138 = arith.constant 1.000000e+00 : f32
    %604 = vector.broadcast %cst_138 : f32 to vector<8x1xf32>
    %605 = arith.addf %604, %603 : vector<8x1xf32>
    %cst_139 = arith.constant 1.000000e+00 : f32
    %606 = vector.broadcast %cst_139 : f32 to vector<8x1xf32>
    %607 = arith.divf %606, %605 : vector<8x1xf32>
    %608 = vector.extract_strided_slice %599 {offsets = [0, 1], sizes = [8, 1], strides = [1, 1]} : vector<8x4xf32> to vector<8x1xf32>
    %cst_140 = arith.constant 0.000000e+00 : f32
    %609 = vector.broadcast %cst_140 : f32 to vector<8x1xf32>
    %610 = arith.subf %609, %608 : vector<8x1xf32>
    %611 = math.exp %610 : vector<8x1xf32>
    %cst_141 = arith.constant 1.000000e+00 : f32
    %612 = vector.broadcast %cst_141 : f32 to vector<8x1xf32>
    %613 = arith.addf %612, %611 : vector<8x1xf32>
    %cst_142 = arith.constant 1.000000e+00 : f32
    %614 = vector.broadcast %cst_142 : f32 to vector<8x1xf32>
    %615 = arith.divf %614, %613 : vector<8x1xf32>
    %616 = vector.extract_strided_slice %599 {offsets = [0, 2], sizes = [8, 1], strides = [1, 1]} : vector<8x4xf32> to vector<8x1xf32>
    %617 = math.tanh %616 : vector<8x1xf32>
    %618 = vector.extract_strided_slice %599 {offsets = [0, 3], sizes = [8, 1], strides = [1, 1]} : vector<8x4xf32> to vector<8x1xf32>
    %cst_143 = arith.constant 0.000000e+00 : f32
    %619 = vector.broadcast %cst_143 : f32 to vector<8x1xf32>
    %620 = arith.subf %619, %618 : vector<8x1xf32>
    %621 = math.exp %620 : vector<8x1xf32>
    %cst_144 = arith.constant 1.000000e+00 : f32
    %622 = vector.broadcast %cst_144 : f32 to vector<8x1xf32>
    %623 = arith.addf %622, %621 : vector<8x1xf32>
    %cst_145 = arith.constant 1.000000e+00 : f32
    %624 = vector.broadcast %cst_145 : f32 to vector<8x1xf32>
    %625 = arith.divf %624, %623 : vector<8x1xf32>
    %626 = arith.mulf %615, %546 : vector<8x1xf32>
    %627 = arith.mulf %607, %617 : vector<8x1xf32>
    %628 = arith.addf %626, %627 : vector<8x1xf32>
    %629 = math.tanh %628 : vector<8x1xf32>
    %630 = arith.mulf %625, %629 : vector<8x1xf32>
    %631 = vector.extract_strided_slice %5 {offsets = [0, 0], sizes = [8, 1], strides = [1, 1]} : vector<8x8xf32> to vector<8x1xf32>
    %632 = vector.broadcast %631 : vector<8x1xf32> to vector<8x4xf32>
    %633 = vector.broadcast %10 : vector<1x4xf32> to vector<8x4xf32>
    %634 = arith.mulf %632, %633 : vector<8x4xf32>
    %635 = vector.broadcast %589 : vector<8x1xf32> to vector<8x4xf32>
    %636 = vector.broadcast %12 : vector<1x4xf32> to vector<8x4xf32>
    %637 = arith.mulf %635, %636 : vector<8x4xf32>
    %638 = arith.addf %634, %637 : vector<8x4xf32>
    %639 = vector.broadcast %14 : vector<1x4xf32> to vector<8x4xf32>
    %640 = arith.addf %638, %639 : vector<8x4xf32>
    %641 = vector.extract_strided_slice %640 {offsets = [0, 0], sizes = [8, 1], strides = [1, 1]} : vector<8x4xf32> to vector<8x1xf32>
    %cst_146 = arith.constant 0.000000e+00 : f32
    %642 = vector.broadcast %cst_146 : f32 to vector<8x1xf32>
    %643 = arith.subf %642, %641 : vector<8x1xf32>
    %644 = math.exp %643 : vector<8x1xf32>
    %cst_147 = arith.constant 1.000000e+00 : f32
    %645 = vector.broadcast %cst_147 : f32 to vector<8x1xf32>
    %646 = arith.addf %645, %644 : vector<8x1xf32>
    %cst_148 = arith.constant 1.000000e+00 : f32
    %647 = vector.broadcast %cst_148 : f32 to vector<8x1xf32>
    %648 = arith.divf %647, %646 : vector<8x1xf32>
    %649 = vector.extract_strided_slice %640 {offsets = [0, 1], sizes = [8, 1], strides = [1, 1]} : vector<8x4xf32> to vector<8x1xf32>
    %cst_149 = arith.constant 0.000000e+00 : f32
    %650 = vector.broadcast %cst_149 : f32 to vector<8x1xf32>
    %651 = arith.subf %650, %649 : vector<8x1xf32>
    %652 = math.exp %651 : vector<8x1xf32>
    %cst_150 = arith.constant 1.000000e+00 : f32
    %653 = vector.broadcast %cst_150 : f32 to vector<8x1xf32>
    %654 = arith.addf %653, %652 : vector<8x1xf32>
    %cst_151 = arith.constant 1.000000e+00 : f32
    %655 = vector.broadcast %cst_151 : f32 to vector<8x1xf32>
    %656 = arith.divf %655, %654 : vector<8x1xf32>
    %657 = vector.extract_strided_slice %640 {offsets = [0, 2], sizes = [8, 1], strides = [1, 1]} : vector<8x4xf32> to vector<8x1xf32>
    %658 = math.tanh %657 : vector<8x1xf32>
    %659 = vector.extract_strided_slice %640 {offsets = [0, 3], sizes = [8, 1], strides = [1, 1]} : vector<8x4xf32> to vector<8x1xf32>
    %cst_152 = arith.constant 0.000000e+00 : f32
    %660 = vector.broadcast %cst_152 : f32 to vector<8x1xf32>
    %661 = arith.subf %660, %659 : vector<8x1xf32>
    %662 = math.exp %661 : vector<8x1xf32>
    %cst_153 = arith.constant 1.000000e+00 : f32
    %663 = vector.broadcast %cst_153 : f32 to vector<8x1xf32>
    %664 = arith.addf %663, %662 : vector<8x1xf32>
    %cst_154 = arith.constant 1.000000e+00 : f32
    %665 = vector.broadcast %cst_154 : f32 to vector<8x1xf32>
    %666 = arith.divf %665, %664 : vector<8x1xf32>
    %667 = arith.mulf %656, %587 : vector<8x1xf32>
    %668 = arith.mulf %648, %658 : vector<8x1xf32>
    %669 = arith.addf %667, %668 : vector<8x1xf32>
    %670 = math.tanh %669 : vector<8x1xf32>
    %671 = arith.mulf %666, %670 : vector<8x1xf32>
    %672 = tpu.iota {dimensions = array<i32: 1>} : vector<1x8xi32>
    %cst_155 = arith.constant 0.000000e+00 : f32
    %673 = vector.broadcast %cst_155 : f32 to vector<8x8xf32>
    %c0_i32 = arith.constant 0 : i32
    %674 = vector.broadcast %c0_i32 : i32 to vector<1x8xi32>
    %675 = arith.cmpi eq, %672, %674 : vector<1x8xi32>
    %676 = arith.addf %56, %671 : vector<8x1xf32>
    %cst_156 = arith.constant 0.000000e+00 : f32
    %677 = vector.shape_cast %675 : vector<1x8xi1> to vector<1x8xi1>
    %678 = vector.broadcast %677 : vector<1x8xi1> to vector<8x8xi1>
    %679 = vector.shape_cast %676 : vector<8x1xf32> to vector<8x1xf32>
    %680 = vector.broadcast %679 : vector<8x1xf32> to vector<8x8xf32>
    %681 = vector.broadcast %cst_156 : f32 to vector<8x8xf32>
    %682 = arith.select %678, %680, %681 : vector<8x8xi1>, vector<8x8xf32>
    %683 = arith.addf %673, %682 : vector<8x8xf32>
    %c1_i32 = arith.constant 1 : i32
    %684 = vector.broadcast %c1_i32 : i32 to vector<1x8xi32>
    %685 = arith.cmpi eq, %672, %684 : vector<1x8xi32>
    %686 = arith.addf %138, %589 : vector<8x1xf32>
    %cst_157 = arith.constant 0.000000e+00 : f32
    %687 = vector.shape_cast %685 : vector<1x8xi1> to vector<1x8xi1>
    %688 = vector.broadcast %687 : vector<1x8xi1> to vector<8x8xi1>
    %689 = vector.shape_cast %686 : vector<8x1xf32> to vector<8x1xf32>
    %690 = vector.broadcast %689 : vector<8x1xf32> to vector<8x8xf32>
    %691 = vector.broadcast %cst_157 : f32 to vector<8x8xf32>
    %692 = arith.select %688, %690, %691 : vector<8x8xi1>, vector<8x8xf32>
    %693 = arith.addf %683, %692 : vector<8x8xf32>
    %c2_i32 = arith.constant 2 : i32
    %694 = vector.broadcast %c2_i32 : i32 to vector<1x8xi32>
    %695 = arith.cmpi eq, %672, %694 : vector<1x8xi32>
    %696 = arith.addf %220, %507 : vector<8x1xf32>
    %cst_158 = arith.constant 0.000000e+00 : f32
    %697 = vector.shape_cast %695 : vector<1x8xi1> to vector<1x8xi1>
    %698 = vector.broadcast %697 : vector<1x8xi1> to vector<8x8xi1>
    %699 = vector.shape_cast %696 : vector<8x1xf32> to vector<8x1xf32>
    %700 = vector.broadcast %699 : vector<8x1xf32> to vector<8x8xf32>
    %701 = vector.broadcast %cst_158 : f32 to vector<8x8xf32>
    %702 = arith.select %698, %700, %701 : vector<8x8xi1>, vector<8x8xf32>
    %703 = arith.addf %693, %702 : vector<8x8xf32>
    %c3_i32 = arith.constant 3 : i32
    %704 = vector.broadcast %c3_i32 : i32 to vector<1x8xi32>
    %705 = arith.cmpi eq, %672, %704 : vector<1x8xi32>
    %706 = arith.addf %302, %425 : vector<8x1xf32>
    %cst_159 = arith.constant 0.000000e+00 : f32
    %707 = vector.shape_cast %705 : vector<1x8xi1> to vector<1x8xi1>
    %708 = vector.broadcast %707 : vector<1x8xi1> to vector<8x8xi1>
    %709 = vector.shape_cast %706 : vector<8x1xf32> to vector<8x1xf32>
    %710 = vector.broadcast %709 : vector<8x1xf32> to vector<8x8xf32>
    %711 = vector.broadcast %cst_159 : f32 to vector<8x8xf32>
    %712 = arith.select %708, %710, %711 : vector<8x8xi1>, vector<8x8xf32>
    %713 = arith.addf %703, %712 : vector<8x8xf32>
    %c4_i32 = arith.constant 4 : i32
    %714 = vector.broadcast %c4_i32 : i32 to vector<1x8xi32>
    %715 = arith.cmpi eq, %672, %714 : vector<1x8xi32>
    %716 = arith.addf %384, %343 : vector<8x1xf32>
    %cst_160 = arith.constant 0.000000e+00 : f32
    %717 = vector.shape_cast %715 : vector<1x8xi1> to vector<1x8xi1>
    %718 = vector.broadcast %717 : vector<1x8xi1> to vector<8x8xi1>
    %719 = vector.shape_cast %716 : vector<8x1xf32> to vector<8x1xf32>
    %720 = vector.broadcast %719 : vector<8x1xf32> to vector<8x8xf32>
    %721 = vector.broadcast %cst_160 : f32 to vector<8x8xf32>
    %722 = arith.select %718, %720, %721 : vector<8x8xi1>, vector<8x8xf32>
    %723 = arith.addf %713, %722 : vector<8x8xf32>
    %c5_i32 = arith.constant 5 : i32
    %724 = vector.broadcast %c5_i32 : i32 to vector<1x8xi32>
    %725 = arith.cmpi eq, %672, %724 : vector<1x8xi32>
    %726 = arith.addf %466, %261 : vector<8x1xf32>
    %cst_161 = arith.constant 0.000000e+00 : f32
    %727 = vector.shape_cast %725 : vector<1x8xi1> to vector<1x8xi1>
    %728 = vector.broadcast %727 : vector<1x8xi1> to vector<8x8xi1>
    %729 = vector.shape_cast %726 : vector<8x1xf32> to vector<8x1xf32>
    %730 = vector.broadcast %729 : vector<8x1xf32> to vector<8x8xf32>
    %731 = vector.broadcast %cst_161 : f32 to vector<8x8xf32>
    %732 = arith.select %728, %730, %731 : vector<8x8xi1>, vector<8x8xf32>
    %733 = arith.addf %723, %732 : vector<8x8xf32>
    %c6_i32 = arith.constant 6 : i32
    %734 = vector.broadcast %c6_i32 : i32 to vector<1x8xi32>
    %735 = arith.cmpi eq, %672, %734 : vector<1x8xi32>
    %736 = arith.addf %548, %179 : vector<8x1xf32>
    %cst_162 = arith.constant 0.000000e+00 : f32
    %737 = vector.shape_cast %735 : vector<1x8xi1> to vector<1x8xi1>
    %738 = vector.broadcast %737 : vector<1x8xi1> to vector<8x8xi1>
    %739 = vector.shape_cast %736 : vector<8x1xf32> to vector<8x1xf32>
    %740 = vector.broadcast %739 : vector<8x1xf32> to vector<8x8xf32>
    %741 = vector.broadcast %cst_162 : f32 to vector<8x8xf32>
    %742 = arith.select %738, %740, %741 : vector<8x8xi1>, vector<8x8xf32>
    %743 = arith.addf %733, %742 : vector<8x8xf32>
    %c7_i32 = arith.constant 7 : i32
    %744 = vector.broadcast %c7_i32 : i32 to vector<1x8xi32>
    %745 = arith.cmpi eq, %672, %744 : vector<1x8xi32>
    %746 = arith.addf %630, %97 : vector<8x1xf32>
    %cst_163 = arith.constant 0.000000e+00 : f32
    %747 = vector.shape_cast %745 : vector<1x8xi1> to vector<1x8xi1>
    %748 = vector.broadcast %747 : vector<1x8xi1> to vector<8x8xi1>
    %749 = vector.shape_cast %746 : vector<8x1xf32> to vector<8x1xf32>
    %750 = vector.broadcast %749 : vector<8x1xf32> to vector<8x8xf32>
    %751 = vector.broadcast %cst_163 : f32 to vector<8x8xf32>
    %752 = arith.select %748, %750, %751 : vector<8x8xi1>, vector<8x8xf32>
    %753 = arith.addf %743, %752 : vector<8x8xf32>
    %c0_164 = arith.constant 0 : index
    %c0_165 = arith.constant 0 : index
    %754 = vector.load %arg2[%c0_164, %c0_165] : memref<8x8xi32, #tpu.memory_space<vmem>>, vector<8x8xi32>
    %c0_i32_166 = arith.constant 0 : i32
    %755 = vector.broadcast %c0_i32_166 : i32 to vector<8x8xi32>
    %756 = arith.cmpi ne, %754, %755 : vector<8x8xi32>
    %cst_167 = arith.constant -1.000000e+30 : f32
    %757 = vector.broadcast %cst_167 : f32 to vector<8x8xf32>
    %758 = arith.select %756, %753, %757 : vector<8x8xi1>, vector<8x8xf32>
    %cst_168 = arith.constant dense<0xFF800000> : vector<8xf32>
    %759 = vector.multi_reduction <maximumf>, %758, %cst_168 [1] : vector<8x8xf32> to vector<8xf32>
    %760 = vector.shape_cast %759 : vector<8xf32> to vector<8x1xf32>
    %761 = vector.broadcast %760 : vector<8x1xf32> to vector<8x8xf32>
    %762 = arith.subf %758, %761 : vector<8x8xf32>
    %763 = math.exp %762 : vector<8x8xf32>
    %cst_169 = arith.constant dense<0.000000e+00> : vector<8xf32>
    %764 = vector.multi_reduction <add>, %763, %cst_169 [1] : vector<8x8xf32> to vector<8xf32>
    %765 = vector.shape_cast %764 : vector<8xf32> to vector<8x1xf32>
    %766 = tpu.reciprocal %765 : vector<8x1xf32> -> vector<8x1xf32>
    %767 = vector.broadcast %766 : vector<8x1xf32> to vector<8x8xf32>
    %768 = arith.mulf %763, %767 : vector<8x8xf32>
    %c0_170 = arith.constant 0 : index
    %c0_171 = arith.constant 0 : index
    %769 = vector.load %arg8[%c0_170, %c0_171] : memref<8x8xf32, #tpu.memory_space<vmem>>, vector<8x8xf32>
    tpu.vector_store %arg8[%c0_170, %c0_171], %768 {strides = array<i32>} : memref<8x8xf32, #tpu.memory_space<vmem>>, vector<8x8xf32>,
    %770 = vector.shape_cast %768 : vector<8x8xf32> to vector<8x8x1xf32>
    %771 = vector.broadcast %770 : vector<8x8x1xf32> to vector<8x8x128xf32>
    %772 = arith.mulf %0, %771 : vector<8x8x128xf32>
    %cst_172 = arith.constant dense<0x7F800000> : vector<8x128xf32>
    %773 = vector.multi_reduction <minimumf>, %772, %cst_172 [1] : vector<8x8x128xf32> to vector<8x128xf32>
    %c0_173 = arith.constant 0 : index
    %c0_174 = arith.constant 0 : index
    %774 = vector.load %arg7[%c0_173, %c0_174] : memref<8x128xf32, #tpu.memory_space<vmem>>, vector<8x128xf32>
    tpu.vector_store %arg7[%c0_173, %c0_174], %773 {strides = array<i32>} : memref<8x128xf32, #tpu.memory_space<vmem>>, vector<8x128xf32>,
    return
  }
  func.func @transform_0(%arg0: i32) -> (i32, i32, i32) {
    %c0_i32 = arith.constant 0 : i32
    %c0_i32_0 = arith.constant 0 : i32
    %c0_i32_1 = arith.constant 0 : i32
    return %arg0, %c0_i32, %c0_i32_0 : i32, i32, i32
  }
  func.func @transform_1(%arg0: i32) -> (i32, i32) {
    %c0_i32 = arith.constant 0 : i32
    %c0_i32_0 = arith.constant 0 : i32
    return %arg0, %c0_i32 : i32, i32
  }
  func.func @transform_2(%arg0: i32) -> (i32, i32) {
    %c0_i32 = arith.constant 0 : i32
    %c0_i32_0 = arith.constant 0 : i32
    %c0_i32_1 = arith.constant 0 : i32
    return %c0_i32, %c0_i32_0 : i32, i32
  }
  func.func @transform_3(%arg0: i32) -> (i32, i32) {
    %c0_i32 = arith.constant 0 : i32
    %c0_i32_0 = arith.constant 0 : i32
    %c0_i32_1 = arith.constant 0 : i32
    return %c0_i32, %c0_i32_0 : i32, i32
  }
  func.func @transform_4(%arg0: i32) -> (i32, i32) {
    %c0_i32 = arith.constant 0 : i32
    %c0_i32_0 = arith.constant 0 : i32
    %c0_i32_1 = arith.constant 0 : i32
    return %c0_i32, %c0_i32_0 : i32, i32
  }
  func.func @transform_5(%arg0: i32) -> (i32, i32) {
    %c0_i32 = arith.constant 0 : i32
    %c0_i32_0 = arith.constant 0 : i32
    %c0_i32_1 = arith.constant 0 : i32
    return %c0_i32, %c0_i32_0 : i32, i32
  }
  func.func @transform_6(%arg0: i32) -> (i32, i32) {
    %c0_i32 = arith.constant 0 : i32
    %c0_i32_0 = arith.constant 0 : i32
    return %arg0, %c0_i32 : i32, i32
  }
  func.func @transform_7(%arg0: i32) -> (i32, i32) {
    %c0_i32 = arith.constant 0 : i32
    %c0_i32_0 = arith.constant 0 : i32
    return %arg0, %c0_i32 : i32, i32
  }
}

</mosaic_0001>

<llo_original>
// kernel: attention_birnn_forward.1
$region0: #{attention_birnn_forward.1}
  #allocation0 [shape = 'u32[]', space=smem, size = 0x4, offset = 0x4, fixed_abs, tag = 'smem constant byte address 0x4 - core index']
  #allocation1 [shape = 'u32[72,128]{1,0:T(1,128)}', space=vmem, size = 0x9000, scoped, tag = 'internal scratch']
  %s0 = inlined_call_operand.hbm [shape: f32[16,8,128], index: 0, kind: input, shape index: {}]
  %s1 = inlined_call_operand.vmem [shape: s32[16,8], index: 1, kind: input, shape index: {}]
  %s2 = inlined_call_operand.vmem [shape: f32[1,128], index: 2, kind: input, shape index: {}]
  %s3 = inlined_call_operand.vmem [shape: f32[2,4], index: 3, kind: input, shape index: {}]
  %s4 = inlined_call_operand.vmem [shape: f32[2,4], index: 4, kind: input, shape index: {}]
  %s5 = inlined_call_operand.vmem [shape: f32[2,4], index: 5, kind: input, shape index: {}]
  %s6 = inlined_call_operand.hbm [shape: f32[16,128], index: 6, kind: output, shape index: {0}]
  %s7 = inlined_call_operand.vmem [shape: f32[16,8], index: 7, kind: output, shape index: {1}]
  %8 = xla_tuple %s6, %s7
  %s9 = sld [smem:[#allocation0]]
  $region69: #{attention_birnn_forward.1} parent=0
    _
  %s11 = ssub.s32 1, %s9
  %s12 = scalar_select 0, %s11, %s9
  $region1: #{attention_birnn_forward.1} parent=0
    #allocation2 [shape = 'u8[65536]{0}', space=vmem, size = 0x10000, scoped, tag = 'input window, operand 0']
    #allocation3 [shape = 's32[2]{0}', space=sflag, size = 0x8, scoped, tag = 'scoped memory for attention_birnn_forward.1']
    #allocation4 [shape = 's32[2]{0}', space=sflag, size = 0x8, scoped, tag = 'scoped memory for attention_birnn_forward.1']
    #allocation5 [shape = 'u8[8192]{0}', space=vmem, size = 0x2000, scoped, tag = 'output window, operand 0']
    %13 = vsyncpa [#allocation3], 0
    %s14 = scalar_lea.sflag [#allocation3], 1
    %15 = vsyncpa %s14, 0
    %16 = vsyncpa [#allocation4], 0
    %s17 = scalar_lea.sflag [#allocation4], 1
    %18 = vsyncpa %s17, 0
    loop: start=0, step=1, limit=4
    $region2: #{attention_birnn_forward.1} parent=1 // loop_pre_header
      _
    $region3: #{attention_birnn_forward.1} parent=1 // loop_header
      %s20 = sphi 0, %s24
      %p21 = scmp.ge.s32.totalorder %s20, 4
      %s30 = sphi 0, %s32
      %s33 = sphi 0, %s30
      %s34 = sphi 0, %s33
      %s50 = sphi 0, %s34
      %s56 = sphi 0, %s58
      %s59 = sphi 0, %s56
      %s60 = sphi 0, %s59
      %s76 = sphi 0, %s60
      %s80 = sphi 0, %s80
      %s82 = sphi 0, %s80
      %s83 = sphi 0, %s82
      %s97 = sphi 0, %s83
      %s101 = sphi 0, %s101
      %s103 = sphi 0, %s101
      %s104 = sphi 0, %s103
      %s118 = sphi 0, %s104
      %s122 = sphi 0, %s122
      %s124 = sphi 0, %s122
      %s125 = sphi 0, %s124
      %s139 = sphi 0, %s125
      %s143 = sphi 0, %s143
      %s145 = sphi 0, %s143
      %s146 = sphi 0, %s145
      %s160 = sphi 0, %s146
      %s166 = sphi 0, %s168
      %s169 = sphi 0, %s166
      %s170 = sphi 0, %s169
      %s186 = sphi 0, %s170
      %s192 = sphi 0, %s194
      %s195 = sphi 0, %s192
      %s196 = sphi 0, %s195
      %s212 = sphi 0, %s196
    $region4: #{attention_birnn_forward.1} parent=1 // loop_header_branch
      %23 = sbr.rel (%p21) target = $region8
    $region5: #{attention_birnn_forward.1} parent=1 // loop_body
      %s25 = ssub.s32 %s20, 1
      %s26 = ssub.s32 %s20, 2
      %s27 = sadd.s32 %s20, 1
      %s28 = ssub.s32 %s20, %s27
      %p29 = scmp.eq.s32.totalorder %s28, 0
      %s31 = sadd.s32 %s30, 1
      %s32 = scalar_select %p29, %s30, %s31
      %p35 = pneg %p29
      %p36 = scmp.eq.s32.totalorder %s20, 1
      %p37 = por %p35, %p36
      %p38 = scmp.ne.s32.totalorder %s30, %s33
      %p39 = scmp.eq.s32.totalorder %s20, 0
      %p40 = por %p38, %p39
      %p41 = scmp.ne.s32.totalorder %s30, %s33
      %p42 = scmp.eq.s32.totalorder %s25, 1
      %p43 = por %p41, %p42
      %p44 = scmp.ne.s32.totalorder %s33, %s34
      %p45 = scmp.eq.s32.totalorder %s25, 0
      %p46 = por %p44, %p45
      %p47 = scmp.ne.s32.totalorder %s33, %s34
      %p48 = scmp.eq.s32.totalorder %s26, 1
      %p49 = por %p47, %p48
      %p51 = scmp.ne.s32.totalorder %s34, %s50
      %p52 = scmp.eq.s32.totalorder %s26, 0
      %p53 = por %p51, %p52
      %s54 = ssub.s32 %s20, %s27
      %p55 = scmp.eq.s32.totalorder %s54, 0
      %s57 = sadd.s32 %s56, 1
      %s58 = scalar_select %p55, %s56, %s57
      %p61 = pneg %p55
      %p62 = scmp.eq.s32.totalorder %s20, 1
      %p63 = por %p61, %p62
      %p64 = scmp.ne.s32.totalorder %s56, %s59
      %p65 = scmp.eq.s32.totalorder %s20, 0
      %p66 = por %p64, %p65
      %p67 = scmp.ne.s32.totalorder %s56, %s59
      %p68 = scmp.eq.s32.totalorder %s25, 1
      %p69 = por %p67, %p68
      %p70 = scmp.ne.s32.totalorder %s59, %s60
      %p71 = scmp.eq.s32.totalorder %s25, 0
      %p72 = por %p70, %p71
      %p73 = scmp.ne.s32.totalorder %s59, %s60
      %p74 = scmp.eq.s32.totalorder %s26, 1
      %p75 = por %p73, %p74
      %p77 = scmp.ne.s32.totalorder %s60, %s76
      %p78 = scmp.eq.s32.totalorder %s26, 0
      %p79 = por %p77, %p78
      %s81 = sadd.s32 %s80, 1
      %p84 = scmp.eq.s32.totalorder %s20, 1
      %p85 = scmp.ne.s32.totalorder %s80, %s82
      %p86 = scmp.eq.s32.totalorder %s20, 0
      %p87 = por %p85, %p86
      %p88 = scmp.ne.s32.totalorder %s80, %s82
      %p89 = scmp.eq.s32.totalorder %s25, 1
      %p90 = por %p88, %p89
      %p91 = scmp.ne.s32.totalorder %s82, %s83
      %p92 = scmp.eq.s32.totalorder %s25, 0
      %p93 = por %p91, %p92
      %p94 = scmp.ne.s32.totalorder %s82, %s83
      %p95 = scmp.eq.s32.totalorder %s26, 1
      %p96 = por %p94, %p95
      %p98 = scmp.ne.s32.totalorder %s83, %s97
      %p99 = scmp.eq.s32.totalorder %s26, 0
      %p100 = por %p98, %p99
      %s102 = sadd.s32 %s101, 1
      %p105 = scmp.eq.s32.totalorder %s20, 1
      %p106 = scmp.ne.s32.totalorder %s101, %s103
      %p107 = scmp.eq.s32.totalorder %s20, 0
      %p108 = por %p106, %p107
      %p109 = scmp.ne.s32.totalorder %s101, %s103
      %p110 = scmp.eq.s32.totalorder %s25, 1
      %p111 = por %p109, %p110
      %p112 = scmp.ne.s32.totalorder %s103, %s104
      %p113 = scmp.eq.s32.totalorder %s25, 0
      %p114 = por %p112, %p113
      %p115 = scmp.ne.s32.totalorder %s103, %s104
      %p116 = scmp.eq.s32.totalorder %s26, 1
      %p117 = por %p115, %p116
      %p119 = scmp.ne.s32.totalorder %s104, %s118
      %p120 = scmp.eq.s32.totalorder %s26, 0
      %p121 = por %p119, %p120
      %s123 = sadd.s32 %s122, 1
      %p126 = scmp.eq.s32.totalorder %s20, 1
      %p127 = scmp.ne.s32.totalorder %s122, %s124
      %p128 = scmp.eq.s32.totalorder %s20, 0
      %p129 = por %p127, %p128
      %p130 = scmp.ne.s32.totalorder %s122, %s124
      %p131 = scmp.eq.s32.totalorder %s25, 1
      %p132 = por %p130, %p131
      %p133 = scmp.ne.s32.totalorder %s124, %s125
      %p134 = scmp.eq.s32.totalorder %s25, 0
      %p135 = por %p133, %p134
      %p136 = scmp.ne.s32.totalorder %s124, %s125
      %p137 = scmp.eq.s32.totalorder %s26, 1
      %p138 = por %p136, %p137
      %p140 = scmp.ne.s32.totalorder %s125, %s139
      %p141 = scmp.eq.s32.totalorder %s26, 0
      %p142 = por %p140, %p141
      %s144 = sadd.s32 %s143, 1
      %p147 = scmp.eq.s32.totalorder %s20, 1
      %p148 = scmp.ne.s32.totalorder %s143, %s145
      %p149 = scmp.eq.s32.totalorder %s20, 0
      %p150 = por %p148, %p149
      %p151 = scmp.ne.s32.totalorder %s143, %s145
      %p152 = scmp.eq.s32.totalorder %s25, 1
      %p153 = por %p151, %p152
      %p154 = scmp.ne.s32.totalorder %s145, %s146
      %p155 = scmp.eq.s32.totalorder %s25, 0
      %p156 = por %p154, %p155
      %p157 = scmp.ne.s32.totalorder %s145, %s146
      %p158 = scmp.eq.s32.totalorder %s26, 1
      %p159 = por %p157, %p158
      %p161 = scmp.ne.s32.totalorder %s146, %s160
      %p162 = scmp.eq.s32.totalorder %s26, 0
      %p163 = por %p161, %p162
      %s164 = ssub.s32 %s20, %s27
      %p165 = scmp.eq.s32.totalorder %s164, 0
      %s167 = sadd.s32 %s166, 1
      %s168 = scalar_select %p165, %s166, %s167
      %p171 = pneg %p165
      %p172 = scmp.eq.s32.totalorder %s20, 1
      %p173 = por %p171, %p172
      %p174 = scmp.ne.s32.totalorder %s166, %s169
      %p175 = scmp.eq.s32.totalorder %s20, 0
      %p176 = por %p174, %p175
      %p177 = scmp.ne.s32.totalorder %s166, %s169
      %p178 = scmp.eq.s32.totalorder %s25, 1
      %p179 = por %p177, %p178
      %p180 = scmp.ne.s32.totalorder %s169, %s170
      %p181 = scmp.eq.s32.totalorder %s25, 0
      %p182 = por %p180, %p181
      %p183 = scmp.ne.s32.totalorder %s169, %s170
      %p184 = scmp.eq.s32.totalorder %s26, 1
      %p185 = por %p183, %p184
      %p187 = scmp.ne.s32.totalorder %s170, %s186
      %p188 = scmp.eq.s32.totalorder %s26, 0
      %p189 = por %p187, %p188
      %s190 = ssub.s32 %s20, %s27
      %p191 = scmp.eq.s32.totalorder %s190, 0
      %s193 = sadd.s32 %s192, 1
      %s194 = scalar_select %p191, %s192, %s193
      %p197 = pneg %p191
      %p198 = scmp.eq.s32.totalorder %s20, 1
      %p199 = por %p197, %p198
      %p200 = scmp.ne.s32.totalorder %s192, %s195
      %p201 = scmp.eq.s32.totalorder %s20, 0
      %p202 = por %p200, %p201
      %p203 = scmp.ne.s32.totalorder %s192, %s195
      %p204 = scmp.eq.s32.totalorder %s25, 1
      %p205 = por %p203, %p204
      %p206 = scmp.ne.s32.totalorder %s195, %s196
      %p207 = scmp.eq.s32.totalorder %s25, 0
      %p208 = por %p206, %p207
      %p209 = scmp.ne.s32.totalorder %s195, %s196
      %p210 = scmp.eq.s32.totalorder %s26, 1
      %p211 = por %p209, %p210
      %p213 = scmp.ne.s32.totalorder %s196, %s212
      %p214 = scmp.eq.s32.totalorder %s26, 0
      %p215 = por %p213, %p214
      %p216 = scmp.le.s32.totalorder 1, %s20
      %p217 = scmp.lt.s32.totalorder %s20, 3
      %p218 = pnand %p216, %p217
      %p219 = pneg %p218
      // Predicated region
      $region9: #{attention_birnn_forward.1} parent=5 // pred_check
        _
      $region10: #{attention_birnn_forward.1} parent=5 // pred_check_branch
        %221 = sbr.rel (%p218) target = $region12
      $region11: #{attention_birnn_forward.1} parent=5 // pred_region
        %s222 = ssub.s32 %s20, 1
        // Predicated region
        $region13: #{attention_birnn_forward.1} parent=11 // pred_check
          %p223 = pneg %p93
        $region14: #{attention_birnn_forward.1} parent=11 // pred_check_branch
          %225 = sbr.rel (%p223) target = $region16
        $region15: #{attention_birnn_forward.1} parent=11 // pred_region
          _
        $region16: #{attention_birnn_forward.1} parent=11 // pred_fallthru
          _
        // Predicated region
        $region17: #{attention_birnn_forward.1} parent=11 // pred_check
          %p226 = pneg %p114
        $region18: #{attention_birnn_forward.1} parent=11 // pred_check_branch
          %228 = sbr.rel (%p226) target = $region20
        $region19: #{attention_birnn_forward.1} parent=11 // pred_region
          _
        $region20: #{attention_birnn_forward.1} parent=11 // pred_fallthru
          _
        // Predicated region
        $region21: #{attention_birnn_forward.1} parent=11 // pred_check
          %p229 = pneg %p135
        $region22: #{attention_birnn_forward.1} parent=11 // pred_check_branch
          %231 = sbr.rel (%p229) target = $region24
        $region23: #{attention_birnn_forward.1} parent=11 // pred_region
          _
        $region24: #{attention_birnn_forward.1} parent=11 // pred_fallthru
          _
        // Predicated region
        $region25: #{attention_birnn_forward.1} parent=11 // pred_check
          %p232 = pneg %p156
        $region26: #{attention_birnn_forward.1} parent=11 // pred_check_branch
          %234 = sbr.rel (%p232) target = $region28
        $region27: #{attention_birnn_forward.1} parent=11 // pred_region
          _
        $region28: #{attention_birnn_forward.1} parent=11 // pred_fallthru
          _
      $region12: #{attention_birnn_forward.1} parent=5 // pred_fallthru
        _
      %p235 = scmp.lt.s32.totalorder %s20, 2
      // Predicated region
      $region29: #{attention_birnn_forward.1} parent=5 // pred_check
        %p236 = pneg %p235
      $region30: #{attention_birnn_forward.1} parent=5 // pred_check_branch
        %238 = sbr.rel (%p236) target = $region32
      $region31: #{attention_birnn_forward.1} parent=5 // pred_region
        // Predicated region
        $region33: #{attention_birnn_forward.1} parent=31 // pred_check
          %p239 = pneg %p40
        $region34: #{attention_birnn_forward.1} parent=31 // pred_check_branch
          %241 = sbr.rel (%p239) target = $region36
        $region35: #{attention_birnn_forward.1} parent=31 // pred_region
          %s242 = sand.u32 %s30, 1
          %s243 = scalar_lea.sflag [#allocation3], %s242
          %s244 = sand.u32 %s30, 1
          %s245 = smul.addr %s244, 64
          %s246 = scalar_lea.vmem [#allocation2], %s245
          %s247 = smul.u32 8, %s20
          %249 = vsyncadd %s243, 0
          %s250 = smul.addr %s247, 8
          %s251 = scalar_lea.hbm %s0, %s250
          %s252 = sshll.u32 %s251, 4
          %s253 = int_to_ptr.hbm [resolvable:$true] %s252
          %s254 = sshll.u32 %s246, 4
          %s255 = int_to_ptr.vmem [resolvable:$true] %s254
          %260 = dma.hbm_to_vmem [thread:$0]  %s253, 1024, %s255, %s243, 128, 128, 8
        $region36: #{attention_birnn_forward.1} parent=31 // pred_fallthru
          _
        // Predicated region
        $region37: #{attention_birnn_forward.1} parent=31 // pred_check
          %p261 = pneg %p66
        $region38: #{attention_birnn_forward.1} parent=31 // pred_check_branch
          %263 = sbr.rel (%p261) target = $region40
        $region39: #{attention_birnn_forward.1} parent=31 // pred_region
          %p264 = scmp.lt.s32.totalorder %s20, 1
          %s265 = scalar_select %p264, %s20, 1
          %s266 = smul.addr %s265, 8
          %s267 = scalar_lea.vmem %s1, %s266
        $region40: #{attention_birnn_forward.1} parent=31 // pred_fallthru
          _
      $region32: #{attention_birnn_forward.1} parent=5 // pred_fallthru
        _
      %p268 = scmp.le.s32.totalorder 1, %s20
      %p269 = scmp.lt.s32.totalorder %s20, 3
      %p270 = pnand %p268, %p269
      %p271 = pneg %p270
      // Predicated region
      $region41: #{attention_birnn_forward.1} parent=5 // pred_check
        _
      $region42: #{attention_birnn_forward.1} parent=5 // pred_check_branch
        %273 = sbr.rel (%p270) target = $region44
      $region43: #{attention_birnn_forward.1} parent=5 // pred_region
        %s274 = ssub.s32 %s20, 1
        %s275 = sand.u32 %s33, 1
        %s276 = scalar_lea.sflag [#allocation3], %s275
        %s277 = sand.u32 %s33, 1
        %s278 = smul.addr %s277, 64
        %s279 = scalar_lea.vmem [#allocation2], %s278
        // Predicated region
        $region45: #{attention_birnn_forward.1} parent=43 // pred_check
          %p280 = pneg %p46
        $region46: #{attention_birnn_forward.1} parent=43 // pred_check_branch
          %282 = sbr.rel (%p280) target = $region48
        $region47: #{attention_birnn_forward.1} parent=43 // pred_region
          %284 = dma.done %s276, 1024
        $region48: #{attention_birnn_forward.1} parent=43 // pred_fallthru
          _
        %s285 = sand.u32 %s33, 1
        %s286 = scalar_lea.sflag [#allocation3], %s285
        %s287 = sand.u32 %s33, 1
        %s288 = smul.addr %s287, 64
        %s289 = scalar_lea.vmem [#allocation2], %s288
        %p290 = pneg %p46
        %p291 = pneg %p43
        %p292 = scmp.lt.s32.totalorder %s25, 1
        %s293 = scalar_select %p292, %s25, 1
        %s294 = smul.addr %s293, 8
        %s295 = scalar_lea.vmem %s1, %s294
        %p296 = pneg %p72
        %p297 = pneg %p69
        %p298 = pneg %p93
        %p299 = pneg %p90
        %p300 = pneg %p114
        %p301 = pneg %p111
        %p302 = pneg %p135
        %p303 = pneg %p132
        %p304 = pneg %p156
        %p305 = pneg %p153
        %p306 = pneg %p182
        %p307 = pneg %p179
        %s308 = sand.u32 %s169, 1
        %s309 = scalar_lea.sflag [#allocation4], %s308
        %s310 = sand.u32 %s169, 1
        %s311 = smul.addr %s310, 8
        %s312 = scalar_lea.vmem [#allocation5], %s311
        %p313 = pneg %p208
        %p314 = pneg %p205
        %p315 = scmp.lt.s32.totalorder %s25, 1
        %s316 = scalar_select %p315, %s25, 1
        %s317 = smul.addr %s316, 8
        %s318 = scalar_lea.vmem %s7, %s317
        %s319 = smul.u32 8, %s25
        %p320 = scmp.lt.s32.totalorder %s25, 1
        %s321 = scalar_select %p320, %s25, 1
        %s322 = smul.addr %s321, 8
        %s323 = scalar_lea.vmem %s1, %s322
        %p324 = scmp.lt.s32.totalorder %s25, 1
        %s325 = scalar_select %p324, %s25, 1
        %s326 = smul.addr %s325, 8
        %s327 = scalar_lea.vmem %s7, %s326
        %v328 = vld [vmem:[%s279] sm:$0xff]
        %v329 = vld [vmem:[%s279 + $0x8] sm:$0xff]
        %v330 = vld [vmem:[%s279 + $0x10] sm:$0xff]
        %v331 = vld [vmem:[%s279 + $0x18] sm:$0xff]
        %v332 = vld [vmem:[%s279 + $0x20] sm:$0xff]
        %v333 = vld [vmem:[%s279 + $0x28] sm:$0xff]
        %v334 = vld [vmem:[%s279 + $0x30] sm:$0xff]
        %v335 = vld [vmem:[%s279 + $0x38] sm:$0xff]
        %v336 = vld [vmem:[%s2] sm:$0x1]
        %v338 = vperm.slane %v336, 0
        %v340 = vmul.f32 %v328, %v338
        %v341 = vmul.f32 %v329, %v338
        %v342 = vmul.f32 %v330, %v338
        %v343 = vmul.f32 %v331, %v338
        %v344 = vmul.f32 %v332, %v338
        %v345 = vmul.f32 %v333, %v338
        %v346 = vmul.f32 %v334, %v338
        %v347 = vmul.f32 %v335, %v338
        %348 = vadd.xlane.f32.xlu0 %v340
        %v349 = vpop.xlane.xlu0 %348
        %350 = vadd.xlane.f32.xlu0 %v341
        %v351 = vpop.xlane.xlu0 %350
        %352 = vadd.xlane.f32.xlu0 %v342
        %v353 = vpop.xlane.xlu0 %352
        %354 = vadd.xlane.f32.xlu0 %v343
        %v355 = vpop.xlane.xlu0 %354
        %356 = vadd.xlane.f32.xlu0 %v344
        %v357 = vpop.xlane.xlu0 %356
        %358 = vadd.xlane.f32.xlu0 %v345
        %v359 = vpop.xlane.xlu0 %358
        %360 = vadd.xlane.f32.xlu0 %v346
        %v361 = vpop.xlane.xlu0 %360
        %362 = vadd.xlane.f32.xlu0 %v347
        %v363 = vpop.xlane.xlu0 %362
        %v364 = vld [vmem:[%s3] sm:$0x3]
        %v365 = vld [vmem:[%s4] sm:$0x3]
        %v366 = vld [vmem:[%s5] sm:$0x3]
        %v367 = vperm.slane %v349, 0
        %v368 = vperm.slane %v351, 0
        %v369 = vperm.slane %v353, 0
        %v370 = vperm.slane %v355, 0
        %v371 = vperm.slane %v357, 0
        %v372 = vperm.slane %v359, 0
        %v373 = vperm.slane %v361, 0
        %v374 = vperm.slane %v363, 0
        %v375 = vperm.slane %v364, 0
        %v377 = vlaneseq
        %v378 = vshrl.u32 %v377, 7
        %380 = vset.pattern.permute.xlu0 %v378
        %381 = vperm.xlu0 %380, %v375
        %v382 = vpop.permute.xlu0 %381
        %v384 = vmul.f32 %v367, %v382
        %v385 = vmul.f32 %v368, %v382
        %v386 = vmul.f32 %v369, %v382
        %v387 = vmul.f32 %v370, %v382
        %v388 = vmul.f32 %v371, %v382
        %v389 = vmul.f32 %v372, %v382
        %v390 = vmul.f32 %v373, %v382
        %v391 = vmul.f32 %v374, %v382
        %v392 = vperm.slane %v365, 0
        %v393 = vmul.f32 %v392, 0.0
        %v395 = vlaneseq
        %v396 = vshrl.u32 %v395, 7
        %398 = vset.pattern.permute.xlu0 %v396
        %399 = vperm.xlu0 %398, %v393
        %v400 = vpop.permute.xlu0 %399
        %v402 = vadd.f32 %v384, %v400
        %v403 = vadd.f32 %v385, %v400
        %v404 = vadd.f32 %v386, %v400
        %v405 = vadd.f32 %v387, %v400
        %v406 = vadd.f32 %v388, %v400
        %v407 = vadd.f32 %v389, %v400
        %v408 = vadd.f32 %v390, %v400
        %v409 = vadd.f32 %v391, %v400
        %v410 = vperm.slane %v366, 0
        %v412 = vlaneseq
        %v413 = vshrl.u32 %v412, 7
        %415 = vset.pattern.permute.xlu0 %v413
        %416 = vperm.xlu0 %415, %v410
        %v417 = vpop.permute.xlu0 %416
        %v419 = vadd.f32 %v402, %v417
        %v420 = vadd.f32 %v403, %v417
        %v421 = vadd.f32 %v404, %v417
        %v422 = vadd.f32 %v405, %v417
        %v423 = vadd.f32 %v406, %v417
        %v424 = vadd.f32 %v407, %v417
        %v425 = vadd.f32 %v408, %v417
        %v426 = vadd.f32 %v409, %v417
        %v427 = vsub.f32 0.0, %v419
        %v428 = vsub.f32 0.0, %v420
        %v429 = vsub.f32 0.0, %v421
        %v430 = vsub.f32 0.0, %v422
        %v431 = vsub.f32 0.0, %v423
        %v432 = vsub.f32 0.0, %v424
        %v433 = vsub.f32 0.0, %v425
        %v434 = vsub.f32 0.0, %v426
        %v435 = vmul.f32 %v427, 1.442695
        %v436 = vpow.pop %v435
        %v437 = vmul.f32 %v428, 1.442695
        %v438 = vpow.pop %v437
        %v439 = vmul.f32 %v429, 1.442695
        %v440 = vpow.pop %v439
        %v441 = vmul.f32 %v430, 1.442695
        %v442 = vpow.pop %v441
        %v443 = vmul.f32 %v431, 1.442695
        %v444 = vpow.pop %v443
        %v445 = vmul.f32 %v432, 1.442695
        %v446 = vpow.pop %v445
        %v447 = vmul.f32 %v433, 1.442695
        %v448 = vpow.pop %v447
        %v449 = vmul.f32 %v434, 1.442695
        %v450 = vpow.pop %v449
        %v451 = vadd.f32 %v436, 1.0
        %v452 = vadd.f32 %v438, 1.0
        %v453 = vadd.f32 %v440, 1.0
        %v454 = vadd.f32 %v442, 1.0
        %v455 = vadd.f32 %v444, 1.0
        %v456 = vadd.f32 %v446, 1.0
        %v457 = vadd.f32 %v448, 1.0
        %v458 = vadd.f32 %v450, 1.0
        %v459 = vrcp.pop %v451
        %v460 = vmul.f32 %v451, %v459
        %v461 = vsub.f32 1.0, %v460
        %v462 = vmul.f32 %v459, %v461
        %v463 = vadd.f32 %v459, %v462
        %vm464 = vweird.f32 %v451
        %vm465 = vweird.f32 %v459
        %vm466 = vmor %vm464, %vm465
        %v467 = vsel %vm466, %v459, %v463
        %v468 = vand.u32 2147483647, %v451
        %vm469 = vcmp.eq.f32.partialorder %v468, 8.507059e+37
        %v470 = vand.u32 %v451, 2147483648
        %v471 = vor.u32 1.1754944e-38, %v470
        %v472 = vsel %vm469, %v471, %v467
        %v473 = vmul.f32 1.0, %v472
        %v474 = vrcp.pop %v452
        %v475 = vmul.f32 %v452, %v474
        %v476 = vsub.f32 1.0, %v475
        %v477 = vmul.f32 %v474, %v476
        %v478 = vadd.f32 %v474, %v477
        %vm479 = vweird.f32 %v452
        %vm480 = vweird.f32 %v474
        %vm481 = vmor %vm479, %vm480
        %v482 = vsel %vm481, %v474, %v478
        %v483 = vand.u32 2147483647, %v452
        %vm484 = vcmp.eq.f32.partialorder %v483, 8.507059e+37
        %v485 = vand.u32 %v452, 2147483648
        %v486 = vor.u32 1.1754944e-38, %v485
        %v487 = vsel %vm484, %v486, %v482
        %v488 = vmul.f32 1.0, %v487
        %v489 = vrcp.pop %v453
        %v490 = vmul.f32 %v453, %v489
        %v491 = vsub.f32 1.0, %v490
        %v492 = vmul.f32 %v489, %v491
        %v493 = vadd.f32 %v489, %v492
        %vm494 = vweird.f32 %v453
        %vm495 = vweird.f32 %v489
        %vm496 = vmor %vm494, %vm495
        %v497 = vsel %vm496, %v489, %v493
        %v498 = vand.u32 2147483647, %v453
        %vm499 = vcmp.eq.f32.partialorder %v498, 8.507059e+37
        %v500 = vand.u32 %v453, 2147483648
        %v501 = vor.u32 1.1754944e-38, %v500
        %v502 = vsel %vm499, %v501, %v497
        %v503 = vmul.f32 1.0, %v502
        %v504 = vrcp.pop %v454
        %v505 = vmul.f32 %v454, %v504
        %v506 = vsub.f32 1.0, %v505
        %v507 = vmul.f32 %v504, %v506
        %v508 = vadd.f32 %v504, %v507
        %vm509 = vweird.f32 %v454
        %vm510 = vweird.f32 %v504
        %vm511 = vmor %vm509, %vm510
        %v512 = vsel %vm511, %v504, %v508
        %v513 = vand.u32 2147483647, %v454
        %vm514 = vcmp.eq.f32.partialorder %v513, 8.507059e+37
        %v515 = vand.u32 %v454, 2147483648
        %v516 = vor.u32 1.1754944e-38, %v515
        %v517 = vsel %vm514, %v516, %v512
        %v518 = vmul.f32 1.0, %v517
        %v519 = vrcp.pop %v455
        %v520 = vmul.f32 %v455, %v519
        %v521 = vsub.f32 1.0, %v520
        %v522 = vmul.f32 %v519, %v521
        %v523 = vadd.f32 %v519, %v522
        %vm524 = vweird.f32 %v455
        %vm525 = vweird.f32 %v519
        %vm526 = vmor %vm524, %vm525
        %v527 = vsel %vm526, %v519, %v523
        %v528 = vand.u32 2147483647, %v455
        %vm529 = vcmp.eq.f32.partialorder %v528, 8.507059e+37
        %v530 = vand.u32 %v455, 2147483648
        %v531 = vor.u32 1.1754944e-38, %v530
        %v532 = vsel %vm529, %v531, %v527
        %v533 = vmul.f32 1.0, %v532
        %v534 = vrcp.pop %v456
        %v535 = vmul.f32 %v456, %v534
        %v536 = vsub.f32 1.0, %v535
        %v537 = vmul.f32 %v534, %v536
        %v538 = vadd.f32 %v534, %v537
        %vm539 = vweird.f32 %v456
        %vm540 = vweird.f32 %v534
        %vm541 = vmor %vm539, %vm540
        %v542 = vsel %vm541, %v534, %v538
        %v543 = vand.u32 2147483647, %v456
        %vm544 = vcmp.eq.f32.partialorder %v543, 8.507059e+37
        %v545 = vand.u32 %v456, 2147483648
        %v546 = vor.u32 1.1754944e-38, %v545
        %v547 = vsel %vm544, %v546, %v542
        %v548 = vmul.f32 1.0, %v547
        %v549 = vrcp.pop %v457
        %v550 = vmul.f32 %v457, %v549
        %v551 = vsub.f32 1.0, %v550
        %v552 = vmul.f32 %v549, %v551
        %v553 = vadd.f32 %v549, %v552
        %vm554 = vweird.f32 %v457
        %vm555 = vweird.f32 %v549
        %vm556 = vmor %vm554, %vm555
        %v557 = vsel %vm556, %v549, %v553
        %v558 = vand.u32 2147483647, %v457
        %vm559 = vcmp.eq.f32.partialorder %v558, 8.507059e+37
        %v560 = vand.u32 %v457, 2147483648
        %v561 = vor.u32 1.1754944e-38, %v560
        %v562 = vsel %vm559, %v561, %v557
        %v563 = vmul.f32 1.0, %v562
        %v564 = vrcp.pop %v458
        %v565 = vmul.f32 %v458, %v564
        %v566 = vsub.f32 1.0, %v565
        %v567 = vmul.f32 %v564, %v566
        %v568 = vadd.f32 %v564, %v567
        %vm569 = vweird.f32 %v458
        %vm570 = vweird.f32 %v564
        %vm571 = vmor %vm569, %vm570
        %v572 = vsel %vm571, %v564, %v568
        %v573 = vand.u32 2147483647, %v458
        %vm574 = vcmp.eq.f32.partialorder %v573, 8.507059e+37
        %v575 = vand.u32 %v458, 2147483648
        %v576 = vor.u32 1.1754944e-38, %v575
        %v577 = vsel %vm574, %v576, %v572
        %v578 = vmul.f32 1.0, %v577
        %v579 = vtanh.pop %v419
        %v580 = vtanh.pop %v420
        %v581 = vtanh.pop %v421
        %v582 = vtanh.pop %v422
        %v583 = vtanh.pop %v423
        %v584 = vtanh.pop %v424
        %v585 = vtanh.pop %v425
        %v586 = vtanh.pop %v426
        %v587 = vmul.f32 %v473, 0.0
        %v588 = vmul.f32 %v488, 0.0
        %v589 = vmul.f32 %v503, 0.0
        %v590 = vmul.f32 %v518, 0.0
        %v591 = vmul.f32 %v533, 0.0
        %v592 = vmul.f32 %v548, 0.0
        %v593 = vmul.f32 %v563, 0.0
        %v594 = vmul.f32 %v578, 0.0
        %v603 = vrot.slane %v579, 2
        %v604 = vrot.slane %v580, 2
        %v605 = vrot.slane %v581, 2
        %v606 = vrot.slane %v582, 2
        %v607 = vrot.slane %v583, 2
        %v608 = vrot.slane %v584, 2
        %v609 = vrot.slane %v585, 2
        %v610 = vrot.slane %v586, 2
        %v619 = vmul.f32 %v473, %v603
        %v620 = vmul.f32 %v488, %v604
        %v621 = vmul.f32 %v503, %v605
        %v622 = vmul.f32 %v518, %v606
        %v623 = vmul.f32 %v533, %v607
        %v624 = vmul.f32 %v548, %v608
        %v625 = vmul.f32 %v563, %v609
        %v626 = vmul.f32 %v578, %v610
        %v635 = vrot.slane %v619, 7
        %v636 = vrot.slane %v620, 7
        %v637 = vrot.slane %v621, 7
        %v638 = vrot.slane %v622, 7
        %v639 = vrot.slane %v623, 7
        %v640 = vrot.slane %v624, 7
        %v641 = vrot.slane %v625, 7
        %v642 = vrot.slane %v626, 7
        %v651 = vadd.f32 %v587, %v635
        %v652 = vadd.f32 %v588, %v636
        %v653 = vadd.f32 %v589, %v637
        %v654 = vadd.f32 %v590, %v638
        %v655 = vadd.f32 %v591, %v639
        %v656 = vadd.f32 %v592, %v640
        %v657 = vadd.f32 %v593, %v641
        %v658 = vadd.f32 %v594, %v642
        %v659 = vtanh.pop %v651
        %v660 = vtanh.pop %v652
        %v661 = vtanh.pop %v653
        %v662 = vtanh.pop %v654
        %v663 = vtanh.pop %v655
        %v664 = vtanh.pop %v656
        %v665 = vtanh.pop %v657
        %v666 = vtanh.pop %v658
        %v675 = vrot.slane %v659, 6
        %v676 = vrot.slane %v660, 6
        %v677 = vrot.slane %v661, 6
        %v678 = vrot.slane %v662, 6
        %v679 = vrot.slane %v663, 6
        %v680 = vrot.slane %v664, 6
        %v681 = vrot.slane %v665, 6
        %v682 = vrot.slane %v666, 6
        %v691 = vmul.f32 %v473, %v675
        %v692 = vmul.f32 %v488, %v676
        %v693 = vmul.f32 %v503, %v677
        %v694 = vmul.f32 %v518, %v678
        %v695 = vmul.f32 %v533, %v679
        %v696 = vmul.f32 %v548, %v680
        %v697 = vmul.f32 %v563, %v681
        %v698 = vmul.f32 %v578, %v682
        %v699 = vperm.slane %v349, 7
        %v700 = vperm.slane %v351, 7
        %v701 = vperm.slane %v353, 7
        %v702 = vperm.slane %v355, 7
        %v703 = vperm.slane %v357, 7
        %v704 = vperm.slane %v359, 7
        %v705 = vperm.slane %v361, 7
        %v706 = vperm.slane %v363, 7
        %v707 = vperm.slane %v364, 1
        %v709 = vlaneseq
        %v710 = vshrl.u32 %v709, 7
        %712 = vset.pattern.permute.xlu0 %v710
        %713 = vperm.xlu0 %712, %v707
        %v714 = vpop.permute.xlu0 %713
        %v716 = vmul.f32 %v699, %v714
        %v717 = vmul.f32 %v700, %v714
        %v718 = vmul.f32 %v701, %v714
        %v719 = vmul.f32 %v702, %v714
        %v720 = vmul.f32 %v703, %v714
        %v721 = vmul.f32 %v704, %v714
        %v722 = vmul.f32 %v705, %v714
        %v723 = vmul.f32 %v706, %v714
        %v724 = vperm.slane %v365, 1
        %v725 = vmul.f32 %v724, 0.0
        %v727 = vlaneseq
        %v728 = vshrl.u32 %v727, 7
        %730 = vset.pattern.permute.xlu0 %v728
        %731 = vperm.xlu0 %730, %v725
        %v732 = vpop.permute.xlu0 %731
        %v734 = vadd.f32 %v716, %v732
        %v735 = vadd.f32 %v717, %v732
        %v736 = vadd.f32 %v718, %v732
        %v737 = vadd.f32 %v719, %v732
        %v738 = vadd.f32 %v720, %v732
        %v739 = vadd.f32 %v721, %v732
        %v740 = vadd.f32 %v722, %v732
        %v741 = vadd.f32 %v723, %v732
        %v742 = vperm.slane %v366, 1
        %v744 = vlaneseq
        %v745 = vshrl.u32 %v744, 7
        %747 = vset.pattern.permute.xlu0 %v745
        %748 = vperm.xlu0 %747, %v742
        %v749 = vpop.permute.xlu0 %748
        %v751 = vadd.f32 %v734, %v749
        %v752 = vadd.f32 %v735, %v749
        %v753 = vadd.f32 %v736, %v749
        %v754 = vadd.f32 %v737, %v749
        %v755 = vadd.f32 %v738, %v749
        %v756 = vadd.f32 %v739, %v749
        %v757 = vadd.f32 %v740, %v749
        %v758 = vadd.f32 %v741, %v749
        %v759 = vsub.f32 0.0, %v751
        %v760 = vsub.f32 0.0, %v752
        %v761 = vsub.f32 0.0, %v753
        %v762 = vsub.f32 0.0, %v754
        %v763 = vsub.f32 0.0, %v755
        %v764 = vsub.f32 0.0, %v756
        %v765 = vsub.f32 0.0, %v757
        %v766 = vsub.f32 0.0, %v758
        %v767 = vmul.f32 %v759, 1.442695
        %v768 = vpow.pop %v767
        %v769 = vmul.f32 %v760, 1.442695
        %v770 = vpow.pop %v769
        %v771 = vmul.f32 %v761, 1.442695
        %v772 = vpow.pop %v771
        %v773 = vmul.f32 %v762, 1.442695
        %v774 = vpow.pop %v773
        %v775 = vmul.f32 %v763, 1.442695
        %v776 = vpow.pop %v775
        %v777 = vmul.f32 %v764, 1.442695
        %v778 = vpow.pop %v777
        %v779 = vmul.f32 %v765, 1.442695
        %v780 = vpow.pop %v779
        %v781 = vmul.f32 %v766, 1.442695
        %v782 = vpow.pop %v781
        %v783 = vadd.f32 %v768, 1.0
        %v784 = vadd.f32 %v770, 1.0
        %v785 = vadd.f32 %v772, 1.0
        %v786 = vadd.f32 %v774, 1.0
        %v787 = vadd.f32 %v776, 1.0
        %v788 = vadd.f32 %v778, 1.0
        %v789 = vadd.f32 %v780, 1.0
        %v790 = vadd.f32 %v782, 1.0
        %v791 = vrcp.pop %v783
        %v792 = vmul.f32 %v783, %v791
        %v793 = vsub.f32 1.0, %v792
        %v794 = vmul.f32 %v791, %v793
        %v795 = vadd.f32 %v791, %v794
        %vm796 = vweird.f32 %v783
        %vm797 = vweird.f32 %v791
        %vm798 = vmor %vm796, %vm797
        %v799 = vsel %vm798, %v791, %v795
        %v800 = vand.u32 2147483647, %v783
        %vm801 = vcmp.eq.f32.partialorder %v800, 8.507059e+37
        %v802 = vand.u32 %v783, 2147483648
        %v803 = vor.u32 1.1754944e-38, %v802
        %v804 = vsel %vm801, %v803, %v799
        %v805 = vmul.f32 1.0, %v804
        %v806 = vrcp.pop %v784
        %v807 = vmul.f32 %v784, %v806
        %v808 = vsub.f32 1.0, %v807
        %v809 = vmul.f32 %v806, %v808
        %v810 = vadd.f32 %v806, %v809
        %vm811 = vweird.f32 %v784
        %vm812 = vweird.f32 %v806
        %vm813 = vmor %vm811, %vm812
        %v814 = vsel %vm813, %v806, %v810
        %v815 = vand.u32 2147483647, %v784
        %vm816 = vcmp.eq.f32.partialorder %v815, 8.507059e+37
        %v817 = vand.u32 %v784, 2147483648
        %v818 = vor.u32 1.1754944e-38, %v817
        %v819 = vsel %vm816, %v818, %v814
        %v820 = vmul.f32 1.0, %v819
        %v821 = vrcp.pop %v785
        %v822 = vmul.f32 %v785, %v821
        %v823 = vsub.f32 1.0, %v822
        %v824 = vmul.f32 %v821, %v823
        %v825 = vadd.f32 %v821, %v824
        %vm826 = vweird.f32 %v785
        %vm827 = vweird.f32 %v821
        %vm828 = vmor %vm826, %vm827
        %v829 = vsel %vm828, %v821, %v825
        %v830 = vand.u32 2147483647, %v785
        %vm831 = vcmp.eq.f32.partialorder %v830, 8.507059e+37
        %v832 = vand.u32 %v785, 2147483648
        %v833 = vor.u32 1.1754944e-38, %v832
        %v834 = vsel %vm831, %v833, %v829
        %v835 = vmul.f32 1.0, %v834
        %v836 = vrcp.pop %v786
        %v837 = vmul.f32 %v786, %v836
        %v838 = vsub.f32 1.0, %v837
        %v839 = vmul.f32 %v836, %v838
        %v840 = vadd.f32 %v836, %v839
        %vm841 = vweird.f32 %v786
        %vm842 = vweird.f32 %v836
        %vm843 = vmor %vm841, %vm842
        %v844 = vsel %vm843, %v836, %v840
        %v845 = vand.u32 2147483647, %v786
        %vm846 = vcmp.eq.f32.partialorder %v845, 8.507059e+37
        %v847 = vand.u32 %v786, 2147483648
        %v848 = vor.u32 1.1754944e-38, %v847
        %v849 = vsel %vm846, %v848, %v844
        %v850 = vmul.f32 1.0, %v849
        %v851 = vrcp.pop %v787
        %v852 = vmul.f32 %v787, %v851
        %v853 = vsub.f32 1.0, %v852
        %v854 = vmul.f32 %v851, %v853
        %v855 = vadd.f32 %v851, %v854
        %vm856 = vweird.f32 %v787
        %vm857 = vweird.f32 %v851
        %vm858 = vmor %vm856, %vm857
        %v859 = vsel %vm858, %v851, %v855
        %v860 = vand.u32 2147483647, %v787
        %vm861 = vcmp.eq.f32.partialorder %v860, 8.507059e+37
        %v862 = vand.u32 %v787, 2147483648
        %v863 = vor.u32 1.1754944e-38, %v862
        %v864 = vsel %vm861, %v863, %v859
        %v865 = vmul.f32 1.0, %v864
        %v866 = vrcp.pop %v788
        %v867 = vmul.f32 %v788, %v866
        %v868 = vsub.f32 1.0, %v867
        %v869 = vmul.f32 %v866, %v868
        %v870 = vadd.f32 %v866, %v869
        %vm871 = vweird.f32 %v788
        %vm872 = vweird.f32 %v866
        %vm873 = vmor %vm871, %vm872
        %v874 = vsel %vm873, %v866, %v870
        %v875 = vand.u32 2147483647, %v788
        %vm876 = vcmp.eq.f32.partialorder %v875, 8.507059e+37
        %v877 = vand.u32 %v788, 2147483648
        %v878 = vor.u32 1.1754944e-38, %v877
        %v879 = vsel %vm876, %v878, %v874
        %v880 = vmul.f32 1.0, %v879
        %v881 = vrcp.pop %v789
        %v882 = vmul.f32 %v789, %v881
        %v883 = vsub.f32 1.0, %v882
        %v884 = vmul.f32 %v881, %v883
        %v885 = vadd.f32 %v881, %v884
        %vm886 = vweird.f32 %v789
        %vm887 = vweird.f32 %v881
        %vm888 = vmor %vm886, %vm887
        %v889 = vsel %vm888, %v881, %v885
        %v890 = vand.u32 2147483647, %v789
        %vm891 = vcmp.eq.f32.partialorder %v890, 8.507059e+37
        %v892 = vand.u32 %v789, 2147483648
        %v893 = vor.u32 1.1754944e-38, %v892
        %v894 = vsel %vm891, %v893, %v889
        %v895 = vmul.f32 1.0, %v894
        %v896 = vrcp.pop %v790
        %v897 = vmul.f32 %v790, %v896
        %v898 = vsub.f32 1.0, %v897
        %v899 = vmul.f32 %v896, %v898
        %v900 = vadd.f32 %v896, %v899
        %vm901 = vweird.f32 %v790
        %vm902 = vweird.f32 %v896
        %vm903 = vmor %vm901, %vm902
        %v904 = vsel %vm903, %v896, %v900
        %v905 = vand.u32 2147483647, %v790
        %vm906 = vcmp.eq.f32.partialorder %v905, 8.507059e+37
        %v907 = vand.u32 %v790, 2147483648
        %v908 = vor.u32 1.1754944e-38, %v907
        %v909 = vsel %vm906, %v908, %v904
        %v910 = vmul.f32 1.0, %v909
        %v911 = vtanh.pop %v751
        %v912 = vtanh.pop %v752
        %v913 = vtanh.pop %v753
        %v914 = vtanh.pop %v754
        %v915 = vtanh.pop %v755
        %v916 = vtanh.pop %v756
        %v917 = vtanh.pop %v757
        %v918 = vtanh.pop %v758
        %v919 = vmul.f32 %v805, 0.0
        %v920 = vmul.f32 %v820, 0.0
        %v921 = vmul.f32 %v835, 0.0
        %v922 = vmul.f32 %v850, 0.0
        %v923 = vmul.f32 %v865, 0.0
        %v924 = vmul.f32 %v880, 0.0
        %v925 = vmul.f32 %v895, 0.0
        %v926 = vmul.f32 %v910, 0.0
        %v935 = vrot.slane %v911, 2
        %v936 = vrot.slane %v912, 2
        %v937 = vrot.slane %v913, 2
        %v938 = vrot.slane %v914, 2
        %v939 = vrot.slane %v915, 2
        %v940 = vrot.slane %v916, 2
        %v941 = vrot.slane %v917, 2
        %v942 = vrot.slane %v918, 2
        %v951 = vmul.f32 %v805, %v935
        %v952 = vmul.f32 %v820, %v936
        %v953 = vmul.f32 %v835, %v937
        %v954 = vmul.f32 %v850, %v938
        %v955 = vmul.f32 %v865, %v939
        %v956 = vmul.f32 %v880, %v940
        %v957 = vmul.f32 %v895, %v941
        %v958 = vmul.f32 %v910, %v942
        %v967 = vrot.slane %v951, 7
        %v968 = vrot.slane %v952, 7
        %v969 = vrot.slane %v953, 7
        %v970 = vrot.slane %v954, 7
        %v971 = vrot.slane %v955, 7
        %v972 = vrot.slane %v956, 7
        %v973 = vrot.slane %v957, 7
        %v974 = vrot.slane %v958, 7
        %v983 = vadd.f32 %v919, %v967
        %v984 = vadd.f32 %v920, %v968
        %v985 = vadd.f32 %v921, %v969
        %v986 = vadd.f32 %v922, %v970
        %v987 = vadd.f32 %v923, %v971
        %v988 = vadd.f32 %v924, %v972
        %v989 = vadd.f32 %v925, %v973
        %v990 = vadd.f32 %v926, %v974
        %v991 = vtanh.pop %v983
        %v992 = vtanh.pop %v984
        %v993 = vtanh.pop %v985
        %v994 = vtanh.pop %v986
        %v995 = vtanh.pop %v987
        %v996 = vtanh.pop %v988
        %v997 = vtanh.pop %v989
        %v998 = vtanh.pop %v990
        %v1007 = vrot.slane %v991, 6
        %v1008 = vrot.slane %v992, 6
        %v1009 = vrot.slane %v993, 6
        %v1010 = vrot.slane %v994, 6
        %v1011 = vrot.slane %v995, 6
        %v1012 = vrot.slane %v996, 6
        %v1013 = vrot.slane %v997, 6
        %v1014 = vrot.slane %v998, 6
        %v1023 = vmul.f32 %v805, %v1007
        %v1024 = vmul.f32 %v820, %v1008
        %v1025 = vmul.f32 %v835, %v1009
        %v1026 = vmul.f32 %v850, %v1010
        %v1027 = vmul.f32 %v865, %v1011
        %v1028 = vmul.f32 %v880, %v1012
        %v1029 = vmul.f32 %v895, %v1013
        %v1030 = vmul.f32 %v910, %v1014
        %v1031 = vperm.slane %v349, 1
        %v1032 = vperm.slane %v351, 1
        %v1033 = vperm.slane %v353, 1
        %v1034 = vperm.slane %v355, 1
        %v1035 = vperm.slane %v357, 1
        %v1036 = vperm.slane %v359, 1
        %v1037 = vperm.slane %v361, 1
        %v1038 = vperm.slane %v363, 1
        %v1039 = vmul.f32 %v1031, %v382
        %v1040 = vmul.f32 %v1032, %v382
        %v1041 = vmul.f32 %v1033, %v382
        %v1042 = vmul.f32 %v1034, %v382
        %v1043 = vmul.f32 %v1035, %v382
        %v1044 = vmul.f32 %v1036, %v382
        %v1045 = vmul.f32 %v1037, %v382
        %v1046 = vmul.f32 %v1038, %v382
        %v1047 = vperm.slane %v691, 3
        %v1048 = vperm.slane %v692, 3
        %v1049 = vperm.slane %v693, 3
        %v1050 = vperm.slane %v694, 3
        %v1051 = vperm.slane %v695, 3
        %v1052 = vperm.slane %v696, 3
        %v1053 = vperm.slane %v697, 3
        %v1054 = vperm.slane %v698, 3
        %v1056 = vlaneseq
        %v1057 = vshrl.u32 %v1056, 7
        %1059 = vset.pattern.permute.xlu0 %v1057
        %1060 = vperm.xlu0 %1059, %v392
        %v1061 = vpop.permute.xlu0 %1060
        %v1063 = vmul.f32 %v1047, %v1061
        %v1064 = vmul.f32 %v1048, %v1061
        %v1065 = vmul.f32 %v1049, %v1061
        %v1066 = vmul.f32 %v1050, %v1061
        %v1067 = vmul.f32 %v1051, %v1061
        %v1068 = vmul.f32 %v1052, %v1061
        %v1069 = vmul.f32 %v1053, %v1061
        %v1070 = vmul.f32 %v1054, %v1061
        %v1071 = vadd.f32 %v1039, %v1063
        %v1072 = vadd.f32 %v1040, %v1064
        %v1073 = vadd.f32 %v1041, %v1065
        %v1074 = vadd.f32 %v1042, %v1066
        %v1075 = vadd.f32 %v1043, %v1067
        %v1076 = vadd.f32 %v1044, %v1068
        %v1077 = vadd.f32 %v1045, %v1069
        %v1078 = vadd.f32 %v1046, %v1070
        %v1079 = vadd.f32 %v1071, %v417
        %v1080 = vadd.f32 %v1072, %v417
        %v1081 = vadd.f32 %v1073, %v417
        %v1082 = vadd.f32 %v1074, %v417
        %v1083 = vadd.f32 %v1075, %v417
        %v1084 = vadd.f32 %v1076, %v417
        %v1085 = vadd.f32 %v1077, %v417
        %v1086 = vadd.f32 %v1078, %v417
        %v1087 = vsub.f32 0.0, %v1079
        %v1088 = vsub.f32 0.0, %v1080
        %v1089 = vsub.f32 0.0, %v1081
        %v1090 = vsub.f32 0.0, %v1082
        %v1091 = vsub.f32 0.0, %v1083
        %v1092 = vsub.f32 0.0, %v1084
        %v1093 = vsub.f32 0.0, %v1085
        %v1094 = vsub.f32 0.0, %v1086
        %v1095 = vmul.f32 %v1087, 1.442695
        %v1096 = vpow.pop %v1095
        %v1097 = vmul.f32 %v1088, 1.442695
        %v1098 = vpow.pop %v1097
        %v1099 = vmul.f32 %v1089, 1.442695
        %v1100 = vpow.pop %v1099
        %v1101 = vmul.f32 %v1090, 1.442695
        %v1102 = vpow.pop %v1101
        %v1103 = vmul.f32 %v1091, 1.442695
        %v1104 = vpow.pop %v1103
        %v1105 = vmul.f32 %v1092, 1.442695
        %v1106 = vpow.pop %v1105
        %v1107 = vmul.f32 %v1093, 1.442695
        %v1108 = vpow.pop %v1107
        %v1109 = vmul.f32 %v1094, 1.442695
        %v1110 = vpow.pop %v1109
        %v1111 = vadd.f32 %v1096, 1.0
        %v1112 = vadd.f32 %v1098, 1.0
        %v1113 = vadd.f32 %v1100, 1.0
        %v1114 = vadd.f32 %v1102, 1.0
        %v1115 = vadd.f32 %v1104, 1.0
        %v1116 = vadd.f32 %v1106, 1.0
        %v1117 = vadd.f32 %v1108, 1.0
        %v1118 = vadd.f32 %v1110, 1.0
        %v1119 = vrcp.pop %v1111
        %v1120 = vmul.f32 %v1111, %v1119
        %v1121 = vsub.f32 1.0, %v1120
        %v1122 = vmul.f32 %v1119, %v1121
        %v1123 = vadd.f32 %v1119, %v1122
        %vm1124 = vweird.f32 %v1111
        %vm1125 = vweird.f32 %v1119
        %vm1126 = vmor %vm1124, %vm1125
        %v1127 = vsel %vm1126, %v1119, %v1123
        %v1128 = vand.u32 2147483647, %v1111
        %vm1129 = vcmp.eq.f32.partialorder %v1128, 8.507059e+37
        %v1130 = vand.u32 %v1111, 2147483648
        %v1131 = vor.u32 1.1754944e-38, %v1130
        %v1132 = vsel %vm1129, %v1131, %v1127
        %v1133 = vmul.f32 1.0, %v1132
        %v1134 = vrcp.pop %v1112
        %v1135 = vmul.f32 %v1112, %v1134
        %v1136 = vsub.f32 1.0, %v1135
        %v1137 = vmul.f32 %v1134, %v1136
        %v1138 = vadd.f32 %v1134, %v1137
        %vm1139 = vweird.f32 %v1112
        %vm1140 = vweird.f32 %v1134
        %vm1141 = vmor %vm1139, %vm1140
        %v1142 = vsel %vm1141, %v1134, %v1138
        %v1143 = vand.u32 2147483647, %v1112
        %vm1144 = vcmp.eq.f32.partialorder %v1143, 8.507059e+37
        %v1145 = vand.u32 %v1112, 2147483648
        %v1146 = vor.u32 1.1754944e-38, %v1145
        %v1147 = vsel %vm1144, %v1146, %v1142
        %v1148 = vmul.f32 1.0, %v1147
        %v1149 = vrcp.pop %v1113
        %v1150 = vmul.f32 %v1113, %v1149
        %v1151 = vsub.f32 1.0, %v1150
        %v1152 = vmul.f32 %v1149, %v1151
        %v1153 = vadd.f32 %v1149, %v1152
        %vm1154 = vweird.f32 %v1113
        %vm1155 = vweird.f32 %v1149
        %vm1156 = vmor %vm1154, %vm1155
        %v1157 = vsel %vm1156, %v1149, %v1153
        %v1158 = vand.u32 2147483647, %v1113
        %vm1159 = vcmp.eq.f32.partialorder %v1158, 8.507059e+37
        %v1160 = vand.u32 %v1113, 2147483648
        %v1161 = vor.u32 1.1754944e-38, %v1160
        %v1162 = vsel %vm1159, %v1161, %v1157
        %v1163 = vmul.f32 1.0, %v1162
        %v1164 = vrcp.pop %v1114
        %v1165 = vmul.f32 %v1114, %v1164
        %v1166 = vsub.f32 1.0, %v1165
        %v1167 = vmul.f32 %v1164, %v1166
        %v1168 = vadd.f32 %v1164, %v1167
        %vm1169 = vweird.f32 %v1114
        %vm1170 = vweird.f32 %v1164
        %vm1171 = vmor %vm1169, %vm1170
        %v1172 = vsel %vm1171, %v1164, %v1168
        %v1173 = vand.u32 2147483647, %v1114
        %vm1174 = vcmp.eq.f32.partialorder %v1173, 8.507059e+37
        %v1175 = vand.u32 %v1114, 2147483648
        %v1176 = vor.u32 1.1754944e-38, %v1175
        %v1177 = vsel %vm1174, %v1176, %v1172
        %v1178 = vmul.f32 1.0, %v1177
        %v1179 = vrcp.pop %v1115
        %v1180 = vmul.f32 %v1115, %v1179
        %v1181 = vsub.f32 1.0, %v1180
        %v1182 = vmul.f32 %v1179, %v1181
        %v1183 = vadd.f32 %v1179, %v1182
        %vm1184 = vweird.f32 %v1115
        %vm1185 = vweird.f32 %v1179
        %vm1186 = vmor %vm1184, %vm1185
        %v1187 = vsel %vm1186, %v1179, %v1183
        %v1188 = vand.u32 2147483647, %v1115
        %vm1189 = vcmp.eq.f32.partialorder %v1188, 8.507059e+37
        %v1190 = vand.u32 %v1115, 2147483648
        %v1191 = vor.u32 1.1754944e-38, %v1190
        %v1192 = vsel %vm1189, %v1191, %v1187
        %v1193 = vmul.f32 1.0, %v1192
        %v1194 = vrcp.pop %v1116
        %v1195 = vmul.f32 %v1116, %v1194
        %v1196 = vsub.f32 1.0, %v1195
        %v1197 = vmul.f32 %v1194, %v1196
        %v1198 = vadd.f32 %v1194, %v1197
        %vm1199 = vweird.f32 %v1116
        %vm1200 = vweird.f32 %v1194
        %vm1201 = vmor %vm1199, %vm1200
        %v1202 = vsel %vm1201, %v1194, %v1198
        %v1203 = vand.u32 2147483647, %v1116
        %vm1204 = vcmp.eq.f32.partialorder %v1203, 8.507059e+37
        %v1205 = vand.u32 %v1116, 2147483648
        %v1206 = vor.u32 1.1754944e-38, %v1205
        %v1207 = vsel %vm1204, %v1206, %v1202
        %v1208 = vmul.f32 1.0, %v1207
        %v1209 = vrcp.pop %v1117
        %v1210 = vmul.f32 %v1117, %v1209
        %v1211 = vsub.f32 1.0, %v1210
        %v1212 = vmul.f32 %v1209, %v1211
        %v1213 = vadd.f32 %v1209, %v1212
        %vm1214 = vweird.f32 %v1117
        %vm1215 = vweird.f32 %v1209
        %vm1216 = vmor %vm1214, %vm1215
        %v1217 = vsel %vm1216, %v1209, %v1213
        %v1218 = vand.u32 2147483647, %v1117
        %vm1219 = vcmp.eq.f32.partialorder %v1218, 8.507059e+37
        %v1220 = vand.u32 %v1117, 2147483648
        %v1221 = vor.u32 1.1754944e-38, %v1220
        %v1222 = vsel %vm1219, %v1221, %v1217
        %v1223 = vmul.f32 1.0, %v1222
        %v1224 = vrcp.pop %v1118
        %v1225 = vmul.f32 %v1118, %v1224
        %v1226 = vsub.f32 1.0, %v1225
        %v1227 = vmul.f32 %v1224, %v1226
        %v1228 = vadd.f32 %v1224, %v1227
        %vm1229 = vweird.f32 %v1118
        %vm1230 = vweird.f32 %v1224
        %vm1231 = vmor %vm1229, %vm1230
        %v1232 = vsel %vm1231, %v1224, %v1228
        %v1233 = vand.u32 2147483647, %v1118
        %vm1234 = vcmp.eq.f32.partialorder %v1233, 8.507059e+37
        %v1235 = vand.u32 %v1118, 2147483648
        %v1236 = vor.u32 1.1754944e-38, %v1235
        %v1237 = vsel %vm1234, %v1236, %v1232
        %v1238 = vmul.f32 1.0, %v1237
        %v1239 = vtanh.pop %v1079
        %v1240 = vtanh.pop %v1080
        %v1241 = vtanh.pop %v1081
        %v1242 = vtanh.pop %v1082
        %v1243 = vtanh.pop %v1083
        %v1244 = vtanh.pop %v1084
        %v1245 = vtanh.pop %v1085
        %v1246 = vtanh.pop %v1086
        %v1247 = vmul.f32 %v1133, %v651
        %v1248 = vmul.f32 %v1148, %v652
        %v1249 = vmul.f32 %v1163, %v653
        %v1250 = vmul.f32 %v1178, %v654
        %v1251 = vmul.f32 %v1193, %v655
        %v1252 = vmul.f32 %v1208, %v656
        %v1253 = vmul.f32 %v1223, %v657
        %v1254 = vmul.f32 %v1238, %v658
        %v1263 = vrot.slane %v1239, 2
        %v1264 = vrot.slane %v1240, 2
        %v1265 = vrot.slane %v1241, 2
        %v1266 = vrot.slane %v1242, 2
        %v1267 = vrot.slane %v1243, 2
        %v1268 = vrot.slane %v1244, 2
        %v1269 = vrot.slane %v1245, 2
        %v1270 = vrot.slane %v1246, 2
        %v1279 = vmul.f32 %v1133, %v1263
        %v1280 = vmul.f32 %v1148, %v1264
        %v1281 = vmul.f32 %v1163, %v1265
        %v1282 = vmul.f32 %v1178, %v1266
        %v1283 = vmul.f32 %v1193, %v1267
        %v1284 = vmul.f32 %v1208, %v1268
        %v1285 = vmul.f32 %v1223, %v1269
        %v1286 = vmul.f32 %v1238, %v1270
        %v1295 = vrot.slane %v1279, 7
        %v1296 = vrot.slane %v1280, 7
        %v1297 = vrot.slane %v1281, 7
        %v1298 = vrot.slane %v1282, 7
        %v1299 = vrot.slane %v1283, 7
        %v1300 = vrot.slane %v1284, 7
        %v1301 = vrot.slane %v1285, 7
        %v1302 = vrot.slane %v1286, 7
        %v1311 = vadd.f32 %v1247, %v1295
        %v1312 = vadd.f32 %v1248, %v1296
        %v1313 = vadd.f32 %v1249, %v1297
        %v1314 = vadd.f32 %v1250, %v1298
        %v1315 = vadd.f32 %v1251, %v1299
        %v1316 = vadd.f32 %v1252, %v1300
        %v1317 = vadd.f32 %v1253, %v1301
        %v1318 = vadd.f32 %v1254, %v1302
        %v1319 = vtanh.pop %v1311
        %v1320 = vtanh.pop %v1312
        %v1321 = vtanh.pop %v1313
        %v1322 = vtanh.pop %v1314
        %v1323 = vtanh.pop %v1315
        %v1324 = vtanh.pop %v1316
        %v1325 = vtanh.pop %v1317
        %v1326 = vtanh.pop %v1318
        %v1335 = vrot.slane %v1319, 6
        %v1336 = vrot.slane %v1320, 6
        %v1337 = vrot.slane %v1321, 6
        %v1338 = vrot.slane %v1322, 6
        %v1339 = vrot.slane %v1323, 6
        %v1340 = vrot.slane %v1324, 6
        %v1341 = vrot.slane %v1325, 6
        %v1342 = vrot.slane %v1326, 6
        %v1351 = vmul.f32 %v1133, %v1335
        %v1352 = vmul.f32 %v1148, %v1336
        %v1353 = vmul.f32 %v1163, %v1337
        %v1354 = vmul.f32 %v1178, %v1338
        %v1355 = vmul.f32 %v1193, %v1339
        %v1356 = vmul.f32 %v1208, %v1340
        %v1357 = vmul.f32 %v1223, %v1341
        %v1358 = vmul.f32 %v1238, %v1342
        %v1359 = vperm.slane %v349, 6
        %v1360 = vperm.slane %v351, 6
        %v1361 = vperm.slane %v353, 6
        %v1362 = vperm.slane %v355, 6
        %v1363 = vperm.slane %v357, 6
        %v1364 = vperm.slane %v359, 6
        %v1365 = vperm.slane %v361, 6
        %v1366 = vperm.slane %v363, 6
        %v1367 = vmul.f32 %v1359, %v714
        %v1368 = vmul.f32 %v1360, %v714
        %v1369 = vmul.f32 %v1361, %v714
        %v1370 = vmul.f32 %v1362, %v714
        %v1371 = vmul.f32 %v1363, %v714
        %v1372 = vmul.f32 %v1364, %v714
        %v1373 = vmul.f32 %v1365, %v714
        %v1374 = vmul.f32 %v1366, %v714
        %v1375 = vperm.slane %v1023, 3
        %v1376 = vperm.slane %v1024, 3
        %v1377 = vperm.slane %v1025, 3
        %v1378 = vperm.slane %v1026, 3
        %v1379 = vperm.slane %v1027, 3
        %v1380 = vperm.slane %v1028, 3
        %v1381 = vperm.slane %v1029, 3
        %v1382 = vperm.slane %v1030, 3
        %v1384 = vlaneseq
        %v1385 = vshrl.u32 %v1384, 7
        %1387 = vset.pattern.permute.xlu0 %v1385
        %1388 = vperm.xlu0 %1387, %v724
        %v1389 = vpop.permute.xlu0 %1388
        %v1391 = vmul.f32 %v1375, %v1389
        %v1392 = vmul.f32 %v1376, %v1389
        %v1393 = vmul.f32 %v1377, %v1389
        %v1394 = vmul.f32 %v1378, %v1389
        %v1395 = vmul.f32 %v1379, %v1389
        %v1396 = vmul.f32 %v1380, %v1389
        %v1397 = vmul.f32 %v1381, %v1389
        %v1398 = vmul.f32 %v1382, %v1389
        %v1399 = vadd.f32 %v1367, %v1391
        %v1400 = vadd.f32 %v1368, %v1392
        %v1401 = vadd.f32 %v1369, %v1393
        %v1402 = vadd.f32 %v1370, %v1394
        %v1403 = vadd.f32 %v1371, %v1395
        %v1404 = vadd.f32 %v1372, %v1396
        %v1405 = vadd.f32 %v1373, %v1397
        %v1406 = vadd.f32 %v1374, %v1398
        %v1407 = vadd.f32 %v1399, %v749
        %v1408 = vadd.f32 %v1400, %v749
        %v1409 = vadd.f32 %v1401, %v749
        %v1410 = vadd.f32 %v1402, %v749
        %v1411 = vadd.f32 %v1403, %v749
        %v1412 = vadd.f32 %v1404, %v749
        %v1413 = vadd.f32 %v1405, %v749
        %v1414 = vadd.f32 %v1406, %v749
        %v1415 = vsub.f32 0.0, %v1407
        %v1416 = vsub.f32 0.0, %v1408
        %v1417 = vsub.f32 0.0, %v1409
        %v1418 = vsub.f32 0.0, %v1410
        %v1419 = vsub.f32 0.0, %v1411
        %v1420 = vsub.f32 0.0, %v1412
        %v1421 = vsub.f32 0.0, %v1413
        %v1422 = vsub.f32 0.0, %v1414
        %v1423 = vmul.f32 %v1415, 1.442695
        %v1424 = vpow.pop %v1423
        %v1425 = vmul.f32 %v1416, 1.442695
        %v1426 = vpow.pop %v1425
        %v1427 = vmul.f32 %v1417, 1.442695
        %v1428 = vpow.pop %v1427
        %v1429 = vmul.f32 %v1418, 1.442695
        %v1430 = vpow.pop %v1429
        %v1431 = vmul.f32 %v1419, 1.442695
        %v1432 = vpow.pop %v1431
        %v1433 = vmul.f32 %v1420, 1.442695
        %v1434 = vpow.pop %v1433
        %v1435 = vmul.f32 %v1421, 1.442695
        %v1436 = vpow.pop %v1435
        %v1437 = vmul.f32 %v1422, 1.442695
        %v1438 = vpow.pop %v1437
        %v1439 = vadd.f32 %v1424, 1.0
        %v1440 = vadd.f32 %v1426, 1.0
        %v1441 = vadd.f32 %v1428, 1.0
        %v1442 = vadd.f32 %v1430, 1.0
        %v1443 = vadd.f32 %v1432, 1.0
        %v1444 = vadd.f32 %v1434, 1.0
        %v1445 = vadd.f32 %v1436, 1.0
        %v1446 = vadd.f32 %v1438, 1.0
        %v1447 = vrcp.pop %v1439
        %v1448 = vmul.f32 %v1439, %v1447
        %v1449 = vsub.f32 1.0, %v1448
        %v1450 = vmul.f32 %v1447, %v1449
        %v1451 = vadd.f32 %v1447, %v1450
        %vm1452 = vweird.f32 %v1439
        %vm1453 = vweird.f32 %v1447
        %vm1454 = vmor %vm1452, %vm1453
        %v1455 = vsel %vm1454, %v1447, %v1451
        %v1456 = vand.u32 2147483647, %v1439
        %vm1457 = vcmp.eq.f32.partialorder %v1456, 8.507059e+37
        %v1458 = vand.u32 %v1439, 2147483648
        %v1459 = vor.u32 1.1754944e-38, %v1458
        %v1460 = vsel %vm1457, %v1459, %v1455
        %v1461 = vmul.f32 1.0, %v1460
        %v1462 = vrcp.pop %v1440
        %v1463 = vmul.f32 %v1440, %v1462
        %v1464 = vsub.f32 1.0, %v1463
        %v1465 = vmul.f32 %v1462, %v1464
        %v1466 = vadd.f32 %v1462, %v1465
        %vm1467 = vweird.f32 %v1440
        %vm1468 = vweird.f32 %v1462
        %vm1469 = vmor %vm1467, %vm1468
        %v1470 = vsel %vm1469, %v1462, %v1466
        %v1471 = vand.u32 2147483647, %v1440
        %vm1472 = vcmp.eq.f32.partialorder %v1471, 8.507059e+37
        %v1473 = vand.u32 %v1440, 2147483648
        %v1474 = vor.u32 1.1754944e-38, %v1473
        %v1475 = vsel %vm1472, %v1474, %v1470
        %v1476 = vmul.f32 1.0, %v1475
        %v1477 = vrcp.pop %v1441
        %v1478 = vmul.f32 %v1441, %v1477
        %v1479 = vsub.f32 1.0, %v1478
        %v1480 = vmul.f32 %v1477, %v1479
        %v1481 = vadd.f32 %v1477, %v1480
        %vm1482 = vweird.f32 %v1441
        %vm1483 = vweird.f32 %v1477
        %vm1484 = vmor %vm1482, %vm1483
        %v1485 = vsel %vm1484, %v1477, %v1481
        %v1486 = vand.u32 2147483647, %v1441
        %vm1487 = vcmp.eq.f32.partialorder %v1486, 8.507059e+37
        %v1488 = vand.u32 %v1441, 2147483648
        %v1489 = vor.u32 1.1754944e-38, %v1488
        %v1490 = vsel %vm1487, %v1489, %v1485
        %v1491 = vmul.f32 1.0, %v1490
        %v1492 = vrcp.pop %v1442
        %v1493 = vmul.f32 %v1442, %v1492
        %v1494 = vsub.f32 1.0, %v1493
        %v1495 = vmul.f32 %v1492, %v1494
        %v1496 = vadd.f32 %v1492, %v1495
        %vm1497 = vweird.f32 %v1442
        %vm1498 = vweird.f32 %v1492
        %vm1499 = vmor %vm1497, %vm1498
        %v1500 = vsel %vm1499, %v1492, %v1496
        %v1501 = vand.u32 2147483647, %v1442
        %vm1502 = vcmp.eq.f32.partialorder %v1501, 8.507059e+37
        %v1503 = vand.u32 %v1442, 2147483648
        %v1504 = vor.u32 1.1754944e-38, %v1503
        %v1505 = vsel %vm1502, %v1504, %v1500
        %v1506 = vmul.f32 1.0, %v1505
        %v1507 = vrcp.pop %v1443
        %v1508 = vmul.f32 %v1443, %v1507
        %v1509 = vsub.f32 1.0, %v1508
        %v1510 = vmul.f32 %v1507, %v1509
        %v1511 = vadd.f32 %v1507, %v1510
        %vm1512 = vweird.f32 %v1443
        %vm1513 = vweird.f32 %v1507
        %vm1514 = vmor %vm1512, %vm1513
        %v1515 = vsel %vm1514, %v1507, %v1511
        %v1516 = vand.u32 2147483647, %v1443
        %vm1517 = vcmp.eq.f32.partialorder %v1516, 8.507059e+37
        %v1518 = vand.u32 %v1443, 2147483648
        %v1519 = vor.u32 1.1754944e-38, %v1518
        %v1520 = vsel %vm1517, %v1519, %v1515
        %v1521 = vmul.f32 1.0, %v1520
        %v1522 = vrcp.pop %v1444
        %v1523 = vmul.f32 %v1444, %v1522
        %v1524 = vsub.f32 1.0, %v1523
        %v1525 = vmul.f32 %v1522, %v1524
        %v1526 = vadd.f32 %v1522, %v1525
        %vm1527 = vweird.f32 %v1444
        %vm1528 = vweird.f32 %v1522
        %vm1529 = vmor %vm1527, %vm1528
        %v1530 = vsel %vm1529, %v1522, %v1526
        %v1531 = vand.u32 2147483647, %v1444
        %vm1532 = vcmp.eq.f32.partialorder %v1531, 8.507059e+37
        %v1533 = vand.u32 %v1444, 2147483648
        %v1534 = vor.u32 1.1754944e-38, %v1533
        %v1535 = vsel %vm1532, %v1534, %v1530
        %v1536 = vmul.f32 1.0, %v1535
        %v1537 = vrcp.pop %v1445
        %v1538 = vmul.f32 %v1445, %v1537
        %v1539 = vsub.f32 1.0, %v1538
        %v1540 = vmul.f32 %v1537, %v1539
        %v1541 = vadd.f32 %v1537, %v1540
        %vm1542 = vweird.f32 %v1445
        %vm1543 = vweird.f32 %v1537
        %vm1544 = vmor %vm1542, %vm1543
        %v1545 = vsel %vm1544, %v1537, %v1541
        %v1546 = vand.u32 2147483647, %v1445
        %vm1547 = vcmp.eq.f32.partialorder %v1546, 8.507059e+37
        %v1548 = vand.u32 %v1445, 2147483648
        %v1549 = vor.u32 1.1754944e-38, %v1548
        %v1550 = vsel %vm1547, %v1549, %v1545
        %v1551 = vmul.f32 1.0, %v1550
        %v1552 = vrcp.pop %v1446
        %v1553 = vmul.f32 %v1446, %v1552
        %v1554 = vsub.f32 1.0, %v1553
        %v1555 = vmul.f32 %v1552, %v1554
        %v1556 = vadd.f32 %v1552, %v1555
        %vm1557 = vweird.f32 %v1446
        %vm1558 = vweird.f32 %v1552
        %vm1559 = vmor %vm1557, %vm1558
        %v1560 = vsel %vm1559, %v1552, %v1556
        %v1561 = vand.u32 2147483647, %v1446
        %vm1562 = vcmp.eq.f32.partialorder %v1561, 8.507059e+37
        %v1563 = vand.u32 %v1446, 2147483648
        %v1564 = vor.u32 1.1754944e-38, %v1563
        %v1565 = vsel %vm1562, %v1564, %v1560
        %v1566 = vmul.f32 1.0, %v1565
        %v1567 = vtanh.pop %v1407
        %v1568 = vtanh.pop %v1408
        %v1569 = vtanh.pop %v1409
        %v1570 = vtanh.pop %v1410
        %v1571 = vtanh.pop %v1411
        %v1572 = vtanh.pop %v1412
        %v1573 = vtanh.pop %v1413
        %v1574 = vtanh.pop %v1414
        %v1575 = vmul.f32 %v1461, %v983
        %v1576 = vmul.f32 %v1476, %v984
        %v1577 = vmul.f32 %v1491, %v985
        %v1578 = vmul.f32 %v1506, %v986
        %v1579 = vmul.f32 %v1521, %v987
        %v1580 = vmul.f32 %v1536, %v988
        %v1581 = vmul.f32 %v1551, %v989
        %v1582 = vmul.f32 %v1566, %v990
        %v1591 = vrot.slane %v1567, 2
        %v1592 = vrot.slane %v1568, 2
        %v1593 = vrot.slane %v1569, 2
        %v1594 = vrot.slane %v1570, 2
        %v1595 = vrot.slane %v1571, 2
        %v1596 = vrot.slane %v1572, 2
        %v1597 = vrot.slane %v1573, 2
        %v1598 = vrot.slane %v1574, 2
        %v1607 = vmul.f32 %v1461, %v1591
        %v1608 = vmul.f32 %v1476, %v1592
        %v1609 = vmul.f32 %v1491, %v1593
        %v1610 = vmul.f32 %v1506, %v1594
        %v1611 = vmul.f32 %v1521, %v1595
        %v1612 = vmul.f32 %v1536, %v1596
        %v1613 = vmul.f32 %v1551, %v1597
        %v1614 = vmul.f32 %v1566, %v1598
        %v1623 = vrot.slane %v1607, 7
        %v1624 = vrot.slane %v1608, 7
        %v1625 = vrot.slane %v1609, 7
        %v1626 = vrot.slane %v1610, 7
        %v1627 = vrot.slane %v1611, 7
        %v1628 = vrot.slane %v1612, 7
        %v1629 = vrot.slane %v1613, 7
        %v1630 = vrot.slane %v1614, 7
        %v1639 = vadd.f32 %v1575, %v1623
        %v1640 = vadd.f32 %v1576, %v1624
        %v1641 = vadd.f32 %v1577, %v1625
        %v1642 = vadd.f32 %v1578, %v1626
        %v1643 = vadd.f32 %v1579, %v1627
        %v1644 = vadd.f32 %v1580, %v1628
        %v1645 = vadd.f32 %v1581, %v1629
        %v1646 = vadd.f32 %v1582, %v1630
        %v1647 = vtanh.pop %v1639
        %v1648 = vtanh.pop %v1640
        %v1649 = vtanh.pop %v1641
        %v1650 = vtanh.pop %v1642
        %v1651 = vtanh.pop %v1643
        %v1652 = vtanh.pop %v1644
        %v1653 = vtanh.pop %v1645
        %v1654 = vtanh.pop %v1646
        %v1663 = vrot.slane %v1647, 6
        %v1664 = vrot.slane %v1648, 6
        %v1665 = vrot.slane %v1649, 6
        %v1666 = vrot.slane %v1650, 6
        %v1667 = vrot.slane %v1651, 6
        %v1668 = vrot.slane %v1652, 6
        %v1669 = vrot.slane %v1653, 6
        %v1670 = vrot.slane %v1654, 6
        %v1679 = vmul.f32 %v1461, %v1663
        %v1680 = vmul.f32 %v1476, %v1664
        %v1681 = vmul.f32 %v1491, %v1665
        %v1682 = vmul.f32 %v1506, %v1666
        %v1683 = vmul.f32 %v1521, %v1667
        %v1684 = vmul.f32 %v1536, %v1668
        %v1685 = vmul.f32 %v1551, %v1669
        %v1686 = vmul.f32 %v1566, %v1670
        %v1687 = vperm.slane %v349, 2
        %v1688 = vperm.slane %v351, 2
        %v1689 = vperm.slane %v353, 2
        %v1690 = vperm.slane %v355, 2
        %v1691 = vperm.slane %v357, 2
        %v1692 = vperm.slane %v359, 2
        %v1693 = vperm.slane %v361, 2
        %v1694 = vperm.slane %v363, 2
        %v1695 = vmul.f32 %v1687, %v382
        %v1696 = vmul.f32 %v1688, %v382
        %v1697 = vmul.f32 %v1689, %v382
        %v1698 = vmul.f32 %v1690, %v382
        %v1699 = vmul.f32 %v1691, %v382
        %v1700 = vmul.f32 %v1692, %v382
        %v1701 = vmul.f32 %v1693, %v382
        %v1702 = vmul.f32 %v1694, %v382
        %v1703 = vperm.slane %v1351, 3
        %v1704 = vperm.slane %v1352, 3
        %v1705 = vperm.slane %v1353, 3
        %v1706 = vperm.slane %v1354, 3
        %v1707 = vperm.slane %v1355, 3
        %v1708 = vperm.slane %v1356, 3
        %v1709 = vperm.slane %v1357, 3
        %v1710 = vperm.slane %v1358, 3
        %v1711 = vmul.f32 %v1703, %v1061
        %v1712 = vmul.f32 %v1704, %v1061
        %v1713 = vmul.f32 %v1705, %v1061
        %v1714 = vmul.f32 %v1706, %v1061
        %v1715 = vmul.f32 %v1707, %v1061
        %v1716 = vmul.f32 %v1708, %v1061
        %v1717 = vmul.f32 %v1709, %v1061
        %v1718 = vmul.f32 %v1710, %v1061
        %v1719 = vadd.f32 %v1695, %v1711
        %v1720 = vadd.f32 %v1696, %v1712
        %v1721 = vadd.f32 %v1697, %v1713
        %v1722 = vadd.f32 %v1698, %v1714
        %v1723 = vadd.f32 %v1699, %v1715
        %v1724 = vadd.f32 %v1700, %v1716
        %v1725 = vadd.f32 %v1701, %v1717
        %v1726 = vadd.f32 %v1702, %v1718
        %v1727 = vadd.f32 %v1719, %v417
        %v1728 = vadd.f32 %v1720, %v417
        %v1729 = vadd.f32 %v1721, %v417
        %v1730 = vadd.f32 %v1722, %v417
        %v1731 = vadd.f32 %v1723, %v417
        %v1732 = vadd.f32 %v1724, %v417
        %v1733 = vadd.f32 %v1725, %v417
        %v1734 = vadd.f32 %v1726, %v417
        %v1735 = vsub.f32 0.0, %v1727
        %v1736 = vsub.f32 0.0, %v1728
        %v1737 = vsub.f32 0.0, %v1729
        %v1738 = vsub.f32 0.0, %v1730
        %v1739 = vsub.f32 0.0, %v1731
        %v1740 = vsub.f32 0.0, %v1732
        %v1741 = vsub.f32 0.0, %v1733
        %v1742 = vsub.f32 0.0, %v1734
        %v1743 = vmul.f32 %v1735, 1.442695
        %v1744 = vpow.pop %v1743
        %v1745 = vmul.f32 %v1736, 1.442695
        %v1746 = vpow.pop %v1745
        %v1747 = vmul.f32 %v1737, 1.442695
        %v1748 = vpow.pop %v1747
        %v1749 = vmul.f32 %v1738, 1.442695
        %v1750 = vpow.pop %v1749
        %v1751 = vmul.f32 %v1739, 1.442695
        %v1752 = vpow.pop %v1751
        %v1753 = vmul.f32 %v1740, 1.442695
        %v1754 = vpow.pop %v1753
        %v1755 = vmul.f32 %v1741, 1.442695
        %v1756 = vpow.pop %v1755
        %v1757 = vmul.f32 %v1742, 1.442695
        %v1758 = vpow.pop %v1757
        %v1759 = vadd.f32 %v1744, 1.0
        %v1760 = vadd.f32 %v1746, 1.0
        %v1761 = vadd.f32 %v1748, 1.0
        %v1762 = vadd.f32 %v1750, 1.0
        %v1763 = vadd.f32 %v1752, 1.0
        %v1764 = vadd.f32 %v1754, 1.0
        %v1765 = vadd.f32 %v1756, 1.0
        %v1766 = vadd.f32 %v1758, 1.0
        %v1767 = vrcp.pop %v1759
        %v1768 = vmul.f32 %v1759, %v1767
        %v1769 = vsub.f32 1.0, %v1768
        %v1770 = vmul.f32 %v1767, %v1769
        %v1771 = vadd.f32 %v1767, %v1770
        %vm1772 = vweird.f32 %v1759
        %vm1773 = vweird.f32 %v1767
        %vm1774 = vmor %vm1772, %vm1773
        %v1775 = vsel %vm1774, %v1767, %v1771
        %v1776 = vand.u32 2147483647, %v1759
        %vm1777 = vcmp.eq.f32.partialorder %v1776, 8.507059e+37
        %v1778 = vand.u32 %v1759, 2147483648
        %v1779 = vor.u32 1.1754944e-38, %v1778
        %v1780 = vsel %vm1777, %v1779, %v1775
        %v1781 = vmul.f32 1.0, %v1780
        %v1782 = vrcp.pop %v1760
        %v1783 = vmul.f32 %v1760, %v1782
        %v1784 = vsub.f32 1.0, %v1783
        %v1785 = vmul.f32 %v1782, %v1784
        %v1786 = vadd.f32 %v1782, %v1785
        %vm1787 = vweird.f32 %v1760
        %vm1788 = vweird.f32 %v1782
        %vm1789 = vmor %vm1787, %vm1788
        %v1790 = vsel %vm1789, %v1782, %v1786
        %v1791 = vand.u32 2147483647, %v1760
        %vm1792 = vcmp.eq.f32.partialorder %v1791, 8.507059e+37
        %v1793 = vand.u32 %v1760, 2147483648
        %v1794 = vor.u32 1.1754944e-38, %v1793
        %v1795 = vsel %vm1792, %v1794, %v1790
        %v1796 = vmul.f32 1.0, %v1795
        %v1797 = vrcp.pop %v1761
        %v1798 = vmul.f32 %v1761, %v1797
        %v1799 = vsub.f32 1.0, %v1798
        %v1800 = vmul.f32 %v1797, %v1799
        %v1801 = vadd.f32 %v1797, %v1800
        %vm1802 = vweird.f32 %v1761
        %vm1803 = vweird.f32 %v1797
        %vm1804 = vmor %vm1802, %vm1803
        %v1805 = vsel %vm1804, %v1797, %v1801
        %v1806 = vand.u32 2147483647, %v1761
        %vm1807 = vcmp.eq.f32.partialorder %v1806, 8.507059e+37
        %v1808 = vand.u32 %v1761, 2147483648
        %v1809 = vor.u32 1.1754944e-38, %v1808
        %v1810 = vsel %vm1807, %v1809, %v1805
        %v1811 = vmul.f32 1.0, %v1810
        %v1812 = vrcp.pop %v1762
        %v1813 = vmul.f32 %v1762, %v1812
        %v1814 = vsub.f32 1.0, %v1813
        %v1815 = vmul.f32 %v1812, %v1814
        %v1816 = vadd.f32 %v1812, %v1815
        %vm1817 = vweird.f32 %v1762
        %vm1818 = vweird.f32 %v1812
        %vm1819 = vmor %vm1817, %vm1818
        %v1820 = vsel %vm1819, %v1812, %v1816
        %v1821 = vand.u32 2147483647, %v1762
        %vm1822 = vcmp.eq.f32.partialorder %v1821, 8.507059e+37
        %v1823 = vand.u32 %v1762, 2147483648
        %v1824 = vor.u32 1.1754944e-38, %v1823
        %v1825 = vsel %vm1822, %v1824, %v1820
        %v1826 = vmul.f32 1.0, %v1825
        %v1827 = vrcp.pop %v1763
        %v1828 = vmul.f32 %v1763, %v1827
        %v1829 = vsub.f32 1.0, %v1828
        %v1830 = vmul.f32 %v1827, %v1829
        %v1831 = vadd.f32 %v1827, %v1830
        %vm1832 = vweird.f32 %v1763
        %vm1833 = vweird.f32 %v1827
        %vm1834 = vmor %vm1832, %vm1833
        %v1835 = vsel %vm1834, %v1827, %v1831
        %v1836 = vand.u32 2147483647, %v1763
        %vm1837 = vcmp.eq.f32.partialorder %v1836, 8.507059e+37
        %v1838 = vand.u32 %v1763, 2147483648
        %v1839 = vor.u32 1.1754944e-38, %v1838
        %v1840 = vsel %vm1837, %v1839, %v1835
        %v1841 = vmul.f32 1.0, %v1840
        %v1842 = vrcp.pop %v1764
        %v1843 = vmul.f32 %v1764, %v1842
        %v1844 = vsub.f32 1.0, %v1843
        %v1845 = vmul.f32 %v1842, %v1844
        %v1846 = vadd.f32 %v1842, %v1845
        %vm1847 = vweird.f32 %v1764
        %vm1848 = vweird.f32 %v1842
        %vm1849 = vmor %vm1847, %vm1848
        %v1850 = vsel %vm1849, %v1842, %v1846
        %v1851 = vand.u32 2147483647, %v1764
        %vm1852 = vcmp.eq.f32.partialorder %v1851, 8.507059e+37
        %v1853 = vand.u32 %v1764, 2147483648
        %v1854 = vor.u32 1.1754944e-38, %v1853
        %v1855 = vsel %vm1852, %v1854, %v1850
        %v1856 = vmul.f32 1.0, %v1855
        %v1857 = vrcp.pop %v1765
        %v1858 = vmul.f32 %v1765, %v1857
        %v1859 = vsub.f32 1.0, %v1858
        %v1860 = vmul.f32 %v1857, %v1859
        %v1861 = vadd.f32 %v1857, %v1860
        %vm1862 = vweird.f32 %v1765
        %vm1863 = vweird.f32 %v1857
        %vm1864 = vmor %vm1862, %vm1863
        %v1865 = vsel %vm1864, %v1857, %v1861
        %v1866 = vand.u32 2147483647, %v1765
        %vm1867 = vcmp.eq.f32.partialorder %v1866, 8.507059e+37
        %v1868 = vand.u32 %v1765, 2147483648
        %v1869 = vor.u32 1.1754944e-38, %v1868
        %v1870 = vsel %vm1867, %v1869, %v1865
        %v1871 = vmul.f32 1.0, %v1870
        %v1872 = vrcp.pop %v1766
        %v1873 = vmul.f32 %v1766, %v1872
        %v1874 = vsub.f32 1.0, %v1873
        %v1875 = vmul.f32 %v1872, %v1874
        %v1876 = vadd.f32 %v1872, %v1875
        %vm1877 = vweird.f32 %v1766
        %vm1878 = vweird.f32 %v1872
        %vm1879 = vmor %vm1877, %vm1878
        %v1880 = vsel %vm1879, %v1872, %v1876
        %v1881 = vand.u32 2147483647, %v1766
        %vm1882 = vcmp.eq.f32.partialorder %v1881, 8.507059e+37
        %v1883 = vand.u32 %v1766, 2147483648
        %v1884 = vor.u32 1.1754944e-38, %v1883
        %v1885 = vsel %vm1882, %v1884, %v1880
        %v1886 = vmul.f32 1.0, %v1885
        %v1887 = vtanh.pop %v1727
        %v1888 = vtanh.pop %v1728
        %v1889 = vtanh.pop %v1729
        %v1890 = vtanh.pop %v1730
        %v1891 = vtanh.pop %v1731
        %v1892 = vtanh.pop %v1732
        %v1893 = vtanh.pop %v1733
        %v1894 = vtanh.pop %v1734
        %v1895 = vmul.f32 %v1781, %v1311
        %v1896 = vmul.f32 %v1796, %v1312
        %v1897 = vmul.f32 %v1811, %v1313
        %v1898 = vmul.f32 %v1826, %v1314
        %v1899 = vmul.f32 %v1841, %v1315
        %v1900 = vmul.f32 %v1856, %v1316
        %v1901 = vmul.f32 %v1871, %v1317
        %v1902 = vmul.f32 %v1886, %v1318
        %v1911 = vrot.slane %v1887, 2
        %v1912 = vrot.slane %v1888, 2
        %v1913 = vrot.slane %v1889, 2
        %v1914 = vrot.slane %v1890, 2
        %v1915 = vrot.slane %v1891, 2
        %v1916 = vrot.slane %v1892, 2
        %v1917 = vrot.slane %v1893, 2
        %v1918 = vrot.slane %v1894, 2
        %v1927 = vmul.f32 %v1781, %v1911
        %v1928 = vmul.f32 %v1796, %v1912
        %v1929 = vmul.f32 %v1811, %v1913
        %v1930 = vmul.f32 %v1826, %v1914
        %v1931 = vmul.f32 %v1841, %v1915
        %v1932 = vmul.f32 %v1856, %v1916
        %v1933 = vmul.f32 %v1871, %v1917
        %v1934 = vmul.f32 %v1886, %v1918
        %v1943 = vrot.slane %v1927, 7
        %v1944 = vrot.slane %v1928, 7
        %v1945 = vrot.slane %v1929, 7
        %v1946 = vrot.slane %v1930, 7
        %v1947 = vrot.slane %v1931, 7
        %v1948 = vrot.slane %v1932, 7
        %v1949 = vrot.slane %v1933, 7
        %v1950 = vrot.slane %v1934, 7
        %v1959 = vadd.f32 %v1895, %v1943
        %v1960 = vadd.f32 %v1896, %v1944
        %v1961 = vadd.f32 %v1897, %v1945
        %v1962 = vadd.f32 %v1898, %v1946
        %v1963 = vadd.f32 %v1899, %v1947
        %v1964 = vadd.f32 %v1900, %v1948
        %v1965 = vadd.f32 %v1901, %v1949
        %v1966 = vadd.f32 %v1902, %v1950
        %v1967 = vtanh.pop %v1959
        %v1968 = vtanh.pop %v1960
        %v1969 = vtanh.pop %v1961
        %v1970 = vtanh.pop %v1962
        %v1971 = vtanh.pop %v1963
        %v1972 = vtanh.pop %v1964
        %v1973 = vtanh.pop %v1965
        %v1974 = vtanh.pop %v1966
        %v1983 = vrot.slane %v1967, 6
        %v1984 = vrot.slane %v1968, 6
        %v1985 = vrot.slane %v1969, 6
        %v1986 = vrot.slane %v1970, 6
        %v1987 = vrot.slane %v1971, 6
        %v1988 = vrot.slane %v1972, 6
        %v1989 = vrot.slane %v1973, 6
        %v1990 = vrot.slane %v1974, 6
        %v1999 = vmul.f32 %v1781, %v1983
        %v2000 = vmul.f32 %v1796, %v1984
        %v2001 = vmul.f32 %v1811, %v1985
        %v2002 = vmul.f32 %v1826, %v1986
        %v2003 = vmul.f32 %v1841, %v1987
        %v2004 = vmul.f32 %v1856, %v1988
        %v2005 = vmul.f32 %v1871, %v1989
        %v2006 = vmul.f32 %v1886, %v1990
        %v2007 = vperm.slane %v349, 5
        %v2008 = vperm.slane %v351, 5
        %v2009 = vperm.slane %v353, 5
        %v2010 = vperm.slane %v355, 5
        %v2011 = vperm.slane %v357, 5
        %v2012 = vperm.slane %v359, 5
        %v2013 = vperm.slane %v361, 5
        %v2014 = vperm.slane %v363, 5
        %v2015 = vmul.f32 %v2007, %v714
        %v2016 = vmul.f32 %v2008, %v714
        %v2017 = vmul.f32 %v2009, %v714
        %v2018 = vmul.f32 %v2010, %v714
        %v2019 = vmul.f32 %v2011, %v714
        %v2020 = vmul.f32 %v2012, %v714
        %v2021 = vmul.f32 %v2013, %v714
        %v2022 = vmul.f32 %v2014, %v714
        %v2023 = vperm.slane %v1679, 3
        %v2024 = vperm.slane %v1680, 3
        %v2025 = vperm.slane %v1681, 3
        %v2026 = vperm.slane %v1682, 3
        %v2027 = vperm.slane %v1683, 3
        %v2028 = vperm.slane %v1684, 3
        %v2029 = vperm.slane %v1685, 3
        %v2030 = vperm.slane %v1686, 3
        %v2031 = vmul.f32 %v2023, %v1389
        %v2032 = vmul.f32 %v2024, %v1389
        %v2033 = vmul.f32 %v2025, %v1389
        %v2034 = vmul.f32 %v2026, %v1389
        %v2035 = vmul.f32 %v2027, %v1389
        %v2036 = vmul.f32 %v2028, %v1389
        %v2037 = vmul.f32 %v2029, %v1389
        %v2038 = vmul.f32 %v2030, %v1389
        %v2039 = vadd.f32 %v2015, %v2031
        %v2040 = vadd.f32 %v2016, %v2032
        %v2041 = vadd.f32 %v2017, %v2033
        %v2042 = vadd.f32 %v2018, %v2034
        %v2043 = vadd.f32 %v2019, %v2035
        %v2044 = vadd.f32 %v2020, %v2036
        %v2045 = vadd.f32 %v2021, %v2037
        %v2046 = vadd.f32 %v2022, %v2038
        %v2047 = vadd.f32 %v2039, %v749
        %v2048 = vadd.f32 %v2040, %v749
        %v2049 = vadd.f32 %v2041, %v749
        %v2050 = vadd.f32 %v2042, %v749
        %v2051 = vadd.f32 %v2043, %v749
        %v2052 = vadd.f32 %v2044, %v749
        %v2053 = vadd.f32 %v2045, %v749
        %v2054 = vadd.f32 %v2046, %v749
        %v2055 = vsub.f32 0.0, %v2047
        %v2056 = vsub.f32 0.0, %v2048
        %v2057 = vsub.f32 0.0, %v2049
        %v2058 = vsub.f32 0.0, %v2050
        %v2059 = vsub.f32 0.0, %v2051
        %v2060 = vsub.f32 0.0, %v2052
        %v2061 = vsub.f32 0.0, %v2053
        %v2062 = vsub.f32 0.0, %v2054
        %v2063 = vmul.f32 %v2055, 1.442695
        %v2064 = vpow.pop %v2063
        %v2065 = vmul.f32 %v2056, 1.442695
        %v2066 = vpow.pop %v2065
        %v2067 = vmul.f32 %v2057, 1.442695
        %v2068 = vpow.pop %v2067
        %v2069 = vmul.f32 %v2058, 1.442695
        %v2070 = vpow.pop %v2069
        %v2071 = vmul.f32 %v2059, 1.442695
        %v2072 = vpow.pop %v2071
        %v2073 = vmul.f32 %v2060, 1.442695
        %v2074 = vpow.pop %v2073
        %v2075 = vmul.f32 %v2061, 1.442695
        %v2076 = vpow.pop %v2075
        %v2077 = vmul.f32 %v2062, 1.442695
        %v2078 = vpow.pop %v2077
        %v2079 = vadd.f32 %v2064, 1.0
        %v2080 = vadd.f32 %v2066, 1.0
        %v2081 = vadd.f32 %v2068, 1.0
        %v2082 = vadd.f32 %v2070, 1.0
        %v2083 = vadd.f32 %v2072, 1.0
        %v2084 = vadd.f32 %v2074, 1.0
        %v2085 = vadd.f32 %v2076, 1.0
        %v2086 = vadd.f32 %v2078, 1.0
        %v2087 = vrcp.pop %v2079
        %v2088 = vmul.f32 %v2079, %v2087
        %v2089 = vsub.f32 1.0, %v2088
        %v2090 = vmul.f32 %v2087, %v2089
        %v2091 = vadd.f32 %v2087, %v2090
        %vm2092 = vweird.f32 %v2079
        %vm2093 = vweird.f32 %v2087
        %vm2094 = vmor %vm2092, %vm2093
        %v2095 = vsel %vm2094, %v2087, %v2091
        %v2096 = vand.u32 2147483647, %v2079
        %vm2097 = vcmp.eq.f32.partialorder %v2096, 8.507059e+37
        %v2098 = vand.u32 %v2079, 2147483648
        %v2099 = vor.u32 1.1754944e-38, %v2098
        %v2100 = vsel %vm2097, %v2099, %v2095
        %v2101 = vmul.f32 1.0, %v2100
        %v2102 = vrcp.pop %v2080
        %v2103 = vmul.f32 %v2080, %v2102
        %v2104 = vsub.f32 1.0, %v2103
        %v2105 = vmul.f32 %v2102, %v2104
        %v2106 = vadd.f32 %v2102, %v2105
        %vm2107 = vweird.f32 %v2080
        %vm2108 = vweird.f32 %v2102
        %vm2109 = vmor %vm2107, %vm2108
        %v2110 = vsel %vm2109, %v2102, %v2106
        %v2111 = vand.u32 2147483647, %v2080
        %vm2112 = vcmp.eq.f32.partialorder %v2111, 8.507059e+37
        %v2113 = vand.u32 %v2080, 2147483648
        %v2114 = vor.u32 1.1754944e-38, %v2113
        %v2115 = vsel %vm2112, %v2114, %v2110
        %v2116 = vmul.f32 1.0, %v2115
        %v2117 = vrcp.pop %v2081
        %v2118 = vmul.f32 %v2081, %v2117
        %v2119 = vsub.f32 1.0, %v2118
        %v2120 = vmul.f32 %v2117, %v2119
        %v2121 = vadd.f32 %v2117, %v2120
        %vm2122 = vweird.f32 %v2081
        %vm2123 = vweird.f32 %v2117
        %vm2124 = vmor %vm2122, %vm2123
        %v2125 = vsel %vm2124, %v2117, %v2121
        %v2126 = vand.u32 2147483647, %v2081
        %vm2127 = vcmp.eq.f32.partialorder %v2126, 8.507059e+37
        %v2128 = vand.u32 %v2081, 2147483648
        %v2129 = vor.u32 1.1754944e-38, %v2128
        %v2130 = vsel %vm2127, %v2129, %v2125
        %v2131 = vmul.f32 1.0, %v2130
        %v2132 = vrcp.pop %v2082
        %v2133 = vmul.f32 %v2082, %v2132
        %v2134 = vsub.f32 1.0, %v2133
        %v2135 = vmul.f32 %v2132, %v2134
        %v2136 = vadd.f32 %v2132, %v2135
        %vm2137 = vweird.f32 %v2082
        %vm2138 = vweird.f32 %v2132
        %vm2139 = vmor %vm2137, %vm2138
        %v2140 = vsel %vm2139, %v2132, %v2136
        %v2141 = vand.u32 2147483647, %v2082
        %vm2142 = vcmp.eq.f32.partialorder %v2141, 8.507059e+37
        %v2143 = vand.u32 %v2082, 2147483648
        %v2144 = vor.u32 1.1754944e-38, %v2143
        %v2145 = vsel %vm2142, %v2144, %v2140
        %v2146 = vmul.f32 1.0, %v2145
        %v2147 = vrcp.pop %v2083
        %v2148 = vmul.f32 %v2083, %v2147
        %v2149 = vsub.f32 1.0, %v2148
        %v2150 = vmul.f32 %v2147, %v2149
        %v2151 = vadd.f32 %v2147, %v2150
        %vm2152 = vweird.f32 %v2083
        %vm2153 = vweird.f32 %v2147
        %vm2154 = vmor %vm2152, %vm2153
        %v2155 = vsel %vm2154, %v2147, %v2151
        %v2156 = vand.u32 2147483647, %v2083
        %vm2157 = vcmp.eq.f32.partialorder %v2156, 8.507059e+37
        %v2158 = vand.u32 %v2083, 2147483648
        %v2159 = vor.u32 1.1754944e-38, %v2158
        %v2160 = vsel %vm2157, %v2159, %v2155
        %v2161 = vmul.f32 1.0, %v2160
        %v2162 = vrcp.pop %v2084
        %v2163 = vmul.f32 %v2084, %v2162
        %v2164 = vsub.f32 1.0, %v2163
        %v2165 = vmul.f32 %v2162, %v2164
        %v2166 = vadd.f32 %v2162, %v2165
        %vm2167 = vweird.f32 %v2084
        %vm2168 = vweird.f32 %v2162
        %vm2169 = vmor %vm2167, %vm2168
        %v2170 = vsel %vm2169, %v2162, %v2166
        %v2171 = vand.u32 2147483647, %v2084
        %vm2172 = vcmp.eq.f32.partialorder %v2171, 8.507059e+37
        %v2173 = vand.u32 %v2084, 2147483648
        %v2174 = vor.u32 1.1754944e-38, %v2173
        %v2175 = vsel %vm2172, %v2174, %v2170
        %v2176 = vmul.f32 1.0, %v2175
        %v2177 = vrcp.pop %v2085
        %v2178 = vmul.f32 %v2085, %v2177
        %v2179 = vsub.f32 1.0, %v2178
        %v2180 = vmul.f32 %v2177, %v2179
        %v2181 = vadd.f32 %v2177, %v2180
        %vm2182 = vweird.f32 %v2085
        %vm2183 = vweird.f32 %v2177
        %vm2184 = vmor %vm2182, %vm2183
        %v2185 = vsel %vm2184, %v2177, %v2181
        %v2186 = vand.u32 2147483647, %v2085
        %vm2187 = vcmp.eq.f32.partialorder %v2186, 8.507059e+37
        %v2188 = vand.u32 %v2085, 2147483648
        %v2189 = vor.u32 1.1754944e-38, %v2188
        %v2190 = vsel %vm2187, %v2189, %v2185
        %v2191 = vmul.f32 1.0, %v2190
        %v2192 = vrcp.pop %v2086
        %v2193 = vmul.f32 %v2086, %v2192
        %v2194 = vsub.f32 1.0, %v2193
        %v2195 = vmul.f32 %v2192, %v2194
        %v2196 = vadd.f32 %v2192, %v2195
        %vm2197 = vweird.f32 %v2086
        %vm2198 = vweird.f32 %v2192
        %vm2199 = vmor %vm2197, %vm2198
        %v2200 = vsel %vm2199, %v2192, %v2196
        %v2201 = vand.u32 2147483647, %v2086
        %vm2202 = vcmp.eq.f32.partialorder %v2201, 8.507059e+37
        %v2203 = vand.u32 %v2086, 2147483648
        %v2204 = vor.u32 1.1754944e-38, %v2203
        %v2205 = vsel %vm2202, %v2204, %v2200
        %v2206 = vmul.f32 1.0, %v2205
        %v2207 = vtanh.pop %v2047
        %v2208 = vtanh.pop %v2048
        %v2209 = vtanh.pop %v2049
        %v2210 = vtanh.pop %v2050
        %v2211 = vtanh.pop %v2051
        %v2212 = vtanh.pop %v2052
        %v2213 = vtanh.pop %v2053
        %v2214 = vtanh.pop %v2054
        %v2215 = vmul.f32 %v2101, %v1639
        %v2216 = vmul.f32 %v2116, %v1640
        %v2217 = vmul.f32 %v2131, %v1641
        %v2218 = vmul.f32 %v2146, %v1642
        %v2219 = vmul.f32 %v2161, %v1643
        %v2220 = vmul.f32 %v2176, %v1644
        %v2221 = vmul.f32 %v2191, %v1645
        %v2222 = vmul.f32 %v2206, %v1646
        %v2231 = vrot.slane %v2207, 2
        %v2232 = vrot.slane %v2208, 2
        %v2233 = vrot.slane %v2209, 2
        %v2234 = vrot.slane %v2210, 2
        %v2235 = vrot.slane %v2211, 2
        %v2236 = vrot.slane %v2212, 2
        %v2237 = vrot.slane %v2213, 2
        %v2238 = vrot.slane %v2214, 2
        %v2247 = vmul.f32 %v2101, %v2231
        %v2248 = vmul.f32 %v2116, %v2232
        %v2249 = vmul.f32 %v2131, %v2233
        %v2250 = vmul.f32 %v2146, %v2234
        %v2251 = vmul.f32 %v2161, %v2235
        %v2252 = vmul.f32 %v2176, %v2236
        %v2253 = vmul.f32 %v2191, %v2237
        %v2254 = vmul.f32 %v2206, %v2238
        %v2263 = vrot.slane %v2247, 7
        %v2264 = vrot.slane %v2248, 7
        %v2265 = vrot.slane %v2249, 7
        %v2266 = vrot.slane %v2250, 7
        %v2267 = vrot.slane %v2251, 7
        %v2268 = vrot.slane %v2252, 7
        %v2269 = vrot.slane %v2253, 7
        %v2270 = vrot.slane %v2254, 7
        %v2279 = vadd.f32 %v2215, %v2263
        %v2280 = vadd.f32 %v2216, %v2264
        %v2281 = vadd.f32 %v2217, %v2265
        %v2282 = vadd.f32 %v2218, %v2266
        %v2283 = vadd.f32 %v2219, %v2267
        %v2284 = vadd.f32 %v2220, %v2268
        %v2285 = vadd.f32 %v2221, %v2269
        %v2286 = vadd.f32 %v2222, %v2270
        %v2287 = vtanh.pop %v2279
        %v2288 = vtanh.pop %v2280
        %v2289 = vtanh.pop %v2281
        %v2290 = vtanh.pop %v2282
        %v2291 = vtanh.pop %v2283
        %v2292 = vtanh.pop %v2284
        %v2293 = vtanh.pop %v2285
        %v2294 = vtanh.pop %v2286
        %v2303 = vrot.slane %v2287, 6
        %v2304 = vrot.slane %v2288, 6
        %v2305 = vrot.slane %v2289, 6
        %v2306 = vrot.slane %v2290, 6
        %v2307 = vrot.slane %v2291, 6
        %v2308 = vrot.slane %v2292, 6
        %v2309 = vrot.slane %v2293, 6
        %v2310 = vrot.slane %v2294, 6
        %v2319 = vmul.f32 %v2101, %v2303
        %v2320 = vmul.f32 %v2116, %v2304
        %v2321 = vmul.f32 %v2131, %v2305
        %v2322 = vmul.f32 %v2146, %v2306
        %v2323 = vmul.f32 %v2161, %v2307
        %v2324 = vmul.f32 %v2176, %v2308
        %v2325 = vmul.f32 %v2191, %v2309
        %v2326 = vmul.f32 %v2206, %v2310
        %v2327 = vperm.slane %v349, 3
        %v2328 = vperm.slane %v351, 3
        %v2329 = vperm.slane %v353, 3
        %v2330 = vperm.slane %v355, 3
        %v2331 = vperm.slane %v357, 3
        %v2332 = vperm.slane %v359, 3
        %v2333 = vperm.slane %v361, 3
        %v2334 = vperm.slane %v363, 3
        %v2335 = vmul.f32 %v2327, %v382
        %v2336 = vmul.f32 %v2328, %v382
        %v2337 = vmul.f32 %v2329, %v382
        %v2338 = vmul.f32 %v2330, %v382
        %v2339 = vmul.f32 %v2331, %v382
        %v2340 = vmul.f32 %v2332, %v382
        %v2341 = vmul.f32 %v2333, %v382
        %v2342 = vmul.f32 %v2334, %v382
        %v2343 = vperm.slane %v1999, 3
        %v2344 = vperm.slane %v2000, 3
        %v2345 = vperm.slane %v2001, 3
        %v2346 = vperm.slane %v2002, 3
        %v2347 = vperm.slane %v2003, 3
        %v2348 = vperm.slane %v2004, 3
        %v2349 = vperm.slane %v2005, 3
        %v2350 = vperm.slane %v2006, 3
        %v2351 = vmul.f32 %v2343, %v1061
        %v2352 = vmul.f32 %v2344, %v1061
        %v2353 = vmul.f32 %v2345, %v1061
        %v2354 = vmul.f32 %v2346, %v1061
        %v2355 = vmul.f32 %v2347, %v1061
        %v2356 = vmul.f32 %v2348, %v1061
        %v2357 = vmul.f32 %v2349, %v1061
        %v2358 = vmul.f32 %v2350, %v1061
        %v2359 = vadd.f32 %v2335, %v2351
        %v2360 = vadd.f32 %v2336, %v2352
        %v2361 = vadd.f32 %v2337, %v2353
        %v2362 = vadd.f32 %v2338, %v2354
        %v2363 = vadd.f32 %v2339, %v2355
        %v2364 = vadd.f32 %v2340, %v2356
        %v2365 = vadd.f32 %v2341, %v2357
        %v2366 = vadd.f32 %v2342, %v2358
        %v2367 = vadd.f32 %v2359, %v417
        %v2368 = vadd.f32 %v2360, %v417
        %v2369 = vadd.f32 %v2361, %v417
        %v2370 = vadd.f32 %v2362, %v417
        %v2371 = vadd.f32 %v2363, %v417
        %v2372 = vadd.f32 %v2364, %v417
        %v2373 = vadd.f32 %v2365, %v417
        %v2374 = vadd.f32 %v2366, %v417
        %v2375 = vsub.f32 0.0, %v2367
        %v2376 = vsub.f32 0.0, %v2368
        %v2377 = vsub.f32 0.0, %v2369
        %v2378 = vsub.f32 0.0, %v2370
        %v2379 = vsub.f32 0.0, %v2371
        %v2380 = vsub.f32 0.0, %v2372
        %v2381 = vsub.f32 0.0, %v2373
        %v2382 = vsub.f32 0.0, %v2374
        %v2383 = vmul.f32 %v2375, 1.442695
        %v2384 = vpow.pop %v2383
        %v2385 = vmul.f32 %v2376, 1.442695
        %v2386 = vpow.pop %v2385
        %v2387 = vmul.f32 %v2377, 1.442695
        %v2388 = vpow.pop %v2387
        %v2389 = vmul.f32 %v2378, 1.442695
        %v2390 = vpow.pop %v2389
        %v2391 = vmul.f32 %v2379, 1.442695
        %v2392 = vpow.pop %v2391
        %v2393 = vmul.f32 %v2380, 1.442695
        %v2394 = vpow.pop %v2393
        %v2395 = vmul.f32 %v2381, 1.442695
        %v2396 = vpow.pop %v2395
        %v2397 = vmul.f32 %v2382, 1.442695
        %v2398 = vpow.pop %v2397
        %v2399 = vadd.f32 %v2384, 1.0
        %v2400 = vadd.f32 %v2386, 1.0
        %v2401 = vadd.f32 %v2388, 1.0
        %v2402 = vadd.f32 %v2390, 1.0
        %v2403 = vadd.f32 %v2392, 1.0
        %v2404 = vadd.f32 %v2394, 1.0
        %v2405 = vadd.f32 %v2396, 1.0
        %v2406 = vadd.f32 %v2398, 1.0
        %v2407 = vrcp.pop %v2399
        %v2408 = vmul.f32 %v2399, %v2407
        %v2409 = vsub.f32 1.0, %v2408
        %v2410 = vmul.f32 %v2407, %v2409
        %v2411 = vadd.f32 %v2407, %v2410
        %vm2412 = vweird.f32 %v2399
        %vm2413 = vweird.f32 %v2407
        %vm2414 = vmor %vm2412, %vm2413
        %v2415 = vsel %vm2414, %v2407, %v2411
        %v2416 = vand.u32 2147483647, %v2399
        %vm2417 = vcmp.eq.f32.partialorder %v2416, 8.507059e+37
        %v2418 = vand.u32 %v2399, 2147483648
        %v2419 = vor.u32 1.1754944e-38, %v2418
        %v2420 = vsel %vm2417, %v2419, %v2415
        %v2421 = vmul.f32 1.0, %v2420
        %v2422 = vrcp.pop %v2400
        %v2423 = vmul.f32 %v2400, %v2422
        %v2424 = vsub.f32 1.0, %v2423
        %v2425 = vmul.f32 %v2422, %v2424
        %v2426 = vadd.f32 %v2422, %v2425
        %vm2427 = vweird.f32 %v2400
        %vm2428 = vweird.f32 %v2422
        %vm2429 = vmor %vm2427, %vm2428
        %v2430 = vsel %vm2429, %v2422, %v2426
        %v2431 = vand.u32 2147483647, %v2400
        %vm2432 = vcmp.eq.f32.partialorder %v2431, 8.507059e+37
        %v2433 = vand.u32 %v2400, 2147483648
        %v2434 = vor.u32 1.1754944e-38, %v2433
        %v2435 = vsel %vm2432, %v2434, %v2430
        %v2436 = vmul.f32 1.0, %v2435
        %v2437 = vrcp.pop %v2401
        %v2438 = vmul.f32 %v2401, %v2437
        %v2439 = vsub.f32 1.0, %v2438
        %v2440 = vmul.f32 %v2437, %v2439
        %v2441 = vadd.f32 %v2437, %v2440
        %vm2442 = vweird.f32 %v2401
        %vm2443 = vweird.f32 %v2437
        %vm2444 = vmor %vm2442, %vm2443
        %v2445 = vsel %vm2444, %v2437, %v2441
        %v2446 = vand.u32 2147483647, %v2401
        %vm2447 = vcmp.eq.f32.partialorder %v2446, 8.507059e+37
        %v2448 = vand.u32 %v2401, 2147483648
        %v2449 = vor.u32 1.1754944e-38, %v2448
        %v2450 = vsel %vm2447, %v2449, %v2445
        %v2451 = vmul.f32 1.0, %v2450
        %v2452 = vrcp.pop %v2402
        %v2453 = vmul.f32 %v2402, %v2452
        %v2454 = vsub.f32 1.0, %v2453
        %v2455 = vmul.f32 %v2452, %v2454
        %v2456 = vadd.f32 %v2452, %v2455
        %vm2457 = vweird.f32 %v2402
        %vm2458 = vweird.f32 %v2452
        %vm2459 = vmor %vm2457, %vm2458
        %v2460 = vsel %vm2459, %v2452, %v2456
        %v2461 = vand.u32 2147483647, %v2402
        %vm2462 = vcmp.eq.f32.partialorder %v2461, 8.507059e+37
        %v2463 = vand.u32 %v2402, 2147483648
        %v2464 = vor.u32 1.1754944e-38, %v2463
        %v2465 = vsel %vm2462, %v2464, %v2460
        %v2466 = vmul.f32 1.0, %v2465
        %v2467 = vrcp.pop %v2403
        %v2468 = vmul.f32 %v2403, %v2467
        %v2469 = vsub.f32 1.0, %v2468
        %v2470 = vmul.f32 %v2467, %v2469
        %v2471 = vadd.f32 %v2467, %v2470
        %vm2472 = vweird.f32 %v2403
        %vm2473 = vweird.f32 %v2467
        %vm2474 = vmor %vm2472, %vm2473
        %v2475 = vsel %vm2474, %v2467, %v2471
        %v2476 = vand.u32 2147483647, %v2403
        %vm2477 = vcmp.eq.f32.partialorder %v2476, 8.507059e+37
        %v2478 = vand.u32 %v2403, 2147483648
        %v2479 = vor.u32 1.1754944e-38, %v2478
        %v2480 = vsel %vm2477, %v2479, %v2475
        %v2481 = vmul.f32 1.0, %v2480
        %v2482 = vrcp.pop %v2404
        %v2483 = vmul.f32 %v2404, %v2482
        %v2484 = vsub.f32 1.0, %v2483
        %v2485 = vmul.f32 %v2482, %v2484
        %v2486 = vadd.f32 %v2482, %v2485
        %vm2487 = vweird.f32 %v2404
        %vm2488 = vweird.f32 %v2482
        %vm2489 = vmor %vm2487, %vm2488
        %v2490 = vsel %vm2489, %v2482, %v2486
        %v2491 = vand.u32 2147483647, %v2404
        %vm2492 = vcmp.eq.f32.partialorder %v2491, 8.507059e+37
        %v2493 = vand.u32 %v2404, 2147483648
        %v2494 = vor.u32 1.1754944e-38, %v2493
        %v2495 = vsel %vm2492, %v2494, %v2490
        %v2496 = vmul.f32 1.0, %v2495
        %v2497 = vrcp.pop %v2405
        %v2498 = vmul.f32 %v2405, %v2497
        %v2499 = vsub.f32 1.0, %v2498
        %v2500 = vmul.f32 %v2497, %v2499
        %v2501 = vadd.f32 %v2497, %v2500
        %vm2502 = vweird.f32 %v2405
        %vm2503 = vweird.f32 %v2497
        %vm2504 = vmor %vm2502, %vm2503
        %v2505 = vsel %vm2504, %v2497, %v2501
        %v2506 = vand.u32 2147483647, %v2405
        %vm2507 = vcmp.eq.f32.partialorder %v2506, 8.507059e+37
        %v2508 = vand.u32 %v2405, 2147483648
        %v2509 = vor.u32 1.1754944e-38, %v2508
        %v2510 = vsel %vm2507, %v2509, %v2505
        %v2511 = vmul.f32 1.0, %v2510
        %v2512 = vrcp.pop %v2406
        %v2513 = vmul.f32 %v2406, %v2512
        %v2514 = vsub.f32 1.0, %v2513
        %v2515 = vmul.f32 %v2512, %v2514
        %v2516 = vadd.f32 %v2512, %v2515
        %vm2517 = vweird.f32 %v2406
        %vm2518 = vweird.f32 %v2512
        %vm2519 = vmor %vm2517, %vm2518
        %v2520 = vsel %vm2519, %v2512, %v2516
        %v2521 = vand.u32 2147483647, %v2406
        %vm2522 = vcmp.eq.f32.partialorder %v2521, 8.507059e+37
        %v2523 = vand.u32 %v2406, 2147483648
        %v2524 = vor.u32 1.1754944e-38, %v2523
        %v2525 = vsel %vm2522, %v2524, %v2520
        %v2526 = vmul.f32 1.0, %v2525
        %v2527 = vtanh.pop %v2367
        %v2528 = vtanh.pop %v2368
        %v2529 = vtanh.pop %v2369
        %v2530 = vtanh.pop %v2370
        %v2531 = vtanh.pop %v2371
        %v2532 = vtanh.pop %v2372
        %v2533 = vtanh.pop %v2373
        %v2534 = vtanh.pop %v2374
        %v2535 = vmul.f32 %v2421, %v1959
        %v2536 = vmul.f32 %v2436, %v1960
        %v2537 = vmul.f32 %v2451, %v1961
        %v2538 = vmul.f32 %v2466, %v1962
        %v2539 = vmul.f32 %v2481, %v1963
        %v2540 = vmul.f32 %v2496, %v1964
        %v2541 = vmul.f32 %v2511, %v1965
        %v2542 = vmul.f32 %v2526, %v1966
        %v2551 = vrot.slane %v2527, 2
        %v2552 = vrot.slane %v2528, 2
        %v2553 = vrot.slane %v2529, 2
        %v2554 = vrot.slane %v2530, 2
        %v2555 = vrot.slane %v2531, 2
        %v2556 = vrot.slane %v2532, 2
        %v2557 = vrot.slane %v2533, 2
        %v2558 = vrot.slane %v2534, 2
        %v2567 = vmul.f32 %v2421, %v2551
        %v2568 = vmul.f32 %v2436, %v2552
        %v2569 = vmul.f32 %v2451, %v2553
        %v2570 = vmul.f32 %v2466, %v2554
        %v2571 = vmul.f32 %v2481, %v2555
        %v2572 = vmul.f32 %v2496, %v2556
        %v2573 = vmul.f32 %v2511, %v2557
        %v2574 = vmul.f32 %v2526, %v2558
        %v2583 = vrot.slane %v2567, 7
        %v2584 = vrot.slane %v2568, 7
        %v2585 = vrot.slane %v2569, 7
        %v2586 = vrot.slane %v2570, 7
        %v2587 = vrot.slane %v2571, 7
        %v2588 = vrot.slane %v2572, 7
        %v2589 = vrot.slane %v2573, 7
        %v2590 = vrot.slane %v2574, 7
        %v2599 = vadd.f32 %v2535, %v2583
        %v2600 = vadd.f32 %v2536, %v2584
        %v2601 = vadd.f32 %v2537, %v2585
        %v2602 = vadd.f32 %v2538, %v2586
        %v2603 = vadd.f32 %v2539, %v2587
        %v2604 = vadd.f32 %v2540, %v2588
        %v2605 = vadd.f32 %v2541, %v2589
        %v2606 = vadd.f32 %v2542, %v2590
        %v2607 = vtanh.pop %v2599
        %v2608 = vtanh.pop %v2600
        %v2609 = vtanh.pop %v2601
        %v2610 = vtanh.pop %v2602
        %v2611 = vtanh.pop %v2603
        %v2612 = vtanh.pop %v2604
        %v2613 = vtanh.pop %v2605
        %v2614 = vtanh.pop %v2606
        %v2623 = vrot.slane %v2607, 6
        %v2624 = vrot.slane %v2608, 6
        %v2625 = vrot.slane %v2609, 6
        %v2626 = vrot.slane %v2610, 6
        %v2627 = vrot.slane %v2611, 6
        %v2628 = vrot.slane %v2612, 6
        %v2629 = vrot.slane %v2613, 6
        %v2630 = vrot.slane %v2614, 6
        %v2639 = vmul.f32 %v2421, %v2623
        %v2640 = vmul.f32 %v2436, %v2624
        %v2641 = vmul.f32 %v2451, %v2625
        %v2642 = vmul.f32 %v2466, %v2626
        %v2643 = vmul.f32 %v2481, %v2627
        %v2644 = vmul.f32 %v2496, %v2628
        %v2645 = vmul.f32 %v2511, %v2629
        %v2646 = vmul.f32 %v2526, %v2630
        %v2647 = vperm.slane %v349, 4
        %v2648 = vperm.slane %v351, 4
        %v2649 = vperm.slane %v353, 4
        %v2650 = vperm.slane %v355, 4
        %v2651 = vperm.slane %v357, 4
        %v2652 = vperm.slane %v359, 4
        %v2653 = vperm.slane %v361, 4
        %v2654 = vperm.slane %v363, 4
        %v2655 = vmul.f32 %v2647, %v714
        %v2656 = vmul.f32 %v2648, %v714
        %v2657 = vmul.f32 %v2649, %v714
        %v2658 = vmul.f32 %v2650, %v714
        %v2659 = vmul.f32 %v2651, %v714
        %v2660 = vmul.f32 %v2652, %v714
        %v2661 = vmul.f32 %v2653, %v714
        %v2662 = vmul.f32 %v2654, %v714
        %v2663 = vperm.slane %v2319, 3
        %v2664 = vperm.slane %v2320, 3
        %v2665 = vperm.slane %v2321, 3
        %v2666 = vperm.slane %v2322, 3
        %v2667 = vperm.slane %v2323, 3
        %v2668 = vperm.slane %v2324, 3
        %v2669 = vperm.slane %v2325, 3
        %v2670 = vperm.slane %v2326, 3
        %v2671 = vmul.f32 %v2663, %v1389
        %v2672 = vmul.f32 %v2664, %v1389
        %v2673 = vmul.f32 %v2665, %v1389
        %v2674 = vmul.f32 %v2666, %v1389
        %v2675 = vmul.f32 %v2667, %v1389
        %v2676 = vmul.f32 %v2668, %v1389
        %v2677 = vmul.f32 %v2669, %v1389
        %v2678 = vmul.f32 %v2670, %v1389
        %v2679 = vadd.f32 %v2655, %v2671
        %v2680 = vadd.f32 %v2656, %v2672
        %v2681 = vadd.f32 %v2657, %v2673
        %v2682 = vadd.f32 %v2658, %v2674
        %v2683 = vadd.f32 %v2659, %v2675
        %v2684 = vadd.f32 %v2660, %v2676
        %v2685 = vadd.f32 %v2661, %v2677
        %v2686 = vadd.f32 %v2662, %v2678
        %v2687 = vadd.f32 %v2679, %v749
        %v2688 = vadd.f32 %v2680, %v749
        %v2689 = vadd.f32 %v2681, %v749
        %v2690 = vadd.f32 %v2682, %v749
        %v2691 = vadd.f32 %v2683, %v749
        %v2692 = vadd.f32 %v2684, %v749
        %v2693 = vadd.f32 %v2685, %v749
        %v2694 = vadd.f32 %v2686, %v749
        %v2695 = vsub.f32 0.0, %v2687
        %v2696 = vsub.f32 0.0, %v2688
        %v2697 = vsub.f32 0.0, %v2689
        %v2698 = vsub.f32 0.0, %v2690
        %v2699 = vsub.f32 0.0, %v2691
        %v2700 = vsub.f32 0.0, %v2692
        %v2701 = vsub.f32 0.0, %v2693
        %v2702 = vsub.f32 0.0, %v2694
        %v2703 = vmul.f32 %v2695, 1.442695
        %v2704 = vpow.pop %v2703
        %v2705 = vmul.f32 %v2696, 1.442695
        %v2706 = vpow.pop %v2705
        %v2707 = vmul.f32 %v2697, 1.442695
        %v2708 = vpow.pop %v2707
        %v2709 = vmul.f32 %v2698, 1.442695
        %v2710 = vpow.pop %v2709
        %v2711 = vmul.f32 %v2699, 1.442695
        %v2712 = vpow.pop %v2711
        %v2713 = vmul.f32 %v2700, 1.442695
        %v2714 = vpow.pop %v2713
        %v2715 = vmul.f32 %v2701, 1.442695
        %v2716 = vpow.pop %v2715
        %v2717 = vmul.f32 %v2702, 1.442695
        %v2718 = vpow.pop %v2717
        %v2719 = vadd.f32 %v2704, 1.0
        %v2720 = vadd.f32 %v2706, 1.0
        %v2721 = vadd.f32 %v2708, 1.0
        %v2722 = vadd.f32 %v2710, 1.0
        %v2723 = vadd.f32 %v2712, 1.0
        %v2724 = vadd.f32 %v2714, 1.0
        %v2725 = vadd.f32 %v2716, 1.0
        %v2726 = vadd.f32 %v2718, 1.0
        %v2727 = vrcp.pop %v2719
        %v2728 = vmul.f32 %v2719, %v2727
        %v2729 = vsub.f32 1.0, %v2728
        %v2730 = vmul.f32 %v2727, %v2729
        %v2731 = vadd.f32 %v2727, %v2730
        %vm2732 = vweird.f32 %v2719
        %vm2733 = vweird.f32 %v2727
        %vm2734 = vmor %vm2732, %vm2733
        %v2735 = vsel %vm2734, %v2727, %v2731
        %v2736 = vand.u32 2147483647, %v2719
        %vm2737 = vcmp.eq.f32.partialorder %v2736, 8.507059e+37
        %v2738 = vand.u32 %v2719, 2147483648
        %v2739 = vor.u32 1.1754944e-38, %v2738
        %v2740 = vsel %vm2737, %v2739, %v2735
        %v2741 = vmul.f32 1.0, %v2740
        %v2742 = vrcp.pop %v2720
        %v2743 = vmul.f32 %v2720, %v2742
        %v2744 = vsub.f32 1.0, %v2743
        %v2745 = vmul.f32 %v2742, %v2744
        %v2746 = vadd.f32 %v2742, %v2745
        %vm2747 = vweird.f32 %v2720
        %vm2748 = vweird.f32 %v2742
        %vm2749 = vmor %vm2747, %vm2748
        %v2750 = vsel %vm2749, %v2742, %v2746
        %v2751 = vand.u32 2147483647, %v2720
        %vm2752 = vcmp.eq.f32.partialorder %v2751, 8.507059e+37
        %v2753 = vand.u32 %v2720, 2147483648
        %v2754 = vor.u32 1.1754944e-38, %v2753
        %v2755 = vsel %vm2752, %v2754, %v2750
        %v2756 = vmul.f32 1.0, %v2755
        %v2757 = vrcp.pop %v2721
        %v2758 = vmul.f32 %v2721, %v2757
        %v2759 = vsub.f32 1.0, %v2758
        %v2760 = vmul.f32 %v2757, %v2759
        %v2761 = vadd.f32 %v2757, %v2760
        %vm2762 = vweird.f32 %v2721
        %vm2763 = vweird.f32 %v2757
        %vm2764 = vmor %vm2762, %vm2763
        %v2765 = vsel %vm2764, %v2757, %v2761
        %v2766 = vand.u32 2147483647, %v2721
        %vm2767 = vcmp.eq.f32.partialorder %v2766, 8.507059e+37
        %v2768 = vand.u32 %v2721, 2147483648
        %v2769 = vor.u32 1.1754944e-38, %v2768
        %v2770 = vsel %vm2767, %v2769, %v2765
        %v2771 = vmul.f32 1.0, %v2770
        %v2772 = vrcp.pop %v2722
        %v2773 = vmul.f32 %v2722, %v2772
        %v2774 = vsub.f32 1.0, %v2773
        %v2775 = vmul.f32 %v2772, %v2774
        %v2776 = vadd.f32 %v2772, %v2775
        %vm2777 = vweird.f32 %v2722
        %vm2778 = vweird.f32 %v2772
        %vm2779 = vmor %vm2777, %vm2778
        %v2780 = vsel %vm2779, %v2772, %v2776
        %v2781 = vand.u32 2147483647, %v2722
        %vm2782 = vcmp.eq.f32.partialorder %v2781, 8.507059e+37
        %v2783 = vand.u32 %v2722, 2147483648
        %v2784 = vor.u32 1.1754944e-38, %v2783
        %v2785 = vsel %vm2782, %v2784, %v2780
        %v2786 = vmul.f32 1.0, %v2785
        %v2787 = vrcp.pop %v2723
        %v2788 = vmul.f32 %v2723, %v2787
        %v2789 = vsub.f32 1.0, %v2788
        %v2790 = vmul.f32 %v2787, %v2789
        %v2791 = vadd.f32 %v2787, %v2790
        %vm2792 = vweird.f32 %v2723
        %vm2793 = vweird.f32 %v2787
        %vm2794 = vmor %vm2792, %vm2793
        %v2795 = vsel %vm2794, %v2787, %v2791
        %v2796 = vand.u32 2147483647, %v2723
        %vm2797 = vcmp.eq.f32.partialorder %v2796, 8.507059e+37
        %v2798 = vand.u32 %v2723, 2147483648
        %v2799 = vor.u32 1.1754944e-38, %v2798
        %v2800 = vsel %vm2797, %v2799, %v2795
        %v2801 = vmul.f32 1.0, %v2800
        %v2802 = vrcp.pop %v2724
        %v2803 = vmul.f32 %v2724, %v2802
        %v2804 = vsub.f32 1.0, %v2803
        %v2805 = vmul.f32 %v2802, %v2804
        %v2806 = vadd.f32 %v2802, %v2805
        %vm2807 = vweird.f32 %v2724
        %vm2808 = vweird.f32 %v2802
        %vm2809 = vmor %vm2807, %vm2808
        %v2810 = vsel %vm2809, %v2802, %v2806
        %v2811 = vand.u32 2147483647, %v2724
        %vm2812 = vcmp.eq.f32.partialorder %v2811, 8.507059e+37
        %v2813 = vand.u32 %v2724, 2147483648
        %v2814 = vor.u32 1.1754944e-38, %v2813
        %v2815 = vsel %vm2812, %v2814, %v2810
        %v2816 = vmul.f32 1.0, %v2815
        %v2817 = vrcp.pop %v2725
        %v2818 = vmul.f32 %v2725, %v2817
        %v2819 = vsub.f32 1.0, %v2818
        %v2820 = vmul.f32 %v2817, %v2819
        %v2821 = vadd.f32 %v2817, %v2820
        %vm2822 = vweird.f32 %v2725
        %vm2823 = vweird.f32 %v2817
        %vm2824 = vmor %vm2822, %vm2823
        %v2825 = vsel %vm2824, %v2817, %v2821
        %v2826 = vand.u32 2147483647, %v2725
        %vm2827 = vcmp.eq.f32.partialorder %v2826, 8.507059e+37
        %v2828 = vand.u32 %v2725, 2147483648
        %v2829 = vor.u32 1.1754944e-38, %v2828
        %v2830 = vsel %vm2827, %v2829, %v2825
        %v2831 = vmul.f32 1.0, %v2830
        %v2832 = vrcp.pop %v2726
        %v2833 = vmul.f32 %v2726, %v2832
        %v2834 = vsub.f32 1.0, %v2833
        %v2835 = vmul.f32 %v2832, %v2834
        %v2836 = vadd.f32 %v2832, %v2835
        %vm2837 = vweird.f32 %v2726
        %vm2838 = vweird.f32 %v2832
        %vm2839 = vmor %vm2837, %vm2838
        %v2840 = vsel %vm2839, %v2832, %v2836
        %v2841 = vand.u32 2147483647, %v2726
        %vm2842 = vcmp.eq.f32.partialorder %v2841, 8.507059e+37
        %v2843 = vand.u32 %v2726, 2147483648
        %v2844 = vor.u32 1.1754944e-38, %v2843
        %v2845 = vsel %vm2842, %v2844, %v2840
        %v2846 = vmul.f32 1.0, %v2845
        %v2847 = vtanh.pop %v2687
        %v2848 = vtanh.pop %v2688
        %v2849 = vtanh.pop %v2689
        %v2850 = vtanh.pop %v2690
        %v2851 = vtanh.pop %v2691
        %v2852 = vtanh.pop %v2692
        %v2853 = vtanh.pop %v2693
        %v2854 = vtanh.pop %v2694
        %v2855 = vmul.f32 %v2741, %v2279
        %v2856 = vmul.f32 %v2756, %v2280
        %v2857 = vmul.f32 %v2771, %v2281
        %v2858 = vmul.f32 %v2786, %v2282
        %v2859 = vmul.f32 %v2801, %v2283
        %v2860 = vmul.f32 %v2816, %v2284
        %v2861 = vmul.f32 %v2831, %v2285
        %v2862 = vmul.f32 %v2846, %v2286
        %v2871 = vrot.slane %v2847, 2
        %v2872 = vrot.slane %v2848, 2
        %v2873 = vrot.slane %v2849, 2
        %v2874 = vrot.slane %v2850, 2
        %v2875 = vrot.slane %v2851, 2
        %v2876 = vrot.slane %v2852, 2
        %v2877 = vrot.slane %v2853, 2
        %v2878 = vrot.slane %v2854, 2
        %v2887 = vmul.f32 %v2741, %v2871
        %v2888 = vmul.f32 %v2756, %v2872
        %v2889 = vmul.f32 %v2771, %v2873
        %v2890 = vmul.f32 %v2786, %v2874
        %v2891 = vmul.f32 %v2801, %v2875
        %v2892 = vmul.f32 %v2816, %v2876
        %v2893 = vmul.f32 %v2831, %v2877
        %v2894 = vmul.f32 %v2846, %v2878
        %v2903 = vrot.slane %v2887, 7
        %v2904 = vrot.slane %v2888, 7
        %v2905 = vrot.slane %v2889, 7
        %v2906 = vrot.slane %v2890, 7
        %v2907 = vrot.slane %v2891, 7
        %v2908 = vrot.slane %v2892, 7
        %v2909 = vrot.slane %v2893, 7
        %v2910 = vrot.slane %v2894, 7
        %v2919 = vadd.f32 %v2855, %v2903
        %v2920 = vadd.f32 %v2856, %v2904
        %v2921 = vadd.f32 %v2857, %v2905
        %v2922 = vadd.f32 %v2858, %v2906
        %v2923 = vadd.f32 %v2859, %v2907
        %v2924 = vadd.f32 %v2860, %v2908
        %v2925 = vadd.f32 %v2861, %v2909
        %v2926 = vadd.f32 %v2862, %v2910
        %v2927 = vtanh.pop %v2919
        %v2928 = vtanh.pop %v2920
        %v2929 = vtanh.pop %v2921
        %v2930 = vtanh.pop %v2922
        %v2931 = vtanh.pop %v2923
        %v2932 = vtanh.pop %v2924
        %v2933 = vtanh.pop %v2925
        %v2934 = vtanh.pop %v2926
        %v2943 = vrot.slane %v2927, 6
        %v2944 = vrot.slane %v2928, 6
        %v2945 = vrot.slane %v2929, 6
        %v2946 = vrot.slane %v2930, 6
        %v2947 = vrot.slane %v2931, 6
        %v2948 = vrot.slane %v2932, 6
        %v2949 = vrot.slane %v2933, 6
        %v2950 = vrot.slane %v2934, 6
        %v2959 = vmul.f32 %v2741, %v2943
        %v2960 = vmul.f32 %v2756, %v2944
        %v2961 = vmul.f32 %v2771, %v2945
        %v2962 = vmul.f32 %v2786, %v2946
        %v2963 = vmul.f32 %v2801, %v2947
        %v2964 = vmul.f32 %v2816, %v2948
        %v2965 = vmul.f32 %v2831, %v2949
        %v2966 = vmul.f32 %v2846, %v2950
        %v2967 = vmul.f32 %v2647, %v382
        %v2968 = vmul.f32 %v2648, %v382
        %v2969 = vmul.f32 %v2649, %v382
        %v2970 = vmul.f32 %v2650, %v382
        %v2971 = vmul.f32 %v2651, %v382
        %v2972 = vmul.f32 %v2652, %v382
        %v2973 = vmul.f32 %v2653, %v382
        %v2974 = vmul.f32 %v2654, %v382
        %v2975 = vperm.slane %v2639, 3
        %v2976 = vperm.slane %v2640, 3
        %v2977 = vperm.slane %v2641, 3
        %v2978 = vperm.slane %v2642, 3
        %v2979 = vperm.slane %v2643, 3
        %v2980 = vperm.slane %v2644, 3
        %v2981 = vperm.slane %v2645, 3
        %v2982 = vperm.slane %v2646, 3
        %v2983 = vmul.f32 %v2975, %v1061
        %v2984 = vmul.f32 %v2976, %v1061
        %v2985 = vmul.f32 %v2977, %v1061
        %v2986 = vmul.f32 %v2978, %v1061
        %v2987 = vmul.f32 %v2979, %v1061
        %v2988 = vmul.f32 %v2980, %v1061
        %v2989 = vmul.f32 %v2981, %v1061
        %v2990 = vmul.f32 %v2982, %v1061
        %v2991 = vadd.f32 %v2967, %v2983
        %v2992 = vadd.f32 %v2968, %v2984
        %v2993 = vadd.f32 %v2969, %v2985
        %v2994 = vadd.f32 %v2970, %v2986
        %v2995 = vadd.f32 %v2971, %v2987
        %v2996 = vadd.f32 %v2972, %v2988
        %v2997 = vadd.f32 %v2973, %v2989
        %v2998 = vadd.f32 %v2974, %v2990
        %v2999 = vadd.f32 %v2991, %v417
        %v3000 = vadd.f32 %v2992, %v417
        %v3001 = vadd.f32 %v2993, %v417
        %v3002 = vadd.f32 %v2994, %v417
        %v3003 = vadd.f32 %v2995, %v417
        %v3004 = vadd.f32 %v2996, %v417
        %v3005 = vadd.f32 %v2997, %v417
        %v3006 = vadd.f32 %v2998, %v417
        %v3007 = vsub.f32 0.0, %v2999
        %v3008 = vsub.f32 0.0, %v3000
        %v3009 = vsub.f32 0.0, %v3001
        %v3010 = vsub.f32 0.0, %v3002
        %v3011 = vsub.f32 0.0, %v3003
        %v3012 = vsub.f32 0.0, %v3004
        %v3013 = vsub.f32 0.0, %v3005
        %v3014 = vsub.f32 0.0, %v3006
        %v3015 = vmul.f32 %v3007, 1.442695
        %v3016 = vpow.pop %v3015
        %v3017 = vmul.f32 %v3008, 1.442695
        %v3018 = vpow.pop %v3017
        %v3019 = vmul.f32 %v3009, 1.442695
        %v3020 = vpow.pop %v3019
        %v3021 = vmul.f32 %v3010, 1.442695
        %v3022 = vpow.pop %v3021
        %v3023 = vmul.f32 %v3011, 1.442695
        %v3024 = vpow.pop %v3023
        %v3025 = vmul.f32 %v3012, 1.442695
        %v3026 = vpow.pop %v3025
        %v3027 = vmul.f32 %v3013, 1.442695
        %v3028 = vpow.pop %v3027
        %v3029 = vmul.f32 %v3014, 1.442695
        %v3030 = vpow.pop %v3029
        %v3031 = vadd.f32 %v3016, 1.0
        %v3032 = vadd.f32 %v3018, 1.0
        %v3033 = vadd.f32 %v3020, 1.0
        %v3034 = vadd.f32 %v3022, 1.0
        %v3035 = vadd.f32 %v3024, 1.0
        %v3036 = vadd.f32 %v3026, 1.0
        %v3037 = vadd.f32 %v3028, 1.0
        %v3038 = vadd.f32 %v3030, 1.0
        %v3039 = vrcp.pop %v3031
        %v3040 = vmul.f32 %v3031, %v3039
        %v3041 = vsub.f32 1.0, %v3040
        %v3042 = vmul.f32 %v3039, %v3041
        %v3043 = vadd.f32 %v3039, %v3042
        %vm3044 = vweird.f32 %v3031
        %vm3045 = vweird.f32 %v3039
        %vm3046 = vmor %vm3044, %vm3045
        %v3047 = vsel %vm3046, %v3039, %v3043
        %v3048 = vand.u32 2147483647, %v3031
        %vm3049 = vcmp.eq.f32.partialorder %v3048, 8.507059e+37
        %v3050 = vand.u32 %v3031, 2147483648
        %v3051 = vor.u32 1.1754944e-38, %v3050
        %v3052 = vsel %vm3049, %v3051, %v3047
        %v3053 = vmul.f32 1.0, %v3052
        %v3054 = vrcp.pop %v3032
        %v3055 = vmul.f32 %v3032, %v3054
        %v3056 = vsub.f32 1.0, %v3055
        %v3057 = vmul.f32 %v3054, %v3056
        %v3058 = vadd.f32 %v3054, %v3057
        %vm3059 = vweird.f32 %v3032
        %vm3060 = vweird.f32 %v3054
        %vm3061 = vmor %vm3059, %vm3060
        %v3062 = vsel %vm3061, %v3054, %v3058
        %v3063 = vand.u32 2147483647, %v3032
        %vm3064 = vcmp.eq.f32.partialorder %v3063, 8.507059e+37
        %v3065 = vand.u32 %v3032, 2147483648
        %v3066 = vor.u32 1.1754944e-38, %v3065
        %v3067 = vsel %vm3064, %v3066, %v3062
        %v3068 = vmul.f32 1.0, %v3067
        %v3069 = vrcp.pop %v3033
        %v3070 = vmul.f32 %v3033, %v3069
        %v3071 = vsub.f32 1.0, %v3070
        %v3072 = vmul.f32 %v3069, %v3071
        %v3073 = vadd.f32 %v3069, %v3072
        %vm3074 = vweird.f32 %v3033
        %vm3075 = vweird.f32 %v3069
        %vm3076 = vmor %vm3074, %vm3075
        %v3077 = vsel %vm3076, %v3069, %v3073
        %v3078 = vand.u32 2147483647, %v3033
        %vm3079 = vcmp.eq.f32.partialorder %v3078, 8.507059e+37
        %v3080 = vand.u32 %v3033, 2147483648
        %v3081 = vor.u32 1.1754944e-38, %v3080
        %v3082 = vsel %vm3079, %v3081, %v3077
        %v3083 = vmul.f32 1.0, %v3082
        %v3084 = vrcp.pop %v3034
        %v3085 = vmul.f32 %v3034, %v3084
        %v3086 = vsub.f32 1.0, %v3085
        %v3087 = vmul.f32 %v3084, %v3086
        %v3088 = vadd.f32 %v3084, %v3087
        %vm3089 = vweird.f32 %v3034
        %vm3090 = vweird.f32 %v3084
        %vm3091 = vmor %vm3089, %vm3090
        %v3092 = vsel %vm3091, %v3084, %v3088
        %v3093 = vand.u32 2147483647, %v3034
        %vm3094 = vcmp.eq.f32.partialorder %v3093, 8.507059e+37
        %v3095 = vand.u32 %v3034, 2147483648
        %v3096 = vor.u32 1.1754944e-38, %v3095
        %v3097 = vsel %vm3094, %v3096, %v3092
        %v3098 = vmul.f32 1.0, %v3097
        %v3099 = vrcp.pop %v3035
        %v3100 = vmul.f32 %v3035, %v3099
        %v3101 = vsub.f32 1.0, %v3100
        %v3102 = vmul.f32 %v3099, %v3101
        %v3103 = vadd.f32 %v3099, %v3102
        %vm3104 = vweird.f32 %v3035
        %vm3105 = vweird.f32 %v3099
        %vm3106 = vmor %vm3104, %vm3105
        %v3107 = vsel %vm3106, %v3099, %v3103
        %v3108 = vand.u32 2147483647, %v3035
        %vm3109 = vcmp.eq.f32.partialorder %v3108, 8.507059e+37
        %v3110 = vand.u32 %v3035, 2147483648
        %v3111 = vor.u32 1.1754944e-38, %v3110
        %v3112 = vsel %vm3109, %v3111, %v3107
        %v3113 = vmul.f32 1.0, %v3112
        %v3114 = vrcp.pop %v3036
        %v3115 = vmul.f32 %v3036, %v3114
        %v3116 = vsub.f32 1.0, %v3115
        %v3117 = vmul.f32 %v3114, %v3116
        %v3118 = vadd.f32 %v3114, %v3117
        %vm3119 = vweird.f32 %v3036
        %vm3120 = vweird.f32 %v3114
        %vm3121 = vmor %vm3119, %vm3120
        %v3122 = vsel %vm3121, %v3114, %v3118
        %v3123 = vand.u32 2147483647, %v3036
        %vm3124 = vcmp.eq.f32.partialorder %v3123, 8.507059e+37
        %v3125 = vand.u32 %v3036, 2147483648
        %v3126 = vor.u32 1.1754944e-38, %v3125
        %v3127 = vsel %vm3124, %v3126, %v3122
        %v3128 = vmul.f32 1.0, %v3127
        %v3129 = vrcp.pop %v3037
        %v3130 = vmul.f32 %v3037, %v3129
        %v3131 = vsub.f32 1.0, %v3130
        %v3132 = vmul.f32 %v3129, %v3131
        %v3133 = vadd.f32 %v3129, %v3132
        %vm3134 = vweird.f32 %v3037
        %vm3135 = vweird.f32 %v3129
        %vm3136 = vmor %vm3134, %vm3135
        %v3137 = vsel %vm3136, %v3129, %v3133
        %v3138 = vand.u32 2147483647, %v3037
        %vm3139 = vcmp.eq.f32.partialorder %v3138, 8.507059e+37
        %v3140 = vand.u32 %v3037, 2147483648
        %v3141 = vor.u32 1.1754944e-38, %v3140
        %v3142 = vsel %vm3139, %v3141, %v3137
        %v3143 = vmul.f32 1.0, %v3142
        %v3144 = vrcp.pop %v3038
        %v3145 = vmul.f32 %v3038, %v3144
        %v3146 = vsub.f32 1.0, %v3145
        %v3147 = vmul.f32 %v3144, %v3146
        %v3148 = vadd.f32 %v3144, %v3147
        %vm3149 = vweird.f32 %v3038
        %vm3150 = vweird.f32 %v3144
        %vm3151 = vmor %vm3149, %vm3150
        %v3152 = vsel %vm3151, %v3144, %v3148
        %v3153 = vand.u32 2147483647, %v3038
        %vm3154 = vcmp.eq.f32.partialorder %v3153, 8.507059e+37
        %v3155 = vand.u32 %v3038, 2147483648
        %v3156 = vor.u32 1.1754944e-38, %v3155
        %v3157 = vsel %vm3154, %v3156, %v3152
        %v3158 = vmul.f32 1.0, %v3157
        %v3159 = vtanh.pop %v2999
        %v3160 = vtanh.pop %v3000
        %v3161 = vtanh.pop %v3001
        %v3162 = vtanh.pop %v3002
        %v3163 = vtanh.pop %v3003
        %v3164 = vtanh.pop %v3004
        %v3165 = vtanh.pop %v3005
        %v3166 = vtanh.pop %v3006
        %v3167 = vmul.f32 %v3053, %v2599
        %v3168 = vmul.f32 %v3068, %v2600
        %v3169 = vmul.f32 %v3083, %v2601
        %v3170 = vmul.f32 %v3098, %v2602
        %v3171 = vmul.f32 %v3113, %v2603
        %v3172 = vmul.f32 %v3128, %v2604
        %v3173 = vmul.f32 %v3143, %v2605
        %v3174 = vmul.f32 %v3158, %v2606
        %v3183 = vrot.slane %v3159, 2
        %v3184 = vrot.slane %v3160, 2
        %v3185 = vrot.slane %v3161, 2
        %v3186 = vrot.slane %v3162, 2
        %v3187 = vrot.slane %v3163, 2
        %v3188 = vrot.slane %v3164, 2
        %v3189 = vrot.slane %v3165, 2
        %v3190 = vrot.slane %v3166, 2
        %v3199 = vmul.f32 %v3053, %v3183
        %v3200 = vmul.f32 %v3068, %v3184
        %v3201 = vmul.f32 %v3083, %v3185
        %v3202 = vmul.f32 %v3098, %v3186
        %v3203 = vmul.f32 %v3113, %v3187
        %v3204 = vmul.f32 %v3128, %v3188
        %v3205 = vmul.f32 %v3143, %v3189
        %v3206 = vmul.f32 %v3158, %v3190
        %v3215 = vrot.slane %v3199, 7
        %v3216 = vrot.slane %v3200, 7
        %v3217 = vrot.slane %v3201, 7
        %v3218 = vrot.slane %v3202, 7
        %v3219 = vrot.slane %v3203, 7
        %v3220 = vrot.slane %v3204, 7
        %v3221 = vrot.slane %v3205, 7
        %v3222 = vrot.slane %v3206, 7
        %v3231 = vadd.f32 %v3167, %v3215
        %v3232 = vadd.f32 %v3168, %v3216
        %v3233 = vadd.f32 %v3169, %v3217
        %v3234 = vadd.f32 %v3170, %v3218
        %v3235 = vadd.f32 %v3171, %v3219
        %v3236 = vadd.f32 %v3172, %v3220
        %v3237 = vadd.f32 %v3173, %v3221
        %v3238 = vadd.f32 %v3174, %v3222
        %v3239 = vtanh.pop %v3231
        %v3240 = vtanh.pop %v3232
        %v3241 = vtanh.pop %v3233
        %v3242 = vtanh.pop %v3234
        %v3243 = vtanh.pop %v3235
        %v3244 = vtanh.pop %v3236
        %v3245 = vtanh.pop %v3237
        %v3246 = vtanh.pop %v3238
        %v3255 = vrot.slane %v3239, 6
        %v3256 = vrot.slane %v3240, 6
        %v3257 = vrot.slane %v3241, 6
        %v3258 = vrot.slane %v3242, 6
        %v3259 = vrot.slane %v3243, 6
        %v3260 = vrot.slane %v3244, 6
        %v3261 = vrot.slane %v3245, 6
        %v3262 = vrot.slane %v3246, 6
        %v3271 = vmul.f32 %v3053, %v3255
        %v3272 = vmul.f32 %v3068, %v3256
        %v3273 = vmul.f32 %v3083, %v3257
        %v3274 = vmul.f32 %v3098, %v3258
        %v3275 = vmul.f32 %v3113, %v3259
        %v3276 = vmul.f32 %v3128, %v3260
        %v3277 = vmul.f32 %v3143, %v3261
        %v3278 = vmul.f32 %v3158, %v3262
        %v3279 = vmul.f32 %v2327, %v714
        %v3280 = vmul.f32 %v2328, %v714
        %v3281 = vmul.f32 %v2329, %v714
        %v3282 = vmul.f32 %v2330, %v714
        %v3283 = vmul.f32 %v2331, %v714
        %v3284 = vmul.f32 %v2332, %v714
        %v3285 = vmul.f32 %v2333, %v714
        %v3286 = vmul.f32 %v2334, %v714
        %v3287 = vperm.slane %v2959, 3
        %v3288 = vperm.slane %v2960, 3
        %v3289 = vperm.slane %v2961, 3
        %v3290 = vperm.slane %v2962, 3
        %v3291 = vperm.slane %v2963, 3
        %v3292 = vperm.slane %v2964, 3
        %v3293 = vperm.slane %v2965, 3
        %v3294 = vperm.slane %v2966, 3
        %v3295 = vmul.f32 %v3287, %v1389
        %v3296 = vmul.f32 %v3288, %v1389
        %v3297 = vmul.f32 %v3289, %v1389
        %v3298 = vmul.f32 %v3290, %v1389
        %v3299 = vmul.f32 %v3291, %v1389
        %v3300 = vmul.f32 %v3292, %v1389
        %v3301 = vmul.f32 %v3293, %v1389
        %v3302 = vmul.f32 %v3294, %v1389
        %v3303 = vadd.f32 %v3279, %v3295
        %v3304 = vadd.f32 %v3280, %v3296
        %v3305 = vadd.f32 %v3281, %v3297
        %v3306 = vadd.f32 %v3282, %v3298
        %v3307 = vadd.f32 %v3283, %v3299
        %v3308 = vadd.f32 %v3284, %v3300
        %v3309 = vadd.f32 %v3285, %v3301
        %v3310 = vadd.f32 %v3286, %v3302
        %v3311 = vadd.f32 %v3303, %v749
        %v3312 = vadd.f32 %v3304, %v749
        %v3313 = vadd.f32 %v3305, %v749
        %v3314 = vadd.f32 %v3306, %v749
        %v3315 = vadd.f32 %v3307, %v749
        %v3316 = vadd.f32 %v3308, %v749
        %v3317 = vadd.f32 %v3309, %v749
        %v3318 = vadd.f32 %v3310, %v749
        %v3319 = vsub.f32 0.0, %v3311
        %v3320 = vsub.f32 0.0, %v3312
        %v3321 = vsub.f32 0.0, %v3313
        %v3322 = vsub.f32 0.0, %v3314
        %v3323 = vsub.f32 0.0, %v3315
        %v3324 = vsub.f32 0.0, %v3316
        %v3325 = vsub.f32 0.0, %v3317
        %v3326 = vsub.f32 0.0, %v3318
        %v3327 = vmul.f32 %v3319, 1.442695
        %v3328 = vpow.pop %v3327
        %v3329 = vmul.f32 %v3320, 1.442695
        %v3330 = vpow.pop %v3329
        %v3331 = vmul.f32 %v3321, 1.442695
        %v3332 = vpow.pop %v3331
        %v3333 = vmul.f32 %v3322, 1.442695
        %v3334 = vpow.pop %v3333
        %v3335 = vmul.f32 %v3323, 1.442695
        %v3336 = vpow.pop %v3335
        %v3337 = vmul.f32 %v3324, 1.442695
        %v3338 = vpow.pop %v3337
        %v3339 = vmul.f32 %v3325, 1.442695
        %v3340 = vpow.pop %v3339
        %v3341 = vmul.f32 %v3326, 1.442695
        %v3342 = vpow.pop %v3341
        %v3343 = vadd.f32 %v3328, 1.0
        %v3344 = vadd.f32 %v3330, 1.0
        %v3345 = vadd.f32 %v3332, 1.0
        %v3346 = vadd.f32 %v3334, 1.0
        %v3347 = vadd.f32 %v3336, 1.0
        %v3348 = vadd.f32 %v3338, 1.0
        %v3349 = vadd.f32 %v3340, 1.0
        %v3350 = vadd.f32 %v3342, 1.0
        %v3351 = vrcp.pop %v3343
        %v3352 = vmul.f32 %v3343, %v3351
        %v3353 = vsub.f32 1.0, %v3352
        %v3354 = vmul.f32 %v3351, %v3353
        %v3355 = vadd.f32 %v3351, %v3354
        %vm3356 = vweird.f32 %v3343
        %vm3357 = vweird.f32 %v3351
        %vm3358 = vmor %vm3356, %vm3357
        %v3359 = vsel %vm3358, %v3351, %v3355
        %v3360 = vand.u32 2147483647, %v3343
        %vm3361 = vcmp.eq.f32.partialorder %v3360, 8.507059e+37
        %v3362 = vand.u32 %v3343, 2147483648
        %v3363 = vor.u32 1.1754944e-38, %v3362
        %v3364 = vsel %vm3361, %v3363, %v3359
        %v3365 = vmul.f32 1.0, %v3364
        %v3366 = vrcp.pop %v3344
        %v3367 = vmul.f32 %v3344, %v3366
        %v3368 = vsub.f32 1.0, %v3367
        %v3369 = vmul.f32 %v3366, %v3368
        %v3370 = vadd.f32 %v3366, %v3369
        %vm3371 = vweird.f32 %v3344
        %vm3372 = vweird.f32 %v3366
        %vm3373 = vmor %vm3371, %vm3372
        %v3374 = vsel %vm3373, %v3366, %v3370
        %v3375 = vand.u32 2147483647, %v3344
        %vm3376 = vcmp.eq.f32.partialorder %v3375, 8.507059e+37
        %v3377 = vand.u32 %v3344, 2147483648
        %v3378 = vor.u32 1.1754944e-38, %v3377
        %v3379 = vsel %vm3376, %v3378, %v3374
        %v3380 = vmul.f32 1.0, %v3379
        %v3381 = vrcp.pop %v3345
        %v3382 = vmul.f32 %v3345, %v3381
        %v3383 = vsub.f32 1.0, %v3382
        %v3384 = vmul.f32 %v3381, %v3383
        %v3385 = vadd.f32 %v3381, %v3384
        %vm3386 = vweird.f32 %v3345
        %vm3387 = vweird.f32 %v3381
        %vm3388 = vmor %vm3386, %vm3387
        %v3389 = vsel %vm3388, %v3381, %v3385
        %v3390 = vand.u32 2147483647, %v3345
        %vm3391 = vcmp.eq.f32.partialorder %v3390, 8.507059e+37
        %v3392 = vand.u32 %v3345, 2147483648
        %v3393 = vor.u32 1.1754944e-38, %v3392
        %v3394 = vsel %vm3391, %v3393, %v3389
        %v3395 = vmul.f32 1.0, %v3394
        %v3396 = vrcp.pop %v3346
        %v3397 = vmul.f32 %v3346, %v3396
        %v3398 = vsub.f32 1.0, %v3397
        %v3399 = vmul.f32 %v3396, %v3398
        %v3400 = vadd.f32 %v3396, %v3399
        %vm3401 = vweird.f32 %v3346
        %vm3402 = vweird.f32 %v3396
        %vm3403 = vmor %vm3401, %vm3402
        %v3404 = vsel %vm3403, %v3396, %v3400
        %v3405 = vand.u32 2147483647, %v3346
        %vm3406 = vcmp.eq.f32.partialorder %v3405, 8.507059e+37
        %v3407 = vand.u32 %v3346, 2147483648
        %v3408 = vor.u32 1.1754944e-38, %v3407
        %v3409 = vsel %vm3406, %v3408, %v3404
        %v3410 = vmul.f32 1.0, %v3409
        %v3411 = vrcp.pop %v3347
        %v3412 = vmul.f32 %v3347, %v3411
        %v3413 = vsub.f32 1.0, %v3412
        %v3414 = vmul.f32 %v3411, %v3413
        %v3415 = vadd.f32 %v3411, %v3414
        %vm3416 = vweird.f32 %v3347
        %vm3417 = vweird.f32 %v3411
        %vm3418 = vmor %vm3416, %vm3417
        %v3419 = vsel %vm3418, %v3411, %v3415
        %v3420 = vand.u32 2147483647, %v3347
        %vm3421 = vcmp.eq.f32.partialorder %v3420, 8.507059e+37
        %v3422 = vand.u32 %v3347, 2147483648
        %v3423 = vor.u32 1.1754944e-38, %v3422
        %v3424 = vsel %vm3421, %v3423, %v3419
        %v3425 = vmul.f32 1.0, %v3424
        %v3426 = vrcp.pop %v3348
        %v3427 = vmul.f32 %v3348, %v3426
        %v3428 = vsub.f32 1.0, %v3427
        %v3429 = vmul.f32 %v3426, %v3428
        %v3430 = vadd.f32 %v3426, %v3429
        %vm3431 = vweird.f32 %v3348
        %vm3432 = vweird.f32 %v3426
        %vm3433 = vmor %vm3431, %vm3432
        %v3434 = vsel %vm3433, %v3426, %v3430
        %v3435 = vand.u32 2147483647, %v3348
        %vm3436 = vcmp.eq.f32.partialorder %v3435, 8.507059e+37
        %v3437 = vand.u32 %v3348, 2147483648
        %v3438 = vor.u32 1.1754944e-38, %v3437
        %v3439 = vsel %vm3436, %v3438, %v3434
        %v3440 = vmul.f32 1.0, %v3439
        %v3441 = vrcp.pop %v3349
        %v3442 = vmul.f32 %v3349, %v3441
        %v3443 = vsub.f32 1.0, %v3442
        %v3444 = vmul.f32 %v3441, %v3443
        %v3445 = vadd.f32 %v3441, %v3444
        %vm3446 = vweird.f32 %v3349
        %vm3447 = vweird.f32 %v3441
        %vm3448 = vmor %vm3446, %vm3447
        %v3449 = vsel %vm3448, %v3441, %v3445
        %v3450 = vand.u32 2147483647, %v3349
        %vm3451 = vcmp.eq.f32.partialorder %v3450, 8.507059e+37
        %v3452 = vand.u32 %v3349, 2147483648
        %v3453 = vor.u32 1.1754944e-38, %v3452
        %v3454 = vsel %vm3451, %v3453, %v3449
        %v3455 = vmul.f32 1.0, %v3454
        %v3456 = vrcp.pop %v3350
        %v3457 = vmul.f32 %v3350, %v3456
        %v3458 = vsub.f32 1.0, %v3457
        %v3459 = vmul.f32 %v3456, %v3458
        %v3460 = vadd.f32 %v3456, %v3459
        %vm3461 = vweird.f32 %v3350
        %vm3462 = vweird.f32 %v3456
        %vm3463 = vmor %vm3461, %vm3462
        %v3464 = vsel %vm3463, %v3456, %v3460
        %v3465 = vand.u32 2147483647, %v3350
        %vm3466 = vcmp.eq.f32.partialorder %v3465, 8.507059e+37
        %v3467 = vand.u32 %v3350, 2147483648
        %v3468 = vor.u32 1.1754944e-38, %v3467
        %v3469 = vsel %vm3466, %v3468, %v3464
        %v3470 = vmul.f32 1.0, %v3469
        %v3471 = vtanh.pop %v3311
        %v3472 = vtanh.pop %v3312
        %v3473 = vtanh.pop %v3313
        %v3474 = vtanh.pop %v3314
        %v3475 = vtanh.pop %v3315
        %v3476 = vtanh.pop %v3316
        %v3477 = vtanh.pop %v3317
        %v3478 = vtanh.pop %v3318
        %v3479 = vmul.f32 %v3365, %v2919
        %v3480 = vmul.f32 %v3380, %v2920
        %v3481 = vmul.f32 %v3395, %v2921
        %v3482 = vmul.f32 %v3410, %v2922
        %v3483 = vmul.f32 %v3425, %v2923
        %v3484 = vmul.f32 %v3440, %v2924
        %v3485 = vmul.f32 %v3455, %v2925
        %v3486 = vmul.f32 %v3470, %v2926
        %v3495 = vrot.slane %v3471, 2
        %v3496 = vrot.slane %v3472, 2
        %v3497 = vrot.slane %v3473, 2
        %v3498 = vrot.slane %v3474, 2
        %v3499 = vrot.slane %v3475, 2
        %v3500 = vrot.slane %v3476, 2
        %v3501 = vrot.slane %v3477, 2
        %v3502 = vrot.slane %v3478, 2
        %v3511 = vmul.f32 %v3365, %v3495
        %v3512 = vmul.f32 %v3380, %v3496
        %v3513 = vmul.f32 %v3395, %v3497
        %v3514 = vmul.f32 %v3410, %v3498
        %v3515 = vmul.f32 %v3425, %v3499
        %v3516 = vmul.f32 %v3440, %v3500
        %v3517 = vmul.f32 %v3455, %v3501
        %v3518 = vmul.f32 %v3470, %v3502
        %v3527 = vrot.slane %v3511, 7
        %v3528 = vrot.slane %v3512, 7
        %v3529 = vrot.slane %v3513, 7
        %v3530 = vrot.slane %v3514, 7
        %v3531 = vrot.slane %v3515, 7
        %v3532 = vrot.slane %v3516, 7
        %v3533 = vrot.slane %v3517, 7
        %v3534 = vrot.slane %v3518, 7
        %v3543 = vadd.f32 %v3479, %v3527
        %v3544 = vadd.f32 %v3480, %v3528
        %v3545 = vadd.f32 %v3481, %v3529
        %v3546 = vadd.f32 %v3482, %v3530
        %v3547 = vadd.f32 %v3483, %v3531
        %v3548 = vadd.f32 %v3484, %v3532
        %v3549 = vadd.f32 %v3485, %v3533
        %v3550 = vadd.f32 %v3486, %v3534
        %v3551 = vtanh.pop %v3543
        %v3552 = vtanh.pop %v3544
        %v3553 = vtanh.pop %v3545
        %v3554 = vtanh.pop %v3546
        %v3555 = vtanh.pop %v3547
        %v3556 = vtanh.pop %v3548
        %v3557 = vtanh.pop %v3549
        %v3558 = vtanh.pop %v3550
        %v3567 = vrot.slane %v3551, 6
        %v3568 = vrot.slane %v3552, 6
        %v3569 = vrot.slane %v3553, 6
        %v3570 = vrot.slane %v3554, 6
        %v3571 = vrot.slane %v3555, 6
        %v3572 = vrot.slane %v3556, 6
        %v3573 = vrot.slane %v3557, 6
        %v3574 = vrot.slane %v3558, 6
        %v3583 = vmul.f32 %v3365, %v3567
        %v3584 = vmul.f32 %v3380, %v3568
        %v3585 = vmul.f32 %v3395, %v3569
        %v3586 = vmul.f32 %v3410, %v3570
        %v3587 = vmul.f32 %v3425, %v3571
        %v3588 = vmul.f32 %v3440, %v3572
        %v3589 = vmul.f32 %v3455, %v3573
        %v3590 = vmul.f32 %v3470, %v3574
        %v3591 = vmul.f32 %v2007, %v382
        %v3592 = vmul.f32 %v2008, %v382
        %v3593 = vmul.f32 %v2009, %v382
        %v3594 = vmul.f32 %v2010, %v382
        %v3595 = vmul.f32 %v2011, %v382
        %v3596 = vmul.f32 %v2012, %v382
        %v3597 = vmul.f32 %v2013, %v382
        %v3598 = vmul.f32 %v2014, %v382
        %v3599 = vperm.slane %v3271, 3
        %v3600 = vperm.slane %v3272, 3
        %v3601 = vperm.slane %v3273, 3
        %v3602 = vperm.slane %v3274, 3
        %v3603 = vperm.slane %v3275, 3
        %v3604 = vperm.slane %v3276, 3
        %v3605 = vperm.slane %v3277, 3
        %v3606 = vperm.slane %v3278, 3
        %v3607 = vmul.f32 %v3599, %v1061
        %v3608 = vmul.f32 %v3600, %v1061
        %v3609 = vmul.f32 %v3601, %v1061
        %v3610 = vmul.f32 %v3602, %v1061
        %v3611 = vmul.f32 %v3603, %v1061
        %v3612 = vmul.f32 %v3604, %v1061
        %v3613 = vmul.f32 %v3605, %v1061
        %v3614 = vmul.f32 %v3606, %v1061
        %v3615 = vadd.f32 %v3591, %v3607
        %v3616 = vadd.f32 %v3592, %v3608
        %v3617 = vadd.f32 %v3593, %v3609
        %v3618 = vadd.f32 %v3594, %v3610
        %v3619 = vadd.f32 %v3595, %v3611
        %v3620 = vadd.f32 %v3596, %v3612
        %v3621 = vadd.f32 %v3597, %v3613
        %v3622 = vadd.f32 %v3598, %v3614
        %v3623 = vadd.f32 %v3615, %v417
        %v3624 = vadd.f32 %v3616, %v417
        %v3625 = vadd.f32 %v3617, %v417
        %v3626 = vadd.f32 %v3618, %v417
        %v3627 = vadd.f32 %v3619, %v417
        %v3628 = vadd.f32 %v3620, %v417
        %v3629 = vadd.f32 %v3621, %v417
        %v3630 = vadd.f32 %v3622, %v417
        %v3631 = vsub.f32 0.0, %v3623
        %v3632 = vsub.f32 0.0, %v3624
        %v3633 = vsub.f32 0.0, %v3625
        %v3634 = vsub.f32 0.0, %v3626
        %v3635 = vsub.f32 0.0, %v3627
        %v3636 = vsub.f32 0.0, %v3628
        %v3637 = vsub.f32 0.0, %v3629
        %v3638 = vsub.f32 0.0, %v3630
        %v3639 = vmul.f32 %v3631, 1.442695
        %v3640 = vpow.pop %v3639
        %v3641 = vmul.f32 %v3632, 1.442695
        %v3642 = vpow.pop %v3641
        %v3643 = vmul.f32 %v3633, 1.442695
        %v3644 = vpow.pop %v3643
        %v3645 = vmul.f32 %v3634, 1.442695
        %v3646 = vpow.pop %v3645
        %v3647 = vmul.f32 %v3635, 1.442695
        %v3648 = vpow.pop %v3647
        %v3649 = vmul.f32 %v3636, 1.442695
        %v3650 = vpow.pop %v3649
        %v3651 = vmul.f32 %v3637, 1.442695
        %v3652 = vpow.pop %v3651
        %v3653 = vmul.f32 %v3638, 1.442695
        %v3654 = vpow.pop %v3653
        %v3655 = vadd.f32 %v3640, 1.0
        %v3656 = vadd.f32 %v3642, 1.0
        %v3657 = vadd.f32 %v3644, 1.0
        %v3658 = vadd.f32 %v3646, 1.0
        %v3659 = vadd.f32 %v3648, 1.0
        %v3660 = vadd.f32 %v3650, 1.0
        %v3661 = vadd.f32 %v3652, 1.0
        %v3662 = vadd.f32 %v3654, 1.0
        %v3663 = vrcp.pop %v3655
        %v3664 = vmul.f32 %v3655, %v3663
        %v3665 = vsub.f32 1.0, %v3664
        %v3666 = vmul.f32 %v3663, %v3665
        %v3667 = vadd.f32 %v3663, %v3666
        %vm3668 = vweird.f32 %v3655
        %vm3669 = vweird.f32 %v3663
        %vm3670 = vmor %vm3668, %vm3669
        %v3671 = vsel %vm3670, %v3663, %v3667
        %v3672 = vand.u32 2147483647, %v3655
        %vm3673 = vcmp.eq.f32.partialorder %v3672, 8.507059e+37
        %v3674 = vand.u32 %v3655, 2147483648
        %v3675 = vor.u32 1.1754944e-38, %v3674
        %v3676 = vsel %vm3673, %v3675, %v3671
        %v3677 = vmul.f32 1.0, %v3676
        %v3678 = vrcp.pop %v3656
        %v3679 = vmul.f32 %v3656, %v3678
        %v3680 = vsub.f32 1.0, %v3679
        %v3681 = vmul.f32 %v3678, %v3680
        %v3682 = vadd.f32 %v3678, %v3681
        %vm3683 = vweird.f32 %v3656
        %vm3684 = vweird.f32 %v3678
        %vm3685 = vmor %vm3683, %vm3684
        %v3686 = vsel %vm3685, %v3678, %v3682
        %v3687 = vand.u32 2147483647, %v3656
        %vm3688 = vcmp.eq.f32.partialorder %v3687, 8.507059e+37
        %v3689 = vand.u32 %v3656, 2147483648
        %v3690 = vor.u32 1.1754944e-38, %v3689
        %v3691 = vsel %vm3688, %v3690, %v3686
        %v3692 = vmul.f32 1.0, %v3691
        %v3693 = vrcp.pop %v3657
        %v3694 = vmul.f32 %v3657, %v3693
        %v3695 = vsub.f32 1.0, %v3694
        %v3696 = vmul.f32 %v3693, %v3695
        %v3697 = vadd.f32 %v3693, %v3696
        %vm3698 = vweird.f32 %v3657
        %vm3699 = vweird.f32 %v3693
        %vm3700 = vmor %vm3698, %vm3699
        %v3701 = vsel %vm3700, %v3693, %v3697
        %v3702 = vand.u32 2147483647, %v3657
        %vm3703 = vcmp.eq.f32.partialorder %v3702, 8.507059e+37
        %v3704 = vand.u32 %v3657, 2147483648
        %v3705 = vor.u32 1.1754944e-38, %v3704
        %v3706 = vsel %vm3703, %v3705, %v3701
        %v3707 = vmul.f32 1.0, %v3706
        %v3708 = vrcp.pop %v3658
        %v3709 = vmul.f32 %v3658, %v3708
        %v3710 = vsub.f32 1.0, %v3709
        %v3711 = vmul.f32 %v3708, %v3710
        %v3712 = vadd.f32 %v3708, %v3711
        %vm3713 = vweird.f32 %v3658
        %vm3714 = vweird.f32 %v3708
        %vm3715 = vmor %vm3713, %vm3714
        %v3716 = vsel %vm3715, %v3708, %v3712
        %v3717 = vand.u32 2147483647, %v3658
        %vm3718 = vcmp.eq.f32.partialorder %v3717, 8.507059e+37
        %v3719 = vand.u32 %v3658, 2147483648
        %v3720 = vor.u32 1.1754944e-38, %v3719
        %v3721 = vsel %vm3718, %v3720, %v3716
        %v3722 = vmul.f32 1.0, %v3721
        %v3723 = vrcp.pop %v3659
        %v3724 = vmul.f32 %v3659, %v3723
        %v3725 = vsub.f32 1.0, %v3724
        %v3726 = vmul.f32 %v3723, %v3725
        %v3727 = vadd.f32 %v3723, %v3726
        %vm3728 = vweird.f32 %v3659
        %vm3729 = vweird.f32 %v3723
        %vm3730 = vmor %vm3728, %vm3729
        %v3731 = vsel %vm3730, %v3723, %v3727
        %v3732 = vand.u32 2147483647, %v3659
        %vm3733 = vcmp.eq.f32.partialorder %v3732, 8.507059e+37
        %v3734 = vand.u32 %v3659, 2147483648
        %v3735 = vor.u32 1.1754944e-38, %v3734
        %v3736 = vsel %vm3733, %v3735, %v3731
        %v3737 = vmul.f32 1.0, %v3736
        %v3738 = vrcp.pop %v3660
        %v3739 = vmul.f32 %v3660, %v3738
        %v3740 = vsub.f32 1.0, %v3739
        %v3741 = vmul.f32 %v3738, %v3740
        %v3742 = vadd.f32 %v3738, %v3741
        %vm3743 = vweird.f32 %v3660
        %vm3744 = vweird.f32 %v3738
        %vm3745 = vmor %vm3743, %vm3744
        %v3746 = vsel %vm3745, %v3738, %v3742
        %v3747 = vand.u32 2147483647, %v3660
        %vm3748 = vcmp.eq.f32.partialorder %v3747, 8.507059e+37
        %v3749 = vand.u32 %v3660, 2147483648
        %v3750 = vor.u32 1.1754944e-38, %v3749
        %v3751 = vsel %vm3748, %v3750, %v3746
        %v3752 = vmul.f32 1.0, %v3751
        %v3753 = vrcp.pop %v3661
        %v3754 = vmul.f32 %v3661, %v3753
        %v3755 = vsub.f32 1.0, %v3754
        %v3756 = vmul.f32 %v3753, %v3755
        %v3757 = vadd.f32 %v3753, %v3756
        %vm3758 = vweird.f32 %v3661
        %vm3759 = vweird.f32 %v3753
        %vm3760 = vmor %vm3758, %vm3759
        %v3761 = vsel %vm3760, %v3753, %v3757
        %v3762 = vand.u32 2147483647, %v3661
        %vm3763 = vcmp.eq.f32.partialorder %v3762, 8.507059e+37
        %v3764 = vand.u32 %v3661, 2147483648
        %v3765 = vor.u32 1.1754944e-38, %v3764
        %v3766 = vsel %vm3763, %v3765, %v3761
        %v3767 = vmul.f32 1.0, %v3766
        %v3768 = vrcp.pop %v3662
        %v3769 = vmul.f32 %v3662, %v3768
        %v3770 = vsub.f32 1.0, %v3769
        %v3771 = vmul.f32 %v3768, %v3770
        %v3772 = vadd.f32 %v3768, %v3771
        %vm3773 = vweird.f32 %v3662
        %vm3774 = vweird.f32 %v3768
        %vm3775 = vmor %vm3773, %vm3774
        %v3776 = vsel %vm3775, %v3768, %v3772
        %v3777 = vand.u32 2147483647, %v3662
        %vm3778 = vcmp.eq.f32.partialorder %v3777, 8.507059e+37
        %v3779 = vand.u32 %v3662, 2147483648
        %v3780 = vor.u32 1.1754944e-38, %v3779
        %v3781 = vsel %vm3778, %v3780, %v3776
        %v3782 = vmul.f32 1.0, %v3781
        %v3783 = vtanh.pop %v3623
        %v3784 = vtanh.pop %v3624
        %v3785 = vtanh.pop %v3625
        %v3786 = vtanh.pop %v3626
        %v3787 = vtanh.pop %v3627
        %v3788 = vtanh.pop %v3628
        %v3789 = vtanh.pop %v3629
        %v3790 = vtanh.pop %v3630
        %v3791 = vmul.f32 %v3677, %v3231
        %v3792 = vmul.f32 %v3692, %v3232
        %v3793 = vmul.f32 %v3707, %v3233
        %v3794 = vmul.f32 %v3722, %v3234
        %v3795 = vmul.f32 %v3737, %v3235
        %v3796 = vmul.f32 %v3752, %v3236
        %v3797 = vmul.f32 %v3767, %v3237
        %v3798 = vmul.f32 %v3782, %v3238
        %v3807 = vrot.slane %v3783, 2
        %v3808 = vrot.slane %v3784, 2
        %v3809 = vrot.slane %v3785, 2
        %v3810 = vrot.slane %v3786, 2
        %v3811 = vrot.slane %v3787, 2
        %v3812 = vrot.slane %v3788, 2
        %v3813 = vrot.slane %v3789, 2
        %v3814 = vrot.slane %v3790, 2
        %v3823 = vmul.f32 %v3677, %v3807
        %v3824 = vmul.f32 %v3692, %v3808
        %v3825 = vmul.f32 %v3707, %v3809
        %v3826 = vmul.f32 %v3722, %v3810
        %v3827 = vmul.f32 %v3737, %v3811
        %v3828 = vmul.f32 %v3752, %v3812
        %v3829 = vmul.f32 %v3767, %v3813
        %v3830 = vmul.f32 %v3782, %v3814
        %v3839 = vrot.slane %v3823, 7
        %v3840 = vrot.slane %v3824, 7
        %v3841 = vrot.slane %v3825, 7
        %v3842 = vrot.slane %v3826, 7
        %v3843 = vrot.slane %v3827, 7
        %v3844 = vrot.slane %v3828, 7
        %v3845 = vrot.slane %v3829, 7
        %v3846 = vrot.slane %v3830, 7
        %v3855 = vadd.f32 %v3791, %v3839
        %v3856 = vadd.f32 %v3792, %v3840
        %v3857 = vadd.f32 %v3793, %v3841
        %v3858 = vadd.f32 %v3794, %v3842
        %v3859 = vadd.f32 %v3795, %v3843
        %v3860 = vadd.f32 %v3796, %v3844
        %v3861 = vadd.f32 %v3797, %v3845
        %v3862 = vadd.f32 %v3798, %v3846
        %v3863 = vtanh.pop %v3855
        %v3864 = vtanh.pop %v3856
        %v3865 = vtanh.pop %v3857
        %v3866 = vtanh.pop %v3858
        %v3867 = vtanh.pop %v3859
        %v3868 = vtanh.pop %v3860
        %v3869 = vtanh.pop %v3861
        %v3870 = vtanh.pop %v3862
        %v3879 = vrot.slane %v3863, 6
        %v3880 = vrot.slane %v3864, 6
        %v3881 = vrot.slane %v3865, 6
        %v3882 = vrot.slane %v3866, 6
        %v3883 = vrot.slane %v3867, 6
        %v3884 = vrot.slane %v3868, 6
        %v3885 = vrot.slane %v3869, 6
        %v3886 = vrot.slane %v3870, 6
        %v3895 = vmul.f32 %v3677, %v3879
        %v3896 = vmul.f32 %v3692, %v3880
        %v3897 = vmul.f32 %v3707, %v3881
        %v3898 = vmul.f32 %v3722, %v3882
        %v3899 = vmul.f32 %v3737, %v3883
        %v3900 = vmul.f32 %v3752, %v3884
        %v3901 = vmul.f32 %v3767, %v3885
        %v3902 = vmul.f32 %v3782, %v3886
        %v3903 = vmul.f32 %v1687, %v714
        %v3904 = vmul.f32 %v1688, %v714
        %v3905 = vmul.f32 %v1689, %v714
        %v3906 = vmul.f32 %v1690, %v714
        %v3907 = vmul.f32 %v1691, %v714
        %v3908 = vmul.f32 %v1692, %v714
        %v3909 = vmul.f32 %v1693, %v714
        %v3910 = vmul.f32 %v1694, %v714
        %v3911 = vperm.slane %v3583, 3
        %v3912 = vperm.slane %v3584, 3
        %v3913 = vperm.slane %v3585, 3
        %v3914 = vperm.slane %v3586, 3
        %v3915 = vperm.slane %v3587, 3
        %v3916 = vperm.slane %v3588, 3
        %v3917 = vperm.slane %v3589, 3
        %v3918 = vperm.slane %v3590, 3
        %v3919 = vmul.f32 %v3911, %v1389
        %v3920 = vmul.f32 %v3912, %v1389
        %v3921 = vmul.f32 %v3913, %v1389
        %v3922 = vmul.f32 %v3914, %v1389
        %v3923 = vmul.f32 %v3915, %v1389
        %v3924 = vmul.f32 %v3916, %v1389
        %v3925 = vmul.f32 %v3917, %v1389
        %v3926 = vmul.f32 %v3918, %v1389
        %v3927 = vadd.f32 %v3903, %v3919
        %v3928 = vadd.f32 %v3904, %v3920
        %v3929 = vadd.f32 %v3905, %v3921
        %v3930 = vadd.f32 %v3906, %v3922
        %v3931 = vadd.f32 %v3907, %v3923
        %v3932 = vadd.f32 %v3908, %v3924
        %v3933 = vadd.f32 %v3909, %v3925
        %v3934 = vadd.f32 %v3910, %v3926
        %v3935 = vadd.f32 %v3927, %v749
        %v3936 = vadd.f32 %v3928, %v749
        %v3937 = vadd.f32 %v3929, %v749
        %v3938 = vadd.f32 %v3930, %v749
        %v3939 = vadd.f32 %v3931, %v749
        %v3940 = vadd.f32 %v3932, %v749
        %v3941 = vadd.f32 %v3933, %v749
        %v3942 = vadd.f32 %v3934, %v749
        %v3943 = vsub.f32 0.0, %v3935
        %v3944 = vsub.f32 0.0, %v3936
        %v3945 = vsub.f32 0.0, %v3937
        %v3946 = vsub.f32 0.0, %v3938
        %v3947 = vsub.f32 0.0, %v3939
        %v3948 = vsub.f32 0.0, %v3940
        %v3949 = vsub.f32 0.0, %v3941
        %v3950 = vsub.f32 0.0, %v3942
        %v3951 = vmul.f32 %v3943, 1.442695
        %v3952 = vpow.pop %v3951
        %v3953 = vmul.f32 %v3944, 1.442695
        %v3954 = vpow.pop %v3953
        %v3955 = vmul.f32 %v3945, 1.442695
        %v3956 = vpow.pop %v3955
        %v3957 = vmul.f32 %v3946, 1.442695
        %v3958 = vpow.pop %v3957
        %v3959 = vmul.f32 %v3947, 1.442695
        %v3960 = vpow.pop %v3959
        %v3961 = vmul.f32 %v3948, 1.442695
        %v3962 = vpow.pop %v3961
        %v3963 = vmul.f32 %v3949, 1.442695
        %v3964 = vpow.pop %v3963
        %v3965 = vmul.f32 %v3950, 1.442695
        %v3966 = vpow.pop %v3965
        %v3967 = vadd.f32 %v3952, 1.0
        %v3968 = vadd.f32 %v3954, 1.0
        %v3969 = vadd.f32 %v3956, 1.0
        %v3970 = vadd.f32 %v3958, 1.0
        %v3971 = vadd.f32 %v3960, 1.0
        %v3972 = vadd.f32 %v3962, 1.0
        %v3973 = vadd.f32 %v3964, 1.0
        %v3974 = vadd.f32 %v3966, 1.0
        %v3975 = vrcp.pop %v3967
        %v3976 = vmul.f32 %v3967, %v3975
        %v3977 = vsub.f32 1.0, %v3976
        %v3978 = vmul.f32 %v3975, %v3977
        %v3979 = vadd.f32 %v3975, %v3978
        %vm3980 = vweird.f32 %v3967
        %vm3981 = vweird.f32 %v3975
        %vm3982 = vmor %vm3980, %vm3981
        %v3983 = vsel %vm3982, %v3975, %v3979
        %v3984 = vand.u32 2147483647, %v3967
        %vm3985 = vcmp.eq.f32.partialorder %v3984, 8.507059e+37
        %v3986 = vand.u32 %v3967, 2147483648
        %v3987 = vor.u32 1.1754944e-38, %v3986
        %v3988 = vsel %vm3985, %v3987, %v3983
        %v3989 = vmul.f32 1.0, %v3988
        %v3990 = vrcp.pop %v3968
        %v3991 = vmul.f32 %v3968, %v3990
        %v3992 = vsub.f32 1.0, %v3991
        %v3993 = vmul.f32 %v3990, %v3992
        %v3994 = vadd.f32 %v3990, %v3993
        %vm3995 = vweird.f32 %v3968
        %vm3996 = vweird.f32 %v3990
        %vm3997 = vmor %vm3995, %vm3996
        %v3998 = vsel %vm3997, %v3990, %v3994
        %v3999 = vand.u32 2147483647, %v3968
        %vm4000 = vcmp.eq.f32.partialorder %v3999, 8.507059e+37
        %v4001 = vand.u32 %v3968, 2147483648
        %v4002 = vor.u32 1.1754944e-38, %v4001
        %v4003 = vsel %vm4000, %v4002, %v3998
        %v4004 = vmul.f32 1.0, %v4003
        %v4005 = vrcp.pop %v3969
        %v4006 = vmul.f32 %v3969, %v4005
        %v4007 = vsub.f32 1.0, %v4006
        %v4008 = vmul.f32 %v4005, %v4007
        %v4009 = vadd.f32 %v4005, %v4008
        %vm4010 = vweird.f32 %v3969
        %vm4011 = vweird.f32 %v4005
        %vm4012 = vmor %vm4010, %vm4011
        %v4013 = vsel %vm4012, %v4005, %v4009
        %v4014 = vand.u32 2147483647, %v3969
        %vm4015 = vcmp.eq.f32.partialorder %v4014, 8.507059e+37
        %v4016 = vand.u32 %v3969, 2147483648
        %v4017 = vor.u32 1.1754944e-38, %v4016
        %v4018 = vsel %vm4015, %v4017, %v4013
        %v4019 = vmul.f32 1.0, %v4018
        %v4020 = vrcp.pop %v3970
        %v4021 = vmul.f32 %v3970, %v4020
        %v4022 = vsub.f32 1.0, %v4021
        %v4023 = vmul.f32 %v4020, %v4022
        %v4024 = vadd.f32 %v4020, %v4023
        %vm4025 = vweird.f32 %v3970
        %vm4026 = vweird.f32 %v4020
        %vm4027 = vmor %vm4025, %vm4026
        %v4028 = vsel %vm4027, %v4020, %v4024
        %v4029 = vand.u32 2147483647, %v3970
        %vm4030 = vcmp.eq.f32.partialorder %v4029, 8.507059e+37
        %v4031 = vand.u32 %v3970, 2147483648
        %v4032 = vor.u32 1.1754944e-38, %v4031
        %v4033 = vsel %vm4030, %v4032, %v4028
        %v4034 = vmul.f32 1.0, %v4033
        %v4035 = vrcp.pop %v3971
        %v4036 = vmul.f32 %v3971, %v4035
        %v4037 = vsub.f32 1.0, %v4036
        %v4038 = vmul.f32 %v4035, %v4037
        %v4039 = vadd.f32 %v4035, %v4038
        %vm4040 = vweird.f32 %v3971
        %vm4041 = vweird.f32 %v4035
        %vm4042 = vmor %vm4040, %vm4041
        %v4043 = vsel %vm4042, %v4035, %v4039
        %v4044 = vand.u32 2147483647, %v3971
        %vm4045 = vcmp.eq.f32.partialorder %v4044, 8.507059e+37
        %v4046 = vand.u32 %v3971, 2147483648
        %v4047 = vor.u32 1.1754944e-38, %v4046
        %v4048 = vsel %vm4045, %v4047, %v4043
        %v4049 = vmul.f32 1.0, %v4048
        %v4050 = vrcp.pop %v3972
        %v4051 = vmul.f32 %v3972, %v4050
        %v4052 = vsub.f32 1.0, %v4051
        %v4053 = vmul.f32 %v4050, %v4052
        %v4054 = vadd.f32 %v4050, %v4053
        %vm4055 = vweird.f32 %v3972
        %vm4056 = vweird.f32 %v4050
        %vm4057 = vmor %vm4055, %vm4056
        %v4058 = vsel %vm4057, %v4050, %v4054
        %v4059 = vand.u32 2147483647, %v3972
        %vm4060 = vcmp.eq.f32.partialorder %v4059, 8.507059e+37
        %v4061 = vand.u32 %v3972, 2147483648
        %v4062 = vor.u32 1.1754944e-38, %v4061
        %v4063 = vsel %vm4060, %v4062, %v4058
        %v4064 = vmul.f32 1.0, %v4063
        %v4065 = vrcp.pop %v3973
        %v4066 = vmul.f32 %v3973, %v4065
        %v4067 = vsub.f32 1.0, %v4066
        %v4068 = vmul.f32 %v4065, %v4067
        %v4069 = vadd.f32 %v4065, %v4068
        %vm4070 = vweird.f32 %v3973
        %vm4071 = vweird.f32 %v4065
        %vm4072 = vmor %vm4070, %vm4071
        %v4073 = vsel %vm4072, %v4065, %v4069
        %v4074 = vand.u32 2147483647, %v3973
        %vm4075 = vcmp.eq.f32.partialorder %v4074, 8.507059e+37
        %v4076 = vand.u32 %v3973, 2147483648
        %v4077 = vor.u32 1.1754944e-38, %v4076
        %v4078 = vsel %vm4075, %v4077, %v4073
        %v4079 = vmul.f32 1.0, %v4078
        %v4080 = vrcp.pop %v3974
        %v4081 = vmul.f32 %v3974, %v4080
        %v4082 = vsub.f32 1.0, %v4081
        %v4083 = vmul.f32 %v4080, %v4082
        %v4084 = vadd.f32 %v4080, %v4083
        %vm4085 = vweird.f32 %v3974
        %vm4086 = vweird.f32 %v4080
        %vm4087 = vmor %vm4085, %vm4086
        %v4088 = vsel %vm4087, %v4080, %v4084
        %v4089 = vand.u32 2147483647, %v3974
        %vm4090 = vcmp.eq.f32.partialorder %v4089, 8.507059e+37
        %v4091 = vand.u32 %v3974, 2147483648
        %v4092 = vor.u32 1.1754944e-38, %v4091
        %v4093 = vsel %vm4090, %v4092, %v4088
        %v4094 = vmul.f32 1.0, %v4093
        %v4095 = vtanh.pop %v3935
        %v4096 = vtanh.pop %v3936
        %v4097 = vtanh.pop %v3937
        %v4098 = vtanh.pop %v3938
        %v4099 = vtanh.pop %v3939
        %v4100 = vtanh.pop %v3940
        %v4101 = vtanh.pop %v3941
        %v4102 = vtanh.pop %v3942
        %v4103 = vmul.f32 %v3989, %v3543
        %v4104 = vmul.f32 %v4004, %v3544
        %v4105 = vmul.f32 %v4019, %v3545
        %v4106 = vmul.f32 %v4034, %v3546
        %v4107 = vmul.f32 %v4049, %v3547
        %v4108 = vmul.f32 %v4064, %v3548
        %v4109 = vmul.f32 %v4079, %v3549
        %v4110 = vmul.f32 %v4094, %v3550
        %v4119 = vrot.slane %v4095, 2
        %v4120 = vrot.slane %v4096, 2
        %v4121 = vrot.slane %v4097, 2
        %v4122 = vrot.slane %v4098, 2
        %v4123 = vrot.slane %v4099, 2
        %v4124 = vrot.slane %v4100, 2
        %v4125 = vrot.slane %v4101, 2
        %v4126 = vrot.slane %v4102, 2
        %v4135 = vmul.f32 %v3989, %v4119
        %v4136 = vmul.f32 %v4004, %v4120
        %v4137 = vmul.f32 %v4019, %v4121
        %v4138 = vmul.f32 %v4034, %v4122
        %v4139 = vmul.f32 %v4049, %v4123
        %v4140 = vmul.f32 %v4064, %v4124
        %v4141 = vmul.f32 %v4079, %v4125
        %v4142 = vmul.f32 %v4094, %v4126
        %v4151 = vrot.slane %v4135, 7
        %v4152 = vrot.slane %v4136, 7
        %v4153 = vrot.slane %v4137, 7
        %v4154 = vrot.slane %v4138, 7
        %v4155 = vrot.slane %v4139, 7
        %v4156 = vrot.slane %v4140, 7
        %v4157 = vrot.slane %v4141, 7
        %v4158 = vrot.slane %v4142, 7
        %v4167 = vadd.f32 %v4103, %v4151
        %v4168 = vadd.f32 %v4104, %v4152
        %v4169 = vadd.f32 %v4105, %v4153
        %v4170 = vadd.f32 %v4106, %v4154
        %v4171 = vadd.f32 %v4107, %v4155
        %v4172 = vadd.f32 %v4108, %v4156
        %v4173 = vadd.f32 %v4109, %v4157
        %v4174 = vadd.f32 %v4110, %v4158
        %v4175 = vtanh.pop %v4167
        %v4176 = vtanh.pop %v4168
        %v4177 = vtanh.pop %v4169
        %v4178 = vtanh.pop %v4170
        %v4179 = vtanh.pop %v4171
        %v4180 = vtanh.pop %v4172
        %v4181 = vtanh.pop %v4173
        %v4182 = vtanh.pop %v4174
        %v4191 = vrot.slane %v4175, 6
        %v4192 = vrot.slane %v4176, 6
        %v4193 = vrot.slane %v4177, 6
        %v4194 = vrot.slane %v4178, 6
        %v4195 = vrot.slane %v4179, 6
        %v4196 = vrot.slane %v4180, 6
        %v4197 = vrot.slane %v4181, 6
        %v4198 = vrot.slane %v4182, 6
        %v4207 = vmul.f32 %v3989, %v4191
        %v4208 = vmul.f32 %v4004, %v4192
        %v4209 = vmul.f32 %v4019, %v4193
        %v4210 = vmul.f32 %v4034, %v4194
        %v4211 = vmul.f32 %v4049, %v4195
        %v4212 = vmul.f32 %v4064, %v4196
        %v4213 = vmul.f32 %v4079, %v4197
        %v4214 = vmul.f32 %v4094, %v4198
        %v4215 = vmul.f32 %v1359, %v382
        %v4216 = vmul.f32 %v1360, %v382
        %v4217 = vmul.f32 %v1361, %v382
        %v4218 = vmul.f32 %v1362, %v382
        %v4219 = vmul.f32 %v1363, %v382
        %v4220 = vmul.f32 %v1364, %v382
        %v4221 = vmul.f32 %v1365, %v382
        %v4222 = vmul.f32 %v1366, %v382
        %v4223 = vperm.slane %v3895, 3
        %v4224 = vperm.slane %v3896, 3
        %v4225 = vperm.slane %v3897, 3
        %v4226 = vperm.slane %v3898, 3
        %v4227 = vperm.slane %v3899, 3
        %v4228 = vperm.slane %v3900, 3
        %v4229 = vperm.slane %v3901, 3
        %v4230 = vperm.slane %v3902, 3
        %v4231 = vmul.f32 %v4223, %v1061
        %v4232 = vmul.f32 %v4224, %v1061
        %v4233 = vmul.f32 %v4225, %v1061
        %v4234 = vmul.f32 %v4226, %v1061
        %v4235 = vmul.f32 %v4227, %v1061
        %v4236 = vmul.f32 %v4228, %v1061
        %v4237 = vmul.f32 %v4229, %v1061
        %v4238 = vmul.f32 %v4230, %v1061
        %v4239 = vadd.f32 %v4215, %v4231
        %v4240 = vadd.f32 %v4216, %v4232
        %v4241 = vadd.f32 %v4217, %v4233
        %v4242 = vadd.f32 %v4218, %v4234
        %v4243 = vadd.f32 %v4219, %v4235
        %v4244 = vadd.f32 %v4220, %v4236
        %v4245 = vadd.f32 %v4221, %v4237
        %v4246 = vadd.f32 %v4222, %v4238
        %v4247 = vadd.f32 %v4239, %v417
        %v4248 = vadd.f32 %v4240, %v417
        %v4249 = vadd.f32 %v4241, %v417
        %v4250 = vadd.f32 %v4242, %v417
        %v4251 = vadd.f32 %v4243, %v417
        %v4252 = vadd.f32 %v4244, %v417
        %v4253 = vadd.f32 %v4245, %v417
        %v4254 = vadd.f32 %v4246, %v417
        %v4255 = vsub.f32 0.0, %v4247
        %v4256 = vsub.f32 0.0, %v4248
        %v4257 = vsub.f32 0.0, %v4249
        %v4258 = vsub.f32 0.0, %v4250
        %v4259 = vsub.f32 0.0, %v4251
        %v4260 = vsub.f32 0.0, %v4252
        %v4261 = vsub.f32 0.0, %v4253
        %v4262 = vsub.f32 0.0, %v4254
        %v4263 = vmul.f32 %v4255, 1.442695
        %v4264 = vpow.pop %v4263
        %v4265 = vmul.f32 %v4256, 1.442695
        %v4266 = vpow.pop %v4265
        %v4267 = vmul.f32 %v4257, 1.442695
        %v4268 = vpow.pop %v4267
        %v4269 = vmul.f32 %v4258, 1.442695
        %v4270 = vpow.pop %v4269
        %v4271 = vmul.f32 %v4259, 1.442695
        %v4272 = vpow.pop %v4271
        %v4273 = vmul.f32 %v4260, 1.442695
        %v4274 = vpow.pop %v4273
        %v4275 = vmul.f32 %v4261, 1.442695
        %v4276 = vpow.pop %v4275
        %v4277 = vmul.f32 %v4262, 1.442695
        %v4278 = vpow.pop %v4277
        %v4279 = vadd.f32 %v4264, 1.0
        %v4280 = vadd.f32 %v4266, 1.0
        %v4281 = vadd.f32 %v4268, 1.0
        %v4282 = vadd.f32 %v4270, 1.0
        %v4283 = vadd.f32 %v4272, 1.0
        %v4284 = vadd.f32 %v4274, 1.0
        %v4285 = vadd.f32 %v4276, 1.0
        %v4286 = vadd.f32 %v4278, 1.0
        %v4287 = vrcp.pop %v4279
        %v4288 = vmul.f32 %v4279, %v4287
        %v4289 = vsub.f32 1.0, %v4288
        %v4290 = vmul.f32 %v4287, %v4289
        %v4291 = vadd.f32 %v4287, %v4290
        %vm4292 = vweird.f32 %v4279
        %vm4293 = vweird.f32 %v4287
        %vm4294 = vmor %vm4292, %vm4293
        %v4295 = vsel %vm4294, %v4287, %v4291
        %v4296 = vand.u32 2147483647, %v4279
        %vm4297 = vcmp.eq.f32.partialorder %v4296, 8.507059e+37
        %v4298 = vand.u32 %v4279, 2147483648
        %v4299 = vor.u32 1.1754944e-38, %v4298
        %v4300 = vsel %vm4297, %v4299, %v4295
        %v4301 = vmul.f32 1.0, %v4300
        %v4302 = vrcp.pop %v4280
        %v4303 = vmul.f32 %v4280, %v4302
        %v4304 = vsub.f32 1.0, %v4303
        %v4305 = vmul.f32 %v4302, %v4304
        %v4306 = vadd.f32 %v4302, %v4305
        %vm4307 = vweird.f32 %v4280
        %vm4308 = vweird.f32 %v4302
        %vm4309 = vmor %vm4307, %vm4308
        %v4310 = vsel %vm4309, %v4302, %v4306
        %v4311 = vand.u32 2147483647, %v4280
        %vm4312 = vcmp.eq.f32.partialorder %v4311, 8.507059e+37
        %v4313 = vand.u32 %v4280, 2147483648
        %v4314 = vor.u32 1.1754944e-38, %v4313
        %v4315 = vsel %vm4312, %v4314, %v4310
        %v4316 = vmul.f32 1.0, %v4315
        %v4317 = vrcp.pop %v4281
        %v4318 = vmul.f32 %v4281, %v4317
        %v4319 = vsub.f32 1.0, %v4318
        %v4320 = vmul.f32 %v4317, %v4319
        %v4321 = vadd.f32 %v4317, %v4320
        %vm4322 = vweird.f32 %v4281
        %vm4323 = vweird.f32 %v4317
        %vm4324 = vmor %vm4322, %vm4323
        %v4325 = vsel %vm4324, %v4317, %v4321
        %v4326 = vand.u32 2147483647, %v4281
        %vm4327 = vcmp.eq.f32.partialorder %v4326, 8.507059e+37
        %v4328 = vand.u32 %v4281, 2147483648
        %v4329 = vor.u32 1.1754944e-38, %v4328
        %v4330 = vsel %vm4327, %v4329, %v4325
        %v4331 = vmul.f32 1.0, %v4330
        %v4332 = vrcp.pop %v4282
        %v4333 = vmul.f32 %v4282, %v4332
        %v4334 = vsub.f32 1.0, %v4333
        %v4335 = vmul.f32 %v4332, %v4334
        %v4336 = vadd.f32 %v4332, %v4335
        %vm4337 = vweird.f32 %v4282
        %vm4338 = vweird.f32 %v4332
        %vm4339 = vmor %vm4337, %vm4338
        %v4340 = vsel %vm4339, %v4332, %v4336
        %v4341 = vand.u32 2147483647, %v4282
        %vm4342 = vcmp.eq.f32.partialorder %v4341, 8.507059e+37
        %v4343 = vand.u32 %v4282, 2147483648
        %v4344 = vor.u32 1.1754944e-38, %v4343
        %v4345 = vsel %vm4342, %v4344, %v4340
        %v4346 = vmul.f32 1.0, %v4345
        %v4347 = vrcp.pop %v4283
        %v4348 = vmul.f32 %v4283, %v4347
        %v4349 = vsub.f32 1.0, %v4348
        %v4350 = vmul.f32 %v4347, %v4349
        %v4351 = vadd.f32 %v4347, %v4350
        %vm4352 = vweird.f32 %v4283
        %vm4353 = vweird.f32 %v4347
        %vm4354 = vmor %vm4352, %vm4353
        %v4355 = vsel %vm4354, %v4347, %v4351
        %v4356 = vand.u32 2147483647, %v4283
        %vm4357 = vcmp.eq.f32.partialorder %v4356, 8.507059e+37
        %v4358 = vand.u32 %v4283, 2147483648
        %v4359 = vor.u32 1.1754944e-38, %v4358
        %v4360 = vsel %vm4357, %v4359, %v4355
        %v4361 = vmul.f32 1.0, %v4360
        %v4362 = vrcp.pop %v4284
        %v4363 = vmul.f32 %v4284, %v4362
        %v4364 = vsub.f32 1.0, %v4363
        %v4365 = vmul.f32 %v4362, %v4364
        %v4366 = vadd.f32 %v4362, %v4365
        %vm4367 = vweird.f32 %v4284
        %vm4368 = vweird.f32 %v4362
        %vm4369 = vmor %vm4367, %vm4368
        %v4370 = vsel %vm4369, %v4362, %v4366
        %v4371 = vand.u32 2147483647, %v4284
        %vm4372 = vcmp.eq.f32.partialorder %v4371, 8.507059e+37
        %v4373 = vand.u32 %v4284, 2147483648
        %v4374 = vor.u32 1.1754944e-38, %v4373
        %v4375 = vsel %vm4372, %v4374, %v4370
        %v4376 = vmul.f32 1.0, %v4375
        %v4377 = vrcp.pop %v4285
        %v4378 = vmul.f32 %v4285, %v4377
        %v4379 = vsub.f32 1.0, %v4378
        %v4380 = vmul.f32 %v4377, %v4379
        %v4381 = vadd.f32 %v4377, %v4380
        %vm4382 = vweird.f32 %v4285
        %vm4383 = vweird.f32 %v4377
        %vm4384 = vmor %vm4382, %vm4383
        %v4385 = vsel %vm4384, %v4377, %v4381
        %v4386 = vand.u32 2147483647, %v4285
        %vm4387 = vcmp.eq.f32.partialorder %v4386, 8.507059e+37
        %v4388 = vand.u32 %v4285, 2147483648
        %v4389 = vor.u32 1.1754944e-38, %v4388
        %v4390 = vsel %vm4387, %v4389, %v4385
        %v4391 = vmul.f32 1.0, %v4390
        %v4392 = vrcp.pop %v4286
        %v4393 = vmul.f32 %v4286, %v4392
        %v4394 = vsub.f32 1.0, %v4393
        %v4395 = vmul.f32 %v4392, %v4394
        %v4396 = vadd.f32 %v4392, %v4395
        %vm4397 = vweird.f32 %v4286
        %vm4398 = vweird.f32 %v4392
        %vm4399 = vmor %vm4397, %vm4398
        %v4400 = vsel %vm4399, %v4392, %v4396
        %v4401 = vand.u32 2147483647, %v4286
        %vm4402 = vcmp.eq.f32.partialorder %v4401, 8.507059e+37
        %v4403 = vand.u32 %v4286, 2147483648
        %v4404 = vor.u32 1.1754944e-38, %v4403
        %v4405 = vsel %vm4402, %v4404, %v4400
        %v4406 = vmul.f32 1.0, %v4405
        %v4407 = vtanh.pop %v4247
        %v4408 = vtanh.pop %v4248
        %v4409 = vtanh.pop %v4249
        %v4410 = vtanh.pop %v4250
        %v4411 = vtanh.pop %v4251
        %v4412 = vtanh.pop %v4252
        %v4413 = vtanh.pop %v4253
        %v4414 = vtanh.pop %v4254
        %v4415 = vmul.f32 %v4301, %v3855
        %v4416 = vmul.f32 %v4316, %v3856
        %v4417 = vmul.f32 %v4331, %v3857
        %v4418 = vmul.f32 %v4346, %v3858
        %v4419 = vmul.f32 %v4361, %v3859
        %v4420 = vmul.f32 %v4376, %v3860
        %v4421 = vmul.f32 %v4391, %v3861
        %v4422 = vmul.f32 %v4406, %v3862
        %v4431 = vrot.slane %v4407, 2
        %v4432 = vrot.slane %v4408, 2
        %v4433 = vrot.slane %v4409, 2
        %v4434 = vrot.slane %v4410, 2
        %v4435 = vrot.slane %v4411, 2
        %v4436 = vrot.slane %v4412, 2
        %v4437 = vrot.slane %v4413, 2
        %v4438 = vrot.slane %v4414, 2
        %v4447 = vmul.f32 %v4301, %v4431
        %v4448 = vmul.f32 %v4316, %v4432
        %v4449 = vmul.f32 %v4331, %v4433
        %v4450 = vmul.f32 %v4346, %v4434
        %v4451 = vmul.f32 %v4361, %v4435
        %v4452 = vmul.f32 %v4376, %v4436
        %v4453 = vmul.f32 %v4391, %v4437
        %v4454 = vmul.f32 %v4406, %v4438
        %v4463 = vrot.slane %v4447, 7
        %v4464 = vrot.slane %v4448, 7
        %v4465 = vrot.slane %v4449, 7
        %v4466 = vrot.slane %v4450, 7
        %v4467 = vrot.slane %v4451, 7
        %v4468 = vrot.slane %v4452, 7
        %v4469 = vrot.slane %v4453, 7
        %v4470 = vrot.slane %v4454, 7
        %v4479 = vadd.f32 %v4415, %v4463
        %v4480 = vadd.f32 %v4416, %v4464
        %v4481 = vadd.f32 %v4417, %v4465
        %v4482 = vadd.f32 %v4418, %v4466
        %v4483 = vadd.f32 %v4419, %v4467
        %v4484 = vadd.f32 %v4420, %v4468
        %v4485 = vadd.f32 %v4421, %v4469
        %v4486 = vadd.f32 %v4422, %v4470
        %v4487 = vtanh.pop %v4479
        %v4488 = vtanh.pop %v4480
        %v4489 = vtanh.pop %v4481
        %v4490 = vtanh.pop %v4482
        %v4491 = vtanh.pop %v4483
        %v4492 = vtanh.pop %v4484
        %v4493 = vtanh.pop %v4485
        %v4494 = vtanh.pop %v4486
        %v4503 = vrot.slane %v4487, 6
        %v4504 = vrot.slane %v4488, 6
        %v4505 = vrot.slane %v4489, 6
        %v4506 = vrot.slane %v4490, 6
        %v4507 = vrot.slane %v4491, 6
        %v4508 = vrot.slane %v4492, 6
        %v4509 = vrot.slane %v4493, 6
        %v4510 = vrot.slane %v4494, 6
        %v4519 = vmul.f32 %v4301, %v4503
        %v4520 = vmul.f32 %v4316, %v4504
        %v4521 = vmul.f32 %v4331, %v4505
        %v4522 = vmul.f32 %v4346, %v4506
        %v4523 = vmul.f32 %v4361, %v4507
        %v4524 = vmul.f32 %v4376, %v4508
        %v4525 = vmul.f32 %v4391, %v4509
        %v4526 = vmul.f32 %v4406, %v4510
        %v4527 = vmul.f32 %v1031, %v714
        %v4528 = vmul.f32 %v1032, %v714
        %v4529 = vmul.f32 %v1033, %v714
        %v4530 = vmul.f32 %v1034, %v714
        %v4531 = vmul.f32 %v1035, %v714
        %v4532 = vmul.f32 %v1036, %v714
        %v4533 = vmul.f32 %v1037, %v714
        %v4534 = vmul.f32 %v1038, %v714
        %v4535 = vperm.slane %v4207, 3
        %v4536 = vperm.slane %v4208, 3
        %v4537 = vperm.slane %v4209, 3
        %v4538 = vperm.slane %v4210, 3
        %v4539 = vperm.slane %v4211, 3
        %v4540 = vperm.slane %v4212, 3
        %v4541 = vperm.slane %v4213, 3
        %v4542 = vperm.slane %v4214, 3
        %v4543 = vmul.f32 %v4535, %v1389
        %v4544 = vmul.f32 %v4536, %v1389
        %v4545 = vmul.f32 %v4537, %v1389
        %v4546 = vmul.f32 %v4538, %v1389
        %v4547 = vmul.f32 %v4539, %v1389
        %v4548 = vmul.f32 %v4540, %v1389
        %v4549 = vmul.f32 %v4541, %v1389
        %v4550 = vmul.f32 %v4542, %v1389
        %v4551 = vadd.f32 %v4527, %v4543
        %v4552 = vadd.f32 %v4528, %v4544
        %v4553 = vadd.f32 %v4529, %v4545
        %v4554 = vadd.f32 %v4530, %v4546
        %v4555 = vadd.f32 %v4531, %v4547
        %v4556 = vadd.f32 %v4532, %v4548
        %v4557 = vadd.f32 %v4533, %v4549
        %v4558 = vadd.f32 %v4534, %v4550
        %v4559 = vadd.f32 %v4551, %v749
        %v4560 = vadd.f32 %v4552, %v749
        %v4561 = vadd.f32 %v4553, %v749
        %v4562 = vadd.f32 %v4554, %v749
        %v4563 = vadd.f32 %v4555, %v749
        %v4564 = vadd.f32 %v4556, %v749
        %v4565 = vadd.f32 %v4557, %v749
        %v4566 = vadd.f32 %v4558, %v749
        %v4567 = vsub.f32 0.0, %v4559
        %v4568 = vsub.f32 0.0, %v4560
        %v4569 = vsub.f32 0.0, %v4561
        %v4570 = vsub.f32 0.0, %v4562
        %v4571 = vsub.f32 0.0, %v4563
        %v4572 = vsub.f32 0.0, %v4564
        %v4573 = vsub.f32 0.0, %v4565
        %v4574 = vsub.f32 0.0, %v4566
        %v4575 = vmul.f32 %v4567, 1.442695
        %v4576 = vpow.pop %v4575
        %v4577 = vmul.f32 %v4568, 1.442695
        %v4578 = vpow.pop %v4577
        %v4579 = vmul.f32 %v4569, 1.442695
        %v4580 = vpow.pop %v4579
        %v4581 = vmul.f32 %v4570, 1.442695
        %v4582 = vpow.pop %v4581
        %v4583 = vmul.f32 %v4571, 1.442695
        %v4584 = vpow.pop %v4583
        %v4585 = vmul.f32 %v4572, 1.442695
        %v4586 = vpow.pop %v4585
        %v4587 = vmul.f32 %v4573, 1.442695
        %v4588 = vpow.pop %v4587
        %v4589 = vmul.f32 %v4574, 1.442695
        %v4590 = vpow.pop %v4589
        %v4591 = vadd.f32 %v4576, 1.0
        %v4592 = vadd.f32 %v4578, 1.0
        %v4593 = vadd.f32 %v4580, 1.0
        %v4594 = vadd.f32 %v4582, 1.0
        %v4595 = vadd.f32 %v4584, 1.0
        %v4596 = vadd.f32 %v4586, 1.0
        %v4597 = vadd.f32 %v4588, 1.0
        %v4598 = vadd.f32 %v4590, 1.0
        %v4599 = vrcp.pop %v4591
        %v4600 = vmul.f32 %v4591, %v4599
        %v4601 = vsub.f32 1.0, %v4600
        %v4602 = vmul.f32 %v4599, %v4601
        %v4603 = vadd.f32 %v4599, %v4602
        %vm4604 = vweird.f32 %v4591
        %vm4605 = vweird.f32 %v4599
        %vm4606 = vmor %vm4604, %vm4605
        %v4607 = vsel %vm4606, %v4599, %v4603
        %v4608 = vand.u32 2147483647, %v4591
        %vm4609 = vcmp.eq.f32.partialorder %v4608, 8.507059e+37
        %v4610 = vand.u32 %v4591, 2147483648
        %v4611 = vor.u32 1.1754944e-38, %v4610
        %v4612 = vsel %vm4609, %v4611, %v4607
        %v4613 = vmul.f32 1.0, %v4612
        %v4614 = vrcp.pop %v4592
        %v4615 = vmul.f32 %v4592, %v4614
        %v4616 = vsub.f32 1.0, %v4615
        %v4617 = vmul.f32 %v4614, %v4616
        %v4618 = vadd.f32 %v4614, %v4617
        %vm4619 = vweird.f32 %v4592
        %vm4620 = vweird.f32 %v4614
        %vm4621 = vmor %vm4619, %vm4620
        %v4622 = vsel %vm4621, %v4614, %v4618
        %v4623 = vand.u32 2147483647, %v4592
        %vm4624 = vcmp.eq.f32.partialorder %v4623, 8.507059e+37
        %v4625 = vand.u32 %v4592, 2147483648
        %v4626 = vor.u32 1.1754944e-38, %v4625
        %v4627 = vsel %vm4624, %v4626, %v4622
        %v4628 = vmul.f32 1.0, %v4627
        %v4629 = vrcp.pop %v4593
        %v4630 = vmul.f32 %v4593, %v4629
        %v4631 = vsub.f32 1.0, %v4630
        %v4632 = vmul.f32 %v4629, %v4631
        %v4633 = vadd.f32 %v4629, %v4632
        %vm4634 = vweird.f32 %v4593
        %vm4635 = vweird.f32 %v4629
        %vm4636 = vmor %vm4634, %vm4635
        %v4637 = vsel %vm4636, %v4629, %v4633
        %v4638 = vand.u32 2147483647, %v4593
        %vm4639 = vcmp.eq.f32.partialorder %v4638, 8.507059e+37
        %v4640 = vand.u32 %v4593, 2147483648
        %v4641 = vor.u32 1.1754944e-38, %v4640
        %v4642 = vsel %vm4639, %v4641, %v4637
        %v4643 = vmul.f32 1.0, %v4642
        %v4644 = vrcp.pop %v4594
        %v4645 = vmul.f32 %v4594, %v4644
        %v4646 = vsub.f32 1.0, %v4645
        %v4647 = vmul.f32 %v4644, %v4646
        %v4648 = vadd.f32 %v4644, %v4647
        %vm4649 = vweird.f32 %v4594
        %vm4650 = vweird.f32 %v4644
        %vm4651 = vmor %vm4649, %vm4650
        %v4652 = vsel %vm4651, %v4644, %v4648
        %v4653 = vand.u32 2147483647, %v4594
        %vm4654 = vcmp.eq.f32.partialorder %v4653, 8.507059e+37
        %v4655 = vand.u32 %v4594, 2147483648
        %v4656 = vor.u32 1.1754944e-38, %v4655
        %v4657 = vsel %vm4654, %v4656, %v4652
        %v4658 = vmul.f32 1.0, %v4657
        %v4659 = vrcp.pop %v4595
        %v4660 = vmul.f32 %v4595, %v4659
        %v4661 = vsub.f32 1.0, %v4660
        %v4662 = vmul.f32 %v4659, %v4661
        %v4663 = vadd.f32 %v4659, %v4662
        %vm4664 = vweird.f32 %v4595
        %vm4665 = vweird.f32 %v4659
        %vm4666 = vmor %vm4664, %vm4665
        %v4667 = vsel %vm4666, %v4659, %v4663
        %v4668 = vand.u32 2147483647, %v4595
        %vm4669 = vcmp.eq.f32.partialorder %v4668, 8.507059e+37
        %v4670 = vand.u32 %v4595, 2147483648
        %v4671 = vor.u32 1.1754944e-38, %v4670
        %v4672 = vsel %vm4669, %v4671, %v4667
        %v4673 = vmul.f32 1.0, %v4672
        %v4674 = vrcp.pop %v4596
        %v4675 = vmul.f32 %v4596, %v4674
        %v4676 = vsub.f32 1.0, %v4675
        %v4677 = vmul.f32 %v4674, %v4676
        %v4678 = vadd.f32 %v4674, %v4677
        %vm4679 = vweird.f32 %v4596
        %vm4680 = vweird.f32 %v4674
        %vm4681 = vmor %vm4679, %vm4680
        %v4682 = vsel %vm4681, %v4674, %v4678
        %v4683 = vand.u32 2147483647, %v4596
        %vm4684 = vcmp.eq.f32.partialorder %v4683, 8.507059e+37
        %v4685 = vand.u32 %v4596, 2147483648
        %v4686 = vor.u32 1.1754944e-38, %v4685
        %v4687 = vsel %vm4684, %v4686, %v4682
        %v4688 = vmul.f32 1.0, %v4687
        %v4689 = vrcp.pop %v4597
        %v4690 = vmul.f32 %v4597, %v4689
        %v4691 = vsub.f32 1.0, %v4690
        %v4692 = vmul.f32 %v4689, %v4691
        %v4693 = vadd.f32 %v4689, %v4692
        %vm4694 = vweird.f32 %v4597
        %vm4695 = vweird.f32 %v4689
        %vm4696 = vmor %vm4694, %vm4695
        %v4697 = vsel %vm4696, %v4689, %v4693
        %v4698 = vand.u32 2147483647, %v4597
        %vm4699 = vcmp.eq.f32.partialorder %v4698, 8.507059e+37
        %v4700 = vand.u32 %v4597, 2147483648
        %v4701 = vor.u32 1.1754944e-38, %v4700
        %v4702 = vsel %vm4699, %v4701, %v4697
        %v4703 = vmul.f32 1.0, %v4702
        %v4704 = vrcp.pop %v4598
        %v4705 = vmul.f32 %v4598, %v4704
        %v4706 = vsub.f32 1.0, %v4705
        %v4707 = vmul.f32 %v4704, %v4706
        %v4708 = vadd.f32 %v4704, %v4707
        %vm4709 = vweird.f32 %v4598
        %vm4710 = vweird.f32 %v4704
        %vm4711 = vmor %vm4709, %vm4710
        %v4712 = vsel %vm4711, %v4704, %v4708
        %v4713 = vand.u32 2147483647, %v4598
        %vm4714 = vcmp.eq.f32.partialorder %v4713, 8.507059e+37
        %v4715 = vand.u32 %v4598, 2147483648
        %v4716 = vor.u32 1.1754944e-38, %v4715
        %v4717 = vsel %vm4714, %v4716, %v4712
        %v4718 = vmul.f32 1.0, %v4717
        %v4719 = vtanh.pop %v4559
        %v4720 = vtanh.pop %v4560
        %v4721 = vtanh.pop %v4561
        %v4722 = vtanh.pop %v4562
        %v4723 = vtanh.pop %v4563
        %v4724 = vtanh.pop %v4564
        %v4725 = vtanh.pop %v4565
        %v4726 = vtanh.pop %v4566
        %v4727 = vmul.f32 %v4613, %v4167
        %v4728 = vmul.f32 %v4628, %v4168
        %v4729 = vmul.f32 %v4643, %v4169
        %v4730 = vmul.f32 %v4658, %v4170
        %v4731 = vmul.f32 %v4673, %v4171
        %v4732 = vmul.f32 %v4688, %v4172
        %v4733 = vmul.f32 %v4703, %v4173
        %v4734 = vmul.f32 %v4718, %v4174
        %v4743 = vrot.slane %v4719, 2
        %v4744 = vrot.slane %v4720, 2
        %v4745 = vrot.slane %v4721, 2
        %v4746 = vrot.slane %v4722, 2
        %v4747 = vrot.slane %v4723, 2
        %v4748 = vrot.slane %v4724, 2
        %v4749 = vrot.slane %v4725, 2
        %v4750 = vrot.slane %v4726, 2
        %v4759 = vmul.f32 %v4613, %v4743
        %v4760 = vmul.f32 %v4628, %v4744
        %v4761 = vmul.f32 %v4643, %v4745
        %v4762 = vmul.f32 %v4658, %v4746
        %v4763 = vmul.f32 %v4673, %v4747
        %v4764 = vmul.f32 %v4688, %v4748
        %v4765 = vmul.f32 %v4703, %v4749
        %v4766 = vmul.f32 %v4718, %v4750
        %v4775 = vrot.slane %v4759, 7
        %v4776 = vrot.slane %v4760, 7
        %v4777 = vrot.slane %v4761, 7
        %v4778 = vrot.slane %v4762, 7
        %v4779 = vrot.slane %v4763, 7
        %v4780 = vrot.slane %v4764, 7
        %v4781 = vrot.slane %v4765, 7
        %v4782 = vrot.slane %v4766, 7
        %v4791 = vadd.f32 %v4727, %v4775
        %v4792 = vadd.f32 %v4728, %v4776
        %v4793 = vadd.f32 %v4729, %v4777
        %v4794 = vadd.f32 %v4730, %v4778
        %v4795 = vadd.f32 %v4731, %v4779
        %v4796 = vadd.f32 %v4732, %v4780
        %v4797 = vadd.f32 %v4733, %v4781
        %v4798 = vadd.f32 %v4734, %v4782
        %v4799 = vtanh.pop %v4791
        %v4800 = vtanh.pop %v4792
        %v4801 = vtanh.pop %v4793
        %v4802 = vtanh.pop %v4794
        %v4803 = vtanh.pop %v4795
        %v4804 = vtanh.pop %v4796
        %v4805 = vtanh.pop %v4797
        %v4806 = vtanh.pop %v4798
        %v4815 = vrot.slane %v4799, 6
        %v4816 = vrot.slane %v4800, 6
        %v4817 = vrot.slane %v4801, 6
        %v4818 = vrot.slane %v4802, 6
        %v4819 = vrot.slane %v4803, 6
        %v4820 = vrot.slane %v4804, 6
        %v4821 = vrot.slane %v4805, 6
        %v4822 = vrot.slane %v4806, 6
        %v4831 = vmul.f32 %v4613, %v4815
        %v4832 = vmul.f32 %v4628, %v4816
        %v4833 = vmul.f32 %v4643, %v4817
        %v4834 = vmul.f32 %v4658, %v4818
        %v4835 = vmul.f32 %v4673, %v4819
        %v4836 = vmul.f32 %v4688, %v4820
        %v4837 = vmul.f32 %v4703, %v4821
        %v4838 = vmul.f32 %v4718, %v4822
        %v4839 = vmul.f32 %v699, %v382
        %v4840 = vmul.f32 %v700, %v382
        %v4841 = vmul.f32 %v701, %v382
        %v4842 = vmul.f32 %v702, %v382
        %v4843 = vmul.f32 %v703, %v382
        %v4844 = vmul.f32 %v704, %v382
        %v4845 = vmul.f32 %v705, %v382
        %v4846 = vmul.f32 %v706, %v382
        %v4847 = vperm.slane %v4519, 3
        %v4848 = vperm.slane %v4520, 3
        %v4849 = vperm.slane %v4521, 3
        %v4850 = vperm.slane %v4522, 3
        %v4851 = vperm.slane %v4523, 3
        %v4852 = vperm.slane %v4524, 3
        %v4853 = vperm.slane %v4525, 3
        %v4854 = vperm.slane %v4526, 3
        %v4855 = vmul.f32 %v4847, %v1061
        %v4856 = vmul.f32 %v4848, %v1061
        %v4857 = vmul.f32 %v4849, %v1061
        %v4858 = vmul.f32 %v4850, %v1061
        %v4859 = vmul.f32 %v4851, %v1061
        %v4860 = vmul.f32 %v4852, %v1061
        %v4861 = vmul.f32 %v4853, %v1061
        %v4862 = vmul.f32 %v4854, %v1061
        %v4863 = vadd.f32 %v4839, %v4855
        %v4864 = vadd.f32 %v4840, %v4856
        %v4865 = vadd.f32 %v4841, %v4857
        %v4866 = vadd.f32 %v4842, %v4858
        %v4867 = vadd.f32 %v4843, %v4859
        %v4868 = vadd.f32 %v4844, %v4860
        %v4869 = vadd.f32 %v4845, %v4861
        %v4870 = vadd.f32 %v4846, %v4862
        %v4871 = vadd.f32 %v4863, %v417
        %v4872 = vadd.f32 %v4864, %v417
        %v4873 = vadd.f32 %v4865, %v417
        %v4874 = vadd.f32 %v4866, %v417
        %v4875 = vadd.f32 %v4867, %v417
        %v4876 = vadd.f32 %v4868, %v417
        %v4877 = vadd.f32 %v4869, %v417
        %v4878 = vadd.f32 %v4870, %v417
        %v4879 = vsub.f32 0.0, %v4871
        %v4880 = vsub.f32 0.0, %v4872
        %v4881 = vsub.f32 0.0, %v4873
        %v4882 = vsub.f32 0.0, %v4874
        %v4883 = vsub.f32 0.0, %v4875
        %v4884 = vsub.f32 0.0, %v4876
        %v4885 = vsub.f32 0.0, %v4877
        %v4886 = vsub.f32 0.0, %v4878
        %v4887 = vmul.f32 %v4879, 1.442695
        %v4888 = vpow.pop %v4887
        %v4889 = vmul.f32 %v4880, 1.442695
        %v4890 = vpow.pop %v4889
        %v4891 = vmul.f32 %v4881, 1.442695
        %v4892 = vpow.pop %v4891
        %v4893 = vmul.f32 %v4882, 1.442695
        %v4894 = vpow.pop %v4893
        %v4895 = vmul.f32 %v4883, 1.442695
        %v4896 = vpow.pop %v4895
        %v4897 = vmul.f32 %v4884, 1.442695
        %v4898 = vpow.pop %v4897
        %v4899 = vmul.f32 %v4885, 1.442695
        %v4900 = vpow.pop %v4899
        %v4901 = vmul.f32 %v4886, 1.442695
        %v4902 = vpow.pop %v4901
        %v4903 = vadd.f32 %v4888, 1.0
        %v4904 = vadd.f32 %v4890, 1.0
        %v4905 = vadd.f32 %v4892, 1.0
        %v4906 = vadd.f32 %v4894, 1.0
        %v4907 = vadd.f32 %v4896, 1.0
        %v4908 = vadd.f32 %v4898, 1.0
        %v4909 = vadd.f32 %v4900, 1.0
        %v4910 = vadd.f32 %v4902, 1.0
        %v4911 = vrcp.pop %v4903
        %v4912 = vmul.f32 %v4903, %v4911
        %v4913 = vsub.f32 1.0, %v4912
        %v4914 = vmul.f32 %v4911, %v4913
        %v4915 = vadd.f32 %v4911, %v4914
        %vm4916 = vweird.f32 %v4903
        %vm4917 = vweird.f32 %v4911
        %vm4918 = vmor %vm4916, %vm4917
        %v4919 = vsel %vm4918, %v4911, %v4915
        %v4920 = vand.u32 2147483647, %v4903
        %vm4921 = vcmp.eq.f32.partialorder %v4920, 8.507059e+37
        %v4922 = vand.u32 %v4903, 2147483648
        %v4923 = vor.u32 1.1754944e-38, %v4922
        %v4924 = vsel %vm4921, %v4923, %v4919
        %v4925 = vmul.f32 1.0, %v4924
        %v4926 = vrcp.pop %v4904
        %v4927 = vmul.f32 %v4904, %v4926
        %v4928 = vsub.f32 1.0, %v4927
        %v4929 = vmul.f32 %v4926, %v4928
        %v4930 = vadd.f32 %v4926, %v4929
        %vm4931 = vweird.f32 %v4904
        %vm4932 = vweird.f32 %v4926
        %vm4933 = vmor %vm4931, %vm4932
        %v4934 = vsel %vm4933, %v4926, %v4930
        %v4935 = vand.u32 2147483647, %v4904
        %vm4936 = vcmp.eq.f32.partialorder %v4935, 8.507059e+37
        %v4937 = vand.u32 %v4904, 2147483648
        %v4938 = vor.u32 1.1754944e-38, %v4937
        %v4939 = vsel %vm4936, %v4938, %v4934
        %v4940 = vmul.f32 1.0, %v4939
        %v4941 = vrcp.pop %v4905
        %v4942 = vmul.f32 %v4905, %v4941
        %v4943 = vsub.f32 1.0, %v4942
        %v4944 = vmul.f32 %v4941, %v4943
        %v4945 = vadd.f32 %v4941, %v4944
        %vm4946 = vweird.f32 %v4905
        %vm4947 = vweird.f32 %v4941
        %vm4948 = vmor %vm4946, %vm4947
        %v4949 = vsel %vm4948, %v4941, %v4945
        %v4950 = vand.u32 2147483647, %v4905
        %vm4951 = vcmp.eq.f32.partialorder %v4950, 8.507059e+37
        %v4952 = vand.u32 %v4905, 2147483648
        %v4953 = vor.u32 1.1754944e-38, %v4952
        %v4954 = vsel %vm4951, %v4953, %v4949
        %v4955 = vmul.f32 1.0, %v4954
        %v4956 = vrcp.pop %v4906
        %v4957 = vmul.f32 %v4906, %v4956
        %v4958 = vsub.f32 1.0, %v4957
        %v4959 = vmul.f32 %v4956, %v4958
        %v4960 = vadd.f32 %v4956, %v4959
        %vm4961 = vweird.f32 %v4906
        %vm4962 = vweird.f32 %v4956
        %vm4963 = vmor %vm4961, %vm4962
        %v4964 = vsel %vm4963, %v4956, %v4960
        %v4965 = vand.u32 2147483647, %v4906
        %vm4966 = vcmp.eq.f32.partialorder %v4965, 8.507059e+37
        %v4967 = vand.u32 %v4906, 2147483648
        %v4968 = vor.u32 1.1754944e-38, %v4967
        %v4969 = vsel %vm4966, %v4968, %v4964
        %v4970 = vmul.f32 1.0, %v4969
        %v4971 = vrcp.pop %v4907
        %v4972 = vmul.f32 %v4907, %v4971
        %v4973 = vsub.f32 1.0, %v4972
        %v4974 = vmul.f32 %v4971, %v4973
        %v4975 = vadd.f32 %v4971, %v4974
        %vm4976 = vweird.f32 %v4907
        %vm4977 = vweird.f32 %v4971
        %vm4978 = vmor %vm4976, %vm4977
        %v4979 = vsel %vm4978, %v4971, %v4975
        %v4980 = vand.u32 2147483647, %v4907
        %vm4981 = vcmp.eq.f32.partialorder %v4980, 8.507059e+37
        %v4982 = vand.u32 %v4907, 2147483648
        %v4983 = vor.u32 1.1754944e-38, %v4982
        %v4984 = vsel %vm4981, %v4983, %v4979
        %v4985 = vmul.f32 1.0, %v4984
        %v4986 = vrcp.pop %v4908
        %v4987 = vmul.f32 %v4908, %v4986
        %v4988 = vsub.f32 1.0, %v4987
        %v4989 = vmul.f32 %v4986, %v4988
        %v4990 = vadd.f32 %v4986, %v4989
        %vm4991 = vweird.f32 %v4908
        %vm4992 = vweird.f32 %v4986
        %vm4993 = vmor %vm4991, %vm4992
        %v4994 = vsel %vm4993, %v4986, %v4990
        %v4995 = vand.u32 2147483647, %v4908
        %vm4996 = vcmp.eq.f32.partialorder %v4995, 8.507059e+37
        %v4997 = vand.u32 %v4908, 2147483648
        %v4998 = vor.u32 1.1754944e-38, %v4997
        %v4999 = vsel %vm4996, %v4998, %v4994
        %v5000 = vmul.f32 1.0, %v4999
        %v5001 = vrcp.pop %v4909
        %v5002 = vmul.f32 %v4909, %v5001
        %v5003 = vsub.f32 1.0, %v5002
        %v5004 = vmul.f32 %v5001, %v5003
        %v5005 = vadd.f32 %v5001, %v5004
        %vm5006 = vweird.f32 %v4909
        %vm5007 = vweird.f32 %v5001
        %vm5008 = vmor %vm5006, %vm5007
        %v5009 = vsel %vm5008, %v5001, %v5005
        %v5010 = vand.u32 2147483647, %v4909
        %vm5011 = vcmp.eq.f32.partialorder %v5010, 8.507059e+37
        %v5012 = vand.u32 %v4909, 2147483648
        %v5013 = vor.u32 1.1754944e-38, %v5012
        %v5014 = vsel %vm5011, %v5013, %v5009
        %v5015 = vmul.f32 1.0, %v5014
        %v5016 = vrcp.pop %v4910
        %v5017 = vmul.f32 %v4910, %v5016
        %v5018 = vsub.f32 1.0, %v5017
        %v5019 = vmul.f32 %v5016, %v5018
        %v5020 = vadd.f32 %v5016, %v5019
        %vm5021 = vweird.f32 %v4910
        %vm5022 = vweird.f32 %v5016
        %vm5023 = vmor %vm5021, %vm5022
        %v5024 = vsel %vm5023, %v5016, %v5020
        %v5025 = vand.u32 2147483647, %v4910
        %vm5026 = vcmp.eq.f32.partialorder %v5025, 8.507059e+37
        %v5027 = vand.u32 %v4910, 2147483648
        %v5028 = vor.u32 1.1754944e-38, %v5027
        %v5029 = vsel %vm5026, %v5028, %v5024
        %v5030 = vmul.f32 1.0, %v5029
        %v5031 = vtanh.pop %v4871
        %v5032 = vtanh.pop %v4872
        %v5033 = vtanh.pop %v4873
        %v5034 = vtanh.pop %v4874
        %v5035 = vtanh.pop %v4875
        %v5036 = vtanh.pop %v4876
        %v5037 = vtanh.pop %v4877
        %v5038 = vtanh.pop %v4878
        %v5039 = vmul.f32 %v4925, %v4479
        %v5040 = vmul.f32 %v4940, %v4480
        %v5041 = vmul.f32 %v4955, %v4481
        %v5042 = vmul.f32 %v4970, %v4482
        %v5043 = vmul.f32 %v4985, %v4483
        %v5044 = vmul.f32 %v5000, %v4484
        %v5045 = vmul.f32 %v5015, %v4485
        %v5046 = vmul.f32 %v5030, %v4486
        %v5055 = vrot.slane %v5031, 2
        %v5056 = vrot.slane %v5032, 2
        %v5057 = vrot.slane %v5033, 2
        %v5058 = vrot.slane %v5034, 2
        %v5059 = vrot.slane %v5035, 2
        %v5060 = vrot.slane %v5036, 2
        %v5061 = vrot.slane %v5037, 2
        %v5062 = vrot.slane %v5038, 2
        %v5071 = vmul.f32 %v4925, %v5055
        %v5072 = vmul.f32 %v4940, %v5056
        %v5073 = vmul.f32 %v4955, %v5057
        %v5074 = vmul.f32 %v4970, %v5058
        %v5075 = vmul.f32 %v4985, %v5059
        %v5076 = vmul.f32 %v5000, %v5060
        %v5077 = vmul.f32 %v5015, %v5061
        %v5078 = vmul.f32 %v5030, %v5062
        %v5087 = vrot.slane %v5071, 7
        %v5088 = vrot.slane %v5072, 7
        %v5089 = vrot.slane %v5073, 7
        %v5090 = vrot.slane %v5074, 7
        %v5091 = vrot.slane %v5075, 7
        %v5092 = vrot.slane %v5076, 7
        %v5093 = vrot.slane %v5077, 7
        %v5094 = vrot.slane %v5078, 7
        %v5103 = vadd.f32 %v5039, %v5087
        %v5104 = vadd.f32 %v5040, %v5088
        %v5105 = vadd.f32 %v5041, %v5089
        %v5106 = vadd.f32 %v5042, %v5090
        %v5107 = vadd.f32 %v5043, %v5091
        %v5108 = vadd.f32 %v5044, %v5092
        %v5109 = vadd.f32 %v5045, %v5093
        %v5110 = vadd.f32 %v5046, %v5094
        %v5111 = vtanh.pop %v5103
        %v5112 = vtanh.pop %v5104
        %v5113 = vtanh.pop %v5105
        %v5114 = vtanh.pop %v5106
        %v5115 = vtanh.pop %v5107
        %v5116 = vtanh.pop %v5108
        %v5117 = vtanh.pop %v5109
        %v5118 = vtanh.pop %v5110
        %v5127 = vrot.slane %v5111, 6
        %v5128 = vrot.slane %v5112, 6
        %v5129 = vrot.slane %v5113, 6
        %v5130 = vrot.slane %v5114, 6
        %v5131 = vrot.slane %v5115, 6
        %v5132 = vrot.slane %v5116, 6
        %v5133 = vrot.slane %v5117, 6
        %v5134 = vrot.slane %v5118, 6
        %v5143 = vmul.f32 %v4925, %v5127
        %v5144 = vmul.f32 %v4940, %v5128
        %v5145 = vmul.f32 %v4955, %v5129
        %v5146 = vmul.f32 %v4970, %v5130
        %v5147 = vmul.f32 %v4985, %v5131
        %v5148 = vmul.f32 %v5000, %v5132
        %v5149 = vmul.f32 %v5015, %v5133
        %v5150 = vmul.f32 %v5030, %v5134
        %v5151 = vmul.f32 %v367, %v714
        %v5152 = vmul.f32 %v368, %v714
        %v5153 = vmul.f32 %v369, %v714
        %v5154 = vmul.f32 %v370, %v714
        %v5155 = vmul.f32 %v371, %v714
        %v5156 = vmul.f32 %v372, %v714
        %v5157 = vmul.f32 %v373, %v714
        %v5158 = vmul.f32 %v374, %v714
        %v5159 = vperm.slane %v4831, 3
        %v5160 = vperm.slane %v4832, 3
        %v5161 = vperm.slane %v4833, 3
        %v5162 = vperm.slane %v4834, 3
        %v5163 = vperm.slane %v4835, 3
        %v5164 = vperm.slane %v4836, 3
        %v5165 = vperm.slane %v4837, 3
        %v5166 = vperm.slane %v4838, 3
        %v5167 = vmul.f32 %v5159, %v1389
        %v5168 = vmul.f32 %v5160, %v1389
        %v5169 = vmul.f32 %v5161, %v1389
        %v5170 = vmul.f32 %v5162, %v1389
        %v5171 = vmul.f32 %v5163, %v1389
        %v5172 = vmul.f32 %v5164, %v1389
        %v5173 = vmul.f32 %v5165, %v1389
        %v5174 = vmul.f32 %v5166, %v1389
        %v5175 = vadd.f32 %v5151, %v5167
        %v5176 = vadd.f32 %v5152, %v5168
        %v5177 = vadd.f32 %v5153, %v5169
        %v5178 = vadd.f32 %v5154, %v5170
        %v5179 = vadd.f32 %v5155, %v5171
        %v5180 = vadd.f32 %v5156, %v5172
        %v5181 = vadd.f32 %v5157, %v5173
        %v5182 = vadd.f32 %v5158, %v5174
        %v5183 = vadd.f32 %v5175, %v749
        %v5184 = vadd.f32 %v5176, %v749
        %v5185 = vadd.f32 %v5177, %v749
        %v5186 = vadd.f32 %v5178, %v749
        %v5187 = vadd.f32 %v5179, %v749
        %v5188 = vadd.f32 %v5180, %v749
        %v5189 = vadd.f32 %v5181, %v749
        %v5190 = vadd.f32 %v5182, %v749
        %v5191 = vsub.f32 0.0, %v5183
        %v5192 = vsub.f32 0.0, %v5184
        %v5193 = vsub.f32 0.0, %v5185
        %v5194 = vsub.f32 0.0, %v5186
        %v5195 = vsub.f32 0.0, %v5187
        %v5196 = vsub.f32 0.0, %v5188
        %v5197 = vsub.f32 0.0, %v5189
        %v5198 = vsub.f32 0.0, %v5190
        %v5199 = vmul.f32 %v5191, 1.442695
        %v5200 = vpow.pop %v5199
        %v5201 = vmul.f32 %v5192, 1.442695
        %v5202 = vpow.pop %v5201
        %v5203 = vmul.f32 %v5193, 1.442695
        %v5204 = vpow.pop %v5203
        %v5205 = vmul.f32 %v5194, 1.442695
        %v5206 = vpow.pop %v5205
        %v5207 = vmul.f32 %v5195, 1.442695
        %v5208 = vpow.pop %v5207
        %v5209 = vmul.f32 %v5196, 1.442695
        %v5210 = vpow.pop %v5209
        %v5211 = vmul.f32 %v5197, 1.442695
        %v5212 = vpow.pop %v5211
        %v5213 = vmul.f32 %v5198, 1.442695
        %v5214 = vpow.pop %v5213
        %v5215 = vadd.f32 %v5200, 1.0
        %v5216 = vadd.f32 %v5202, 1.0
        %v5217 = vadd.f32 %v5204, 1.0
        %v5218 = vadd.f32 %v5206, 1.0
        %v5219 = vadd.f32 %v5208, 1.0
        %v5220 = vadd.f32 %v5210, 1.0
        %v5221 = vadd.f32 %v5212, 1.0
        %v5222 = vadd.f32 %v5214, 1.0
        %v5223 = vrcp.pop %v5215
        %v5224 = vmul.f32 %v5215, %v5223
        %v5225 = vsub.f32 1.0, %v5224
        %v5226 = vmul.f32 %v5223, %v5225
        %v5227 = vadd.f32 %v5223, %v5226
        %vm5228 = vweird.f32 %v5215
        %vm5229 = vweird.f32 %v5223
        %vm5230 = vmor %vm5228, %vm5229
        %v5231 = vsel %vm5230, %v5223, %v5227
        %v5232 = vand.u32 2147483647, %v5215
        %vm5233 = vcmp.eq.f32.partialorder %v5232, 8.507059e+37
        %v5234 = vand.u32 %v5215, 2147483648
        %v5235 = vor.u32 1.1754944e-38, %v5234
        %v5236 = vsel %vm5233, %v5235, %v5231
        %v5237 = vmul.f32 1.0, %v5236
        %v5238 = vrcp.pop %v5216
        %v5239 = vmul.f32 %v5216, %v5238
        %v5240 = vsub.f32 1.0, %v5239
        %v5241 = vmul.f32 %v5238, %v5240
        %v5242 = vadd.f32 %v5238, %v5241
        %vm5243 = vweird.f32 %v5216
        %vm5244 = vweird.f32 %v5238
        %vm5245 = vmor %vm5243, %vm5244
        %v5246 = vsel %vm5245, %v5238, %v5242
        %v5247 = vand.u32 2147483647, %v5216
        %vm5248 = vcmp.eq.f32.partialorder %v5247, 8.507059e+37
        %v5249 = vand.u32 %v5216, 2147483648
        %v5250 = vor.u32 1.1754944e-38, %v5249
        %v5251 = vsel %vm5248, %v5250, %v5246
        %v5252 = vmul.f32 1.0, %v5251
        %v5253 = vrcp.pop %v5217
        %v5254 = vmul.f32 %v5217, %v5253
        %v5255 = vsub.f32 1.0, %v5254
        %v5256 = vmul.f32 %v5253, %v5255
        %v5257 = vadd.f32 %v5253, %v5256
        %vm5258 = vweird.f32 %v5217
        %vm5259 = vweird.f32 %v5253
        %vm5260 = vmor %vm5258, %vm5259
        %v5261 = vsel %vm5260, %v5253, %v5257
        %v5262 = vand.u32 2147483647, %v5217
        %vm5263 = vcmp.eq.f32.partialorder %v5262, 8.507059e+37
        %v5264 = vand.u32 %v5217, 2147483648
        %v5265 = vor.u32 1.1754944e-38, %v5264
        %v5266 = vsel %vm5263, %v5265, %v5261
        %v5267 = vmul.f32 1.0, %v5266
        %v5268 = vrcp.pop %v5218
        %v5269 = vmul.f32 %v5218, %v5268
        %v5270 = vsub.f32 1.0, %v5269
        %v5271 = vmul.f32 %v5268, %v5270
        %v5272 = vadd.f32 %v5268, %v5271
        %vm5273 = vweird.f32 %v5218
        %vm5274 = vweird.f32 %v5268
        %vm5275 = vmor %vm5273, %vm5274
        %v5276 = vsel %vm5275, %v5268, %v5272
        %v5277 = vand.u32 2147483647, %v5218
        %vm5278 = vcmp.eq.f32.partialorder %v5277, 8.507059e+37
        %v5279 = vand.u32 %v5218, 2147483648
        %v5280 = vor.u32 1.1754944e-38, %v5279
        %v5281 = vsel %vm5278, %v5280, %v5276
        %v5282 = vmul.f32 1.0, %v5281
        %v5283 = vrcp.pop %v5219
        %v5284 = vmul.f32 %v5219, %v5283
        %v5285 = vsub.f32 1.0, %v5284
        %v5286 = vmul.f32 %v5283, %v5285
        %v5287 = vadd.f32 %v5283, %v5286
        %vm5288 = vweird.f32 %v5219
        %vm5289 = vweird.f32 %v5283
        %vm5290 = vmor %vm5288, %vm5289
        %v5291 = vsel %vm5290, %v5283, %v5287
        %v5292 = vand.u32 2147483647, %v5219
        %vm5293 = vcmp.eq.f32.partialorder %v5292, 8.507059e+37
        %v5294 = vand.u32 %v5219, 2147483648
        %v5295 = vor.u32 1.1754944e-38, %v5294
        %v5296 = vsel %vm5293, %v5295, %v5291
        %v5297 = vmul.f32 1.0, %v5296
        %v5298 = vrcp.pop %v5220
        %v5299 = vmul.f32 %v5220, %v5298
        %v5300 = vsub.f32 1.0, %v5299
        %v5301 = vmul.f32 %v5298, %v5300
        %v5302 = vadd.f32 %v5298, %v5301
        %vm5303 = vweird.f32 %v5220
        %vm5304 = vweird.f32 %v5298
        %vm5305 = vmor %vm5303, %vm5304
        %v5306 = vsel %vm5305, %v5298, %v5302
        %v5307 = vand.u32 2147483647, %v5220
        %vm5308 = vcmp.eq.f32.partialorder %v5307, 8.507059e+37
        %v5309 = vand.u32 %v5220, 2147483648
        %v5310 = vor.u32 1.1754944e-38, %v5309
        %v5311 = vsel %vm5308, %v5310, %v5306
        %v5312 = vmul.f32 1.0, %v5311
        %v5313 = vrcp.pop %v5221
        %v5314 = vmul.f32 %v5221, %v5313
        %v5315 = vsub.f32 1.0, %v5314
        %v5316 = vmul.f32 %v5313, %v5315
        %v5317 = vadd.f32 %v5313, %v5316
        %vm5318 = vweird.f32 %v5221
        %vm5319 = vweird.f32 %v5313
        %vm5320 = vmor %vm5318, %vm5319
        %v5321 = vsel %vm5320, %v5313, %v5317
        %v5322 = vand.u32 2147483647, %v5221
        %vm5323 = vcmp.eq.f32.partialorder %v5322, 8.507059e+37
        %v5324 = vand.u32 %v5221, 2147483648
        %v5325 = vor.u32 1.1754944e-38, %v5324
        %v5326 = vsel %vm5323, %v5325, %v5321
        %v5327 = vmul.f32 1.0, %v5326
        %v5328 = vrcp.pop %v5222
        %v5329 = vmul.f32 %v5222, %v5328
        %v5330 = vsub.f32 1.0, %v5329
        %v5331 = vmul.f32 %v5328, %v5330
        %v5332 = vadd.f32 %v5328, %v5331
        %vm5333 = vweird.f32 %v5222
        %vm5334 = vweird.f32 %v5328
        %vm5335 = vmor %vm5333, %vm5334
        %v5336 = vsel %vm5335, %v5328, %v5332
        %v5337 = vand.u32 2147483647, %v5222
        %vm5338 = vcmp.eq.f32.partialorder %v5337, 8.507059e+37
        %v5339 = vand.u32 %v5222, 2147483648
        %v5340 = vor.u32 1.1754944e-38, %v5339
        %v5341 = vsel %vm5338, %v5340, %v5336
        %v5342 = vmul.f32 1.0, %v5341
        %v5343 = vtanh.pop %v5183
        %v5344 = vtanh.pop %v5184
        %v5345 = vtanh.pop %v5185
        %v5346 = vtanh.pop %v5186
        %v5347 = vtanh.pop %v5187
        %v5348 = vtanh.pop %v5188
        %v5349 = vtanh.pop %v5189
        %v5350 = vtanh.pop %v5190
        %v5351 = vmul.f32 %v5237, %v4791
        %v5352 = vmul.f32 %v5252, %v4792
        %v5353 = vmul.f32 %v5267, %v4793
        %v5354 = vmul.f32 %v5282, %v4794
        %v5355 = vmul.f32 %v5297, %v4795
        %v5356 = vmul.f32 %v5312, %v4796
        %v5357 = vmul.f32 %v5327, %v4797
        %v5358 = vmul.f32 %v5342, %v4798
        %v5367 = vrot.slane %v5343, 2
        %v5368 = vrot.slane %v5344, 2
        %v5369 = vrot.slane %v5345, 2
        %v5370 = vrot.slane %v5346, 2
        %v5371 = vrot.slane %v5347, 2
        %v5372 = vrot.slane %v5348, 2
        %v5373 = vrot.slane %v5349, 2
        %v5374 = vrot.slane %v5350, 2
        %v5383 = vmul.f32 %v5237, %v5367
        %v5384 = vmul.f32 %v5252, %v5368
        %v5385 = vmul.f32 %v5267, %v5369
        %v5386 = vmul.f32 %v5282, %v5370
        %v5387 = vmul.f32 %v5297, %v5371
        %v5388 = vmul.f32 %v5312, %v5372
        %v5389 = vmul.f32 %v5327, %v5373
        %v5390 = vmul.f32 %v5342, %v5374
        %v5399 = vrot.slane %v5383, 7
        %v5400 = vrot.slane %v5384, 7
        %v5401 = vrot.slane %v5385, 7
        %v5402 = vrot.slane %v5386, 7
        %v5403 = vrot.slane %v5387, 7
        %v5404 = vrot.slane %v5388, 7
        %v5405 = vrot.slane %v5389, 7
        %v5406 = vrot.slane %v5390, 7
        %v5415 = vadd.f32 %v5351, %v5399
        %v5416 = vadd.f32 %v5352, %v5400
        %v5417 = vadd.f32 %v5353, %v5401
        %v5418 = vadd.f32 %v5354, %v5402
        %v5419 = vadd.f32 %v5355, %v5403
        %v5420 = vadd.f32 %v5356, %v5404
        %v5421 = vadd.f32 %v5357, %v5405
        %v5422 = vadd.f32 %v5358, %v5406
        %v5423 = vtanh.pop %v5415
        %v5424 = vtanh.pop %v5416
        %v5425 = vtanh.pop %v5417
        %v5426 = vtanh.pop %v5418
        %v5427 = vtanh.pop %v5419
        %v5428 = vtanh.pop %v5420
        %v5429 = vtanh.pop %v5421
        %v5430 = vtanh.pop %v5422
        %v5439 = vrot.slane %v5423, 6
        %v5440 = vrot.slane %v5424, 6
        %v5441 = vrot.slane %v5425, 6
        %v5442 = vrot.slane %v5426, 6
        %v5443 = vrot.slane %v5427, 6
        %v5444 = vrot.slane %v5428, 6
        %v5445 = vrot.slane %v5429, 6
        %v5446 = vrot.slane %v5430, 6
        %v5455 = vmul.f32 %v5237, %v5439
        %v5456 = vmul.f32 %v5252, %v5440
        %v5457 = vmul.f32 %v5267, %v5441
        %v5458 = vmul.f32 %v5282, %v5442
        %v5459 = vmul.f32 %v5297, %v5443
        %v5460 = vmul.f32 %v5312, %v5444
        %v5461 = vmul.f32 %v5327, %v5445
        %v5462 = vmul.f32 %v5342, %v5446
        %v5463 = vlaneseq
        %v5464 = vand.u32 %v5463, 127
        %vm5465 = vcmp.eq.s32.totalorder %v5464, 0
        %v5466 = vadd.f32 %v691, %v5455
        %v5467 = vadd.f32 %v692, %v5456
        %v5468 = vadd.f32 %v693, %v5457
        %v5469 = vadd.f32 %v694, %v5458
        %v5470 = vadd.f32 %v695, %v5459
        %v5471 = vadd.f32 %v696, %v5460
        %v5472 = vadd.f32 %v697, %v5461
        %v5473 = vadd.f32 %v698, %v5462
        %v5474 = vsel %vm5465, 1, 0
        %vm5475 = vcmp.eq.s32.totalorder %v5474, 1
        %v5476 = vperm.slane %v5466, 3
        %v5477 = vperm.slane %v5467, 3
        %v5478 = vperm.slane %v5468, 3
        %v5479 = vperm.slane %v5469, 3
        %v5480 = vperm.slane %v5470, 3
        %v5481 = vperm.slane %v5471, 3
        %v5482 = vperm.slane %v5472, 3
        %v5483 = vperm.slane %v5473, 3
        %5492 = vset.pattern.permute.xlu0 0
        %5493 = vperm.xlu0 %5492, %v5476
        %v5494 = vpop.permute.xlu0 %5493
        %5495 = vset.pattern.permute.xlu0 0
        %5496 = vperm.xlu0 %5495, %v5477
        %v5497 = vpop.permute.xlu0 %5496
        %5498 = vset.pattern.permute.xlu0 0
        %5499 = vperm.xlu0 %5498, %v5478
        %v5500 = vpop.permute.xlu0 %5499
        %5501 = vset.pattern.permute.xlu0 0
        %5502 = vperm.xlu0 %5501, %v5479
        %v5503 = vpop.permute.xlu0 %5502
        %5504 = vset.pattern.permute.xlu0 0
        %5505 = vperm.xlu0 %5504, %v5480
        %v5506 = vpop.permute.xlu0 %5505
        %5507 = vset.pattern.permute.xlu0 0
        %5508 = vperm.xlu0 %5507, %v5481
        %v5509 = vpop.permute.xlu0 %5508
        %5510 = vset.pattern.permute.xlu0 0
        %5511 = vperm.xlu0 %5510, %v5482
        %v5512 = vpop.permute.xlu0 %5511
        %5513 = vset.pattern.permute.xlu0 0
        %5514 = vperm.xlu0 %5513, %v5483
        %v5515 = vpop.permute.xlu0 %5514
        %vm5516 = vcmask 1041409
        %v5517 = vsel %vm5516, %v5497, %v5494
        %vm5518 = vcmask 1042434
        %v5519 = vsel %vm5518, %v5500, %v5517
        %vm5520 = vcmask 1043459
        %v5521 = vsel %vm5520, %v5503, %v5519
        %vm5522 = vcmask 1044484
        %v5523 = vsel %vm5522, %v5506, %v5521
        %vm5524 = vcmask 1045509
        %v5525 = vsel %vm5524, %v5509, %v5523
        %vm5526 = vcmask 1046534
        %v5527 = vsel %vm5526, %v5512, %v5525
        %vm5528 = vcmask 1047559
        %v5529 = vsel %vm5528, %v5515, %v5527
        %v5531 = vsel %vm5475, %v5529, 0.0
        %v5532 = vadd.f32 %v5531, 0.0
        %vm5533 = vcmp.eq.s32.totalorder %v5464, 1
        %v5534 = vadd.f32 %v1351, %v4831
        %v5535 = vadd.f32 %v1352, %v4832
        %v5536 = vadd.f32 %v1353, %v4833
        %v5537 = vadd.f32 %v1354, %v4834
        %v5538 = vadd.f32 %v1355, %v4835
        %v5539 = vadd.f32 %v1356, %v4836
        %v5540 = vadd.f32 %v1357, %v4837
        %v5541 = vadd.f32 %v1358, %v4838
        %v5542 = vsel %vm5533, 1, 0
        %vm5543 = vcmp.eq.s32.totalorder %v5542, 1
        %v5544 = vperm.slane %v5534, 3
        %v5545 = vperm.slane %v5535, 3
        %v5546 = vperm.slane %v5536, 3
        %v5547 = vperm.slane %v5537, 3
        %v5548 = vperm.slane %v5538, 3
        %v5549 = vperm.slane %v5539, 3
        %v5550 = vperm.slane %v5540, 3
        %v5551 = vperm.slane %v5541, 3
        %5560 = vset.pattern.permute.xlu0 0
        %5561 = vperm.xlu0 %5560, %v5544
        %v5562 = vpop.permute.xlu0 %5561
        %5563 = vset.pattern.permute.xlu0 0
        %5564 = vperm.xlu0 %5563, %v5545
        %v5565 = vpop.permute.xlu0 %5564
        %5566 = vset.pattern.permute.xlu0 0
        %5567 = vperm.xlu0 %5566, %v5546
        %v5568 = vpop.permute.xlu0 %5567
        %5569 = vset.pattern.permute.xlu0 0
        %5570 = vperm.xlu0 %5569, %v5547
        %v5571 = vpop.permute.xlu0 %5570
        %5572 = vset.pattern.permute.xlu0 0
        %5573 = vperm.xlu0 %5572, %v5548
        %v5574 = vpop.permute.xlu0 %5573
        %5575 = vset.pattern.permute.xlu0 0
        %5576 = vperm.xlu0 %5575, %v5549
        %v5577 = vpop.permute.xlu0 %5576
        %5578 = vset.pattern.permute.xlu0 0
        %5579 = vperm.xlu0 %5578, %v5550
        %v5580 = vpop.permute.xlu0 %5579
        %5581 = vset.pattern.permute.xlu0 0
        %5582 = vperm.xlu0 %5581, %v5551
        %v5583 = vpop.permute.xlu0 %5582
        %v5584 = vsel %vm5516, %v5565, %v5562
        %v5585 = vsel %vm5518, %v5568, %v5584
        %v5586 = vsel %vm5520, %v5571, %v5585
        %v5587 = vsel %vm5522, %v5574, %v5586
        %v5588 = vsel %vm5524, %v5577, %v5587
        %v5589 = vsel %vm5526, %v5580, %v5588
        %v5590 = vsel %vm5528, %v5583, %v5589
        %v5592 = vsel %vm5543, %v5590, 0.0
        %v5593 = vadd.f32 %v5532, %v5592
        %vm5594 = vcmp.eq.s32.totalorder %v5464, 2
        %v5595 = vadd.f32 %v1999, %v4207
        %v5596 = vadd.f32 %v2000, %v4208
        %v5597 = vadd.f32 %v2001, %v4209
        %v5598 = vadd.f32 %v2002, %v4210
        %v5599 = vadd.f32 %v2003, %v4211
        %v5600 = vadd.f32 %v2004, %v4212
        %v5601 = vadd.f32 %v2005, %v4213
        %v5602 = vadd.f32 %v2006, %v4214
        %v5603 = vsel %vm5594, 1, 0
        %vm5604 = vcmp.eq.s32.totalorder %v5603, 1
        %v5605 = vperm.slane %v5595, 3
        %v5606 = vperm.slane %v5596, 3
        %v5607 = vperm.slane %v5597, 3
        %v5608 = vperm.slane %v5598, 3
        %v5609 = vperm.slane %v5599, 3
        %v5610 = vperm.slane %v5600, 3
        %v5611 = vperm.slane %v5601, 3
        %v5612 = vperm.slane %v5602, 3
        %5621 = vset.pattern.permute.xlu0 0
        %5622 = vperm.xlu0 %5621, %v5605
        %v5623 = vpop.permute.xlu0 %5622
        %5624 = vset.pattern.permute.xlu0 0
        %5625 = vperm.xlu0 %5624, %v5606
        %v5626 = vpop.permute.xlu0 %5625
        %5627 = vset.pattern.permute.xlu0 0
        %5628 = vperm.xlu0 %5627, %v5607
        %v5629 = vpop.permute.xlu0 %5628
        %5630 = vset.pattern.permute.xlu0 0
        %5631 = vperm.xlu0 %5630, %v5608
        %v5632 = vpop.permute.xlu0 %5631
        %5633 = vset.pattern.permute.xlu0 0
        %5634 = vperm.xlu0 %5633, %v5609
        %v5635 = vpop.permute.xlu0 %5634
        %5636 = vset.pattern.permute.xlu0 0
        %5637 = vperm.xlu0 %5636, %v5610
        %v5638 = vpop.permute.xlu0 %5637
        %5639 = vset.pattern.permute.xlu0 0
        %5640 = vperm.xlu0 %5639, %v5611
        %v5641 = vpop.permute.xlu0 %5640
        %5642 = vset.pattern.permute.xlu0 0
        %5643 = vperm.xlu0 %5642, %v5612
        %v5644 = vpop.permute.xlu0 %5643
        %v5645 = vsel %vm5516, %v5626, %v5623
        %v5646 = vsel %vm5518, %v5629, %v5645
        %v5647 = vsel %vm5520, %v5632, %v5646
        %v5648 = vsel %vm5522, %v5635, %v5647
        %v5649 = vsel %vm5524, %v5638, %v5648
        %v5650 = vsel %vm5526, %v5641, %v5649
        %v5651 = vsel %vm5528, %v5644, %v5650
        %v5653 = vsel %vm5604, %v5651, 0.0
        %v5654 = vadd.f32 %v5593, %v5653
        %vm5655 = vcmp.eq.s32.totalorder %v5464, 3
        %v5656 = vadd.f32 %v2639, %v3583
        %v5657 = vadd.f32 %v2640, %v3584
        %v5658 = vadd.f32 %v2641, %v3585
        %v5659 = vadd.f32 %v2642, %v3586
        %v5660 = vadd.f32 %v2643, %v3587
        %v5661 = vadd.f32 %v2644, %v3588
        %v5662 = vadd.f32 %v2645, %v3589
        %v5663 = vadd.f32 %v2646, %v3590
        %v5664 = vsel %vm5655, 1, 0
        %vm5665 = vcmp.eq.s32.totalorder %v5664, 1
        %v5666 = vperm.slane %v5656, 3
        %v5667 = vperm.slane %v5657, 3
        %v5668 = vperm.slane %v5658, 3
        %v5669 = vperm.slane %v5659, 3
        %v5670 = vperm.slane %v5660, 3
        %v5671 = vperm.slane %v5661, 3
        %v5672 = vperm.slane %v5662, 3
        %v5673 = vperm.slane %v5663, 3
        %5682 = vset.pattern.permute.xlu0 0
        %5683 = vperm.xlu0 %5682, %v5666
        %v5684 = vpop.permute.xlu0 %5683
        %5685 = vset.pattern.permute.xlu0 0
        %5686 = vperm.xlu0 %5685, %v5667
        %v5687 = vpop.permute.xlu0 %5686
        %5688 = vset.pattern.permute.xlu0 0
        %5689 = vperm.xlu0 %5688, %v5668
        %v5690 = vpop.permute.xlu0 %5689
        %5691 = vset.pattern.permute.xlu0 0
        %5692 = vperm.xlu0 %5691, %v5669
        %v5693 = vpop.permute.xlu0 %5692
        %5694 = vset.pattern.permute.xlu0 0
        %5695 = vperm.xlu0 %5694, %v5670
        %v5696 = vpop.permute.xlu0 %5695
        %5697 = vset.pattern.permute.xlu0 0
        %5698 = vperm.xlu0 %5697, %v5671
        %v5699 = vpop.permute.xlu0 %5698
        %5700 = vset.pattern.permute.xlu0 0
        %5701 = vperm.xlu0 %5700, %v5672
        %v5702 = vpop.permute.xlu0 %5701
        %5703 = vset.pattern.permute.xlu0 0
        %5704 = vperm.xlu0 %5703, %v5673
        %v5705 = vpop.permute.xlu0 %5704
        %v5706 = vsel %vm5516, %v5687, %v5684
        %v5707 = vsel %vm5518, %v5690, %v5706
        %v5708 = vsel %vm5520, %v5693, %v5707
        %v5709 = vsel %vm5522, %v5696, %v5708
        %v5710 = vsel %vm5524, %v5699, %v5709
        %v5711 = vsel %vm5526, %v5702, %v5710
        %v5712 = vsel %vm5528, %v5705, %v5711
        %v5714 = vsel %vm5665, %v5712, 0.0
        %v5715 = vadd.f32 %v5654, %v5714
        %vm5716 = vcmp.eq.s32.totalorder %v5464, 4
        %v5717 = vadd.f32 %v3271, %v2959
        %v5718 = vadd.f32 %v3272, %v2960
        %v5719 = vadd.f32 %v3273, %v2961
        %v5720 = vadd.f32 %v3274, %v2962
        %v5721 = vadd.f32 %v3275, %v2963
        %v5722 = vadd.f32 %v3276, %v2964
        %v5723 = vadd.f32 %v3277, %v2965
        %v5724 = vadd.f32 %v3278, %v2966
        %v5725 = vsel %vm5716, 1, 0
        %vm5726 = vcmp.eq.s32.totalorder %v5725, 1
        %v5727 = vperm.slane %v5717, 3
        %v5728 = vperm.slane %v5718, 3
        %v5729 = vperm.slane %v5719, 3
        %v5730 = vperm.slane %v5720, 3
        %v5731 = vperm.slane %v5721, 3
        %v5732 = vperm.slane %v5722, 3
        %v5733 = vperm.slane %v5723, 3
        %v5734 = vperm.slane %v5724, 3
        %5743 = vset.pattern.permute.xlu0 0
        %5744 = vperm.xlu0 %5743, %v5727
        %v5745 = vpop.permute.xlu0 %5744
        %5746 = vset.pattern.permute.xlu0 0
        %5747 = vperm.xlu0 %5746, %v5728
        %v5748 = vpop.permute.xlu0 %5747
        %5749 = vset.pattern.permute.xlu0 0
        %5750 = vperm.xlu0 %5749, %v5729
        %v5751 = vpop.permute.xlu0 %5750
        %5752 = vset.pattern.permute.xlu0 0
        %5753 = vperm.xlu0 %5752, %v5730
        %v5754 = vpop.permute.xlu0 %5753
        %5755 = vset.pattern.permute.xlu0 0
        %5756 = vperm.xlu0 %5755, %v5731
        %v5757 = vpop.permute.xlu0 %5756
        %5758 = vset.pattern.permute.xlu0 0
        %5759 = vperm.xlu0 %5758, %v5732
        %v5760 = vpop.permute.xlu0 %5759
        %5761 = vset.pattern.permute.xlu0 0
        %5762 = vperm.xlu0 %5761, %v5733
        %v5763 = vpop.permute.xlu0 %5762
        %5764 = vset.pattern.permute.xlu0 0
        %5765 = vperm.xlu0 %5764, %v5734
        %v5766 = vpop.permute.xlu0 %5765
        %v5767 = vsel %vm5516, %v5748, %v5745
        %v5768 = vsel %vm5518, %v5751, %v5767
        %v5769 = vsel %vm5520, %v5754, %v5768
        %v5770 = vsel %vm5522, %v5757, %v5769
        %v5771 = vsel %vm5524, %v5760, %v5770
        %v5772 = vsel %vm5526, %v5763, %v5771
        %v5773 = vsel %vm5528, %v5766, %v5772
        %v5775 = vsel %vm5726, %v5773, 0.0
        %v5776 = vadd.f32 %v5715, %v5775
        %vm5777 = vcmp.eq.s32.totalorder %v5464, 5
        %v5778 = vadd.f32 %v3895, %v2319
        %v5779 = vadd.f32 %v3896, %v2320
        %v5780 = vadd.f32 %v3897, %v2321
        %v5781 = vadd.f32 %v3898, %v2322
        %v5782 = vadd.f32 %v3899, %v2323
        %v5783 = vadd.f32 %v3900, %v2324
        %v5784 = vadd.f32 %v3901, %v2325
        %v5785 = vadd.f32 %v3902, %v2326
        %v5786 = vsel %vm5777, 1, 0
        %vm5787 = vcmp.eq.s32.totalorder %v5786, 1
        %v5788 = vperm.slane %v5778, 3
        %v5789 = vperm.slane %v5779, 3
        %v5790 = vperm.slane %v5780, 3
        %v5791 = vperm.slane %v5781, 3
        %v5792 = vperm.slane %v5782, 3
        %v5793 = vperm.slane %v5783, 3
        %v5794 = vperm.slane %v5784, 3
        %v5795 = vperm.slane %v5785, 3
        %5804 = vset.pattern.permute.xlu0 0
        %5805 = vperm.xlu0 %5804, %v5788
        %v5806 = vpop.permute.xlu0 %5805
        %5807 = vset.pattern.permute.xlu0 0
        %5808 = vperm.xlu0 %5807, %v5789
        %v5809 = vpop.permute.xlu0 %5808
        %5810 = vset.pattern.permute.xlu0 0
        %5811 = vperm.xlu0 %5810, %v5790
        %v5812 = vpop.permute.xlu0 %5811
        %5813 = vset.pattern.permute.xlu0 0
        %5814 = vperm.xlu0 %5813, %v5791
        %v5815 = vpop.permute.xlu0 %5814
        %5816 = vset.pattern.permute.xlu0 0
        %5817 = vperm.xlu0 %5816, %v5792
        %v5818 = vpop.permute.xlu0 %5817
        %5819 = vset.pattern.permute.xlu0 0
        %5820 = vperm.xlu0 %5819, %v5793
        %v5821 = vpop.permute.xlu0 %5820
        %5822 = vset.pattern.permute.xlu0 0
        %5823 = vperm.xlu0 %5822, %v5794
        %v5824 = vpop.permute.xlu0 %5823
        %5825 = vset.pattern.permute.xlu0 0
        %5826 = vperm.xlu0 %5825, %v5795
        %v5827 = vpop.permute.xlu0 %5826
        %v5828 = vsel %vm5516, %v5809, %v5806
        %v5829 = vsel %vm5518, %v5812, %v5828
        %v5830 = vsel %vm5520, %v5815, %v5829
        %v5831 = vsel %vm5522, %v5818, %v5830
        %v5832 = vsel %vm5524, %v5821, %v5831
        %v5833 = vsel %vm5526, %v5824, %v5832
        %v5834 = vsel %vm5528, %v5827, %v5833
        %v5836 = vsel %vm5787, %v5834, 0.0
        %v5837 = vadd.f32 %v5776, %v5836
        %vm5838 = vcmp.eq.s32.totalorder %v5464, 6
        %v5839 = vadd.f32 %v4519, %v1679
        %v5840 = vadd.f32 %v4520, %v1680
        %v5841 = vadd.f32 %v4521, %v1681
        %v5842 = vadd.f32 %v4522, %v1682
        %v5843 = vadd.f32 %v4523, %v1683
        %v5844 = vadd.f32 %v4524, %v1684
        %v5845 = vadd.f32 %v4525, %v1685
        %v5846 = vadd.f32 %v4526, %v1686
        %v5847 = vsel %vm5838, 1, 0
        %vm5848 = vcmp.eq.s32.totalorder %v5847, 1
        %v5849 = vperm.slane %v5839, 3
        %v5850 = vperm.slane %v5840, 3
        %v5851 = vperm.slane %v5841, 3
        %v5852 = vperm.slane %v5842, 3
        %v5853 = vperm.slane %v5843, 3
        %v5854 = vperm.slane %v5844, 3
        %v5855 = vperm.slane %v5845, 3
        %v5856 = vperm.slane %v5846, 3
        %5865 = vset.pattern.permute.xlu0 0
        %5866 = vperm.xlu0 %5865, %v5849
        %v5867 = vpop.permute.xlu0 %5866
        %5868 = vset.pattern.permute.xlu0 0
        %5869 = vperm.xlu0 %5868, %v5850
        %v5870 = vpop.permute.xlu0 %5869
        %5871 = vset.pattern.permute.xlu0 0
        %5872 = vperm.xlu0 %5871, %v5851
        %v5873 = vpop.permute.xlu0 %5872
        %5874 = vset.pattern.permute.xlu0 0
        %5875 = vperm.xlu0 %5874, %v5852
        %v5876 = vpop.permute.xlu0 %5875
        %5877 = vset.pattern.permute.xlu0 0
        %5878 = vperm.xlu0 %5877, %v5853
        %v5879 = vpop.permute.xlu0 %5878
        %5880 = vset.pattern.permute.xlu0 0
        %5881 = vperm.xlu0 %5880, %v5854
        %v5882 = vpop.permute.xlu0 %5881
        %5883 = vset.pattern.permute.xlu0 0
        %5884 = vperm.xlu0 %5883, %v5855
        %v5885 = vpop.permute.xlu0 %5884
        %5886 = vset.pattern.permute.xlu0 0
        %5887 = vperm.xlu0 %5886, %v5856
        %v5888 = vpop.permute.xlu0 %5887
        %v5889 = vsel %vm5516, %v5870, %v5867
        %v5890 = vsel %vm5518, %v5873, %v5889
        %v5891 = vsel %vm5520, %v5876, %v5890
        %v5892 = vsel %vm5522, %v5879, %v5891
        %v5893 = vsel %vm5524, %v5882, %v5892
        %v5894 = vsel %vm5526, %v5885, %v5893
        %v5895 = vsel %vm5528, %v5888, %v5894
        %v5897 = vsel %vm5848, %v5895, 0.0
        %v5898 = vadd.f32 %v5837, %v5897
        %vm5899 = vcmp.eq.s32.totalorder %v5464, 7
        %v5900 = vadd.f32 %v5143, %v1023
        %v5901 = vadd.f32 %v5144, %v1024
        %v5902 = vadd.f32 %v5145, %v1025
        %v5903 = vadd.f32 %v5146, %v1026
        %v5904 = vadd.f32 %v5147, %v1027
        %v5905 = vadd.f32 %v5148, %v1028
        %v5906 = vadd.f32 %v5149, %v1029
        %v5907 = vadd.f32 %v5150, %v1030
        %v5908 = vsel %vm5899, 1, 0
        %vm5909 = vcmp.eq.s32.totalorder %v5908, 1
        %v5910 = vperm.slane %v5900, 3
        %v5911 = vperm.slane %v5901, 3
        %v5912 = vperm.slane %v5902, 3
        %v5913 = vperm.slane %v5903, 3
        %v5914 = vperm.slane %v5904, 3
        %v5915 = vperm.slane %v5905, 3
        %v5916 = vperm.slane %v5906, 3
        %v5917 = vperm.slane %v5907, 3
        %5926 = vset.pattern.permute.xlu0 0
        %5927 = vperm.xlu0 %5926, %v5910
        %v5928 = vpop.permute.xlu0 %5927
        %5929 = vset.pattern.permute.xlu0 0
        %5930 = vperm.xlu0 %5929, %v5911
        %v5931 = vpop.permute.xlu0 %5930
        %5932 = vset.pattern.permute.xlu0 0
        %5933 = vperm.xlu0 %5932, %v5912
        %v5934 = vpop.permute.xlu0 %5933
        %5935 = vset.pattern.permute.xlu0 0
        %5936 = vperm.xlu0 %5935, %v5913
        %v5937 = vpop.permute.xlu0 %5936
        %5938 = vset.pattern.permute.xlu0 0
        %5939 = vperm.xlu0 %5938, %v5914
        %v5940 = vpop.permute.xlu0 %5939
        %5941 = vset.pattern.permute.xlu0 0
        %5942 = vperm.xlu0 %5941, %v5915
        %v5943 = vpop.permute.xlu0 %5942
        %5944 = vset.pattern.permute.xlu0 0
        %5945 = vperm.xlu0 %5944, %v5916
        %v5946 = vpop.permute.xlu0 %5945
        %5947 = vset.pattern.permute.xlu0 0
        %5948 = vperm.xlu0 %5947, %v5917
        %v5949 = vpop.permute.xlu0 %5948
        %v5950 = vsel %vm5516, %v5931, %v5928
        %v5951 = vsel %vm5518, %v5934, %v5950
        %v5952 = vsel %vm5520, %v5937, %v5951
        %v5953 = vsel %vm5522, %v5940, %v5952
        %v5954 = vsel %vm5524, %v5943, %v5953
        %v5955 = vsel %vm5526, %v5946, %v5954
        %v5956 = vsel %vm5528, %v5949, %v5955
        %v5958 = vsel %vm5909, %v5956, 0.0
        %v5959 = vadd.f32 %v5898, %v5958
        %v5960 = vld [vmem:[%s323] sm:$0xff]
        %vm5961 = vcmp.ne.s32.totalorder %v5960, 0
        %v5962 = vsel %vm5961, %v5959, -1e+30
        %vm5963 = vcmask 64512
        %v5964 = vsel %vm5963, %v5962, -inf
        %5965 = vmax.xlane.f32.xlu0 %v5964
        %v5966 = vpop.xlane.xlu0 %5965
        %v5967 = vsub.f32 %v5962, %v5966
        %v5968 = vmul.f32 %v5967, 1.442695
        %v5969 = vpow.pop %v5968
        %v5970 = vsel %vm5963, %v5969, 0.0
        %5971 = vadd.xlane.f32.xlu0 %v5970
        %v5972 = vpop.xlane.xlu0 %5971
        %v5973 = vrcp.pop %v5972
        %v5974 = vmul.f32 %v5972, %v5973
        %v5975 = vsub.f32 1.0, %v5974
        %v5976 = vmul.f32 %v5973, %v5975
        %v5977 = vadd.f32 %v5973, %v5976
        %vm5978 = vweird.f32 %v5972
        %vm5979 = vweird.f32 %v5973
        %vm5980 = vmor %vm5978, %vm5979
        %v5981 = vsel %vm5980, %v5973, %v5977
        %v5982 = vand.u32 2147483647, %v5972
        %vm5983 = vcmp.eq.f32.partialorder %v5982, 8.507059e+37
        %v5984 = vand.u32 %v5972, 2147483648
        %v5985 = vor.u32 1.1754944e-38, %v5984
        %v5986 = vsel %vm5983, %v5985, %v5981
        %v5987 = vmul.f32 %v5969, %v5986
        %5988 = vst.msk [vmem:[%s327] sm:$0xff] %vm5963, %v5987
        %v5989 = vperm.slane %v5987, 0
        %v5990 = vlaneseq
        %v5991 = vshrl.u32 %v5990, 7
        %5993 = vset.pattern.permute.xlu0 %v5991
        %5994 = vperm.xlu0 %5993, %v5989
        %v5995 = vpop.permute.xlu0 %5994
        %v5996 = vperm.slane %v5987, 1
        %v5997 = vlaneseq
        %v5998 = vshrl.u32 %v5997, 7
        %6000 = vset.pattern.permute.xlu0 %v5998
        %6001 = vperm.xlu0 %6000, %v5996
        %v6002 = vpop.permute.xlu0 %6001
        %v6003 = vperm.slane %v5987, 2
        %v6004 = vlaneseq
        %v6005 = vshrl.u32 %v6004, 7
        %6007 = vset.pattern.permute.xlu0 %v6005
        %6008 = vperm.xlu0 %6007, %v6003
        %v6009 = vpop.permute.xlu0 %6008
        %v6010 = vperm.slane %v5987, 3
        %v6011 = vlaneseq
        %v6012 = vshrl.u32 %v6011, 7
        %6014 = vset.pattern.permute.xlu0 %v6012
        %6015 = vperm.xlu0 %6014, %v6010
        %v6016 = vpop.permute.xlu0 %6015
        %v6017 = vperm.slane %v5987, 4
        %v6018 = vlaneseq
        %v6019 = vshrl.u32 %v6018, 7
        %6021 = vset.pattern.permute.xlu0 %v6019
        %6022 = vperm.xlu0 %6021, %v6017
        %v6023 = vpop.permute.xlu0 %6022
        %v6024 = vperm.slane %v5987, 5
        %v6025 = vlaneseq
        %v6026 = vshrl.u32 %v6025, 7
        %6028 = vset.pattern.permute.xlu0 %v6026
        %6029 = vperm.xlu0 %6028, %v6024
        %v6030 = vpop.permute.xlu0 %6029
        %v6031 = vperm.slane %v5987, 6
        %v6032 = vlaneseq
        %v6033 = vshrl.u32 %v6032, 7
        %6035 = vset.pattern.permute.xlu0 %v6033
        %6036 = vperm.xlu0 %6035, %v6031
        %v6037 = vpop.permute.xlu0 %6036
        %v6038 = vperm.slane %v5987, 7
        %v6039 = vlaneseq
        %v6040 = vshrl.u32 %v6039, 7
        %6042 = vset.pattern.permute.xlu0 %v6040
        %6043 = vperm.xlu0 %6042, %v6038
        %v6044 = vpop.permute.xlu0 %6043
        %v6045 = vmul.f32 %v328, %v5995
        %v6046 = vmul.f32 %v329, %v6002
        %v6047 = vmul.f32 %v330, %v6009
        %v6048 = vmul.f32 %v331, %v6016
        %v6049 = vmul.f32 %v332, %v6023
        %v6050 = vmul.f32 %v333, %v6030
        %v6051 = vmul.f32 %v334, %v6037
        %v6052 = vmul.f32 %v335, %v6044
        %v6053 = vrot.slane %v6045, 4
        %v6054 = vmin.f32 %v6045, %v6053
        %v6055 = vrot.slane %v6054, 2
        %v6056 = vmin.f32 %v6054, %v6055
        %v6057 = vrot.slane %v6056, 1
        %v6058 = vmin.f32 %v6056, %v6057
        %v6059 = vrot.slane %v6046, 4
        %v6060 = vmin.f32 %v6046, %v6059
        %v6061 = vrot.slane %v6060, 2
        %v6062 = vmin.f32 %v6060, %v6061
        %v6063 = vrot.slane %v6062, 1
        %v6064 = vmin.f32 %v6062, %v6063
        %v6065 = vrot.slane %v6047, 4
        %v6066 = vmin.f32 %v6047, %v6065
        %v6067 = vrot.slane %v6066, 2
        %v6068 = vmin.f32 %v6066, %v6067
        %v6069 = vrot.slane %v6068, 1
        %v6070 = vmin.f32 %v6068, %v6069
        %v6071 = vrot.slane %v6048, 4
        %v6072 = vmin.f32 %v6048, %v6071
        %v6073 = vrot.slane %v6072, 2
        %v6074 = vmin.f32 %v6072, %v6073
        %v6075 = vrot.slane %v6074, 1
        %v6076 = vmin.f32 %v6074, %v6075
        %v6077 = vrot.slane %v6049, 4
        %v6078 = vmin.f32 %v6049, %v6077
        %v6079 = vrot.slane %v6078, 2
        %v6080 = vmin.f32 %v6078, %v6079
        %v6081 = vrot.slane %v6080, 1
        %v6082 = vmin.f32 %v6080, %v6081
        %v6083 = vrot.slane %v6050, 4
        %v6084 = vmin.f32 %v6050, %v6083
        %v6085 = vrot.slane %v6084, 2
        %v6086 = vmin.f32 %v6084, %v6085
        %v6087 = vrot.slane %v6086, 1
        %v6088 = vmin.f32 %v6086, %v6087
        %v6089 = vrot.slane %v6051, 4
        %v6090 = vmin.f32 %v6051, %v6089
        %v6091 = vrot.slane %v6090, 2
        %v6092 = vmin.f32 %v6090, %v6091
        %v6093 = vrot.slane %v6092, 1
        %v6094 = vmin.f32 %v6092, %v6093
        %v6095 = vrot.slane %v6052, 4
        %v6096 = vmin.f32 %v6052, %v6095
        %v6097 = vrot.slane %v6096, 2
        %v6098 = vmin.f32 %v6096, %v6097
        %v6099 = vrot.slane %v6098, 1
        %v6100 = vmin.f32 %v6098, %v6099
        %v6109 = vsel %vm5516, %v6064, %v6058
        %v6110 = vsel %vm5518, %v6070, %v6109
        %v6111 = vsel %vm5520, %v6076, %v6110
        %v6112 = vsel %vm5522, %v6082, %v6111
        %v6113 = vsel %vm5524, %v6088, %v6112
        %v6114 = vsel %vm5526, %v6094, %v6113
        %v6115 = vsel %vm5528, %v6100, %v6114
        %6117 = vst [vmem:[%s312] sm:$0xff] %v6115
        %s6118 = sand.u32 %s169, 1
        %s6119 = scalar_lea.sflag [#allocation4], %s6118
        %s6120 = sand.u32 %s169, 1
        %s6121 = smul.addr %s6120, 8
        %s6122 = scalar_lea.vmem [#allocation5], %s6121
        %p6123 = scmp.lt.s32.totalorder %s25, 1
        %s6124 = scalar_select %p6123, %s25, 1
        %s6125 = smul.addr %s6124, 8
        %s6126 = scalar_lea.vmem %s7, %s6125
        // Predicated region
        $region49: #{attention_birnn_forward.1} parent=43 // pred_check
          %p6127 = pneg %p179
        $region50: #{attention_birnn_forward.1} parent=43 // pred_check_branch
          %6129 = sbr.rel (%p6127) target = $region52
        $region51: #{attention_birnn_forward.1} parent=43 // pred_region
          %6131 = vsyncadd %s6119, 0
          %s6132 = smul.addr %s25, 8
          %s6133 = scalar_lea.hbm %s6, %s6132
          %s6135 = sshll.u32 %s6122, 4
          %s6136 = int_to_ptr.vmem [resolvable:$true] %s6135
          %s6137 = sshll.u32 %s6133, 4
          %s6138 = int_to_ptr.hbm [resolvable:$true] %s6137
          %6140 = dma.vmem_to_hbm [thread:$0]  %s6136, 128, %s6138, %s6119
        $region52: #{attention_birnn_forward.1} parent=43 // pred_fallthru
          _
        // Predicated region
        $region53: #{attention_birnn_forward.1} parent=43 // pred_check
          %p6141 = pneg %p205
        $region54: #{attention_birnn_forward.1} parent=43 // pred_check_branch
          %6143 = sbr.rel (%p6141) target = $region56
        $region55: #{attention_birnn_forward.1} parent=43 // pred_region
          _
        $region56: #{attention_birnn_forward.1} parent=43 // pred_fallthru
          _
      $region44: #{attention_birnn_forward.1} parent=5 // pred_fallthru
        _
      %p6144 = scmp.le.s32.totalorder 2, %s20
      // Predicated region
      $region57: #{attention_birnn_forward.1} parent=5 // pred_check
        %p6145 = pneg %p6144
      $region58: #{attention_birnn_forward.1} parent=5 // pred_check_branch
        %6147 = sbr.rel (%p6145) target = $region60
      $region59: #{attention_birnn_forward.1} parent=5 // pred_region
        %s6148 = ssub.s32 %s20, 2
        // Predicated region
        $region61: #{attention_birnn_forward.1} parent=59 // pred_check
          %p6149 = pneg %p185
        $region62: #{attention_birnn_forward.1} parent=59 // pred_check_branch
          %6151 = sbr.rel (%p6149) target = $region64
        $region63: #{attention_birnn_forward.1} parent=59 // pred_region
          %s6152 = sand.u32 %s170, 1
          %s6153 = scalar_lea.sflag [#allocation4], %s6152
          %s6154 = sand.u32 %s170, 1
          %s6155 = smul.addr %s6154, 8
          %s6156 = scalar_lea.vmem [#allocation5], %s6155
          %6158 = dma.done %s6153, 128
        $region64: #{attention_birnn_forward.1} parent=59 // pred_fallthru
          _
        // Predicated region
        $region65: #{attention_birnn_forward.1} parent=59 // pred_check
          %p6159 = pneg %p211
        $region66: #{attention_birnn_forward.1} parent=59 // pred_check_branch
          %6161 = sbr.rel (%p6159) target = $region68
        $region67: #{attention_birnn_forward.1} parent=59 // pred_region
          %p6162 = scmp.lt.s32.totalorder %s26, 1
          %s6163 = scalar_select %p6162, %s26, 1
          %s6164 = smul.addr %s6163, 8
          %s6165 = scalar_lea.vmem %s7, %s6164
        $region68: #{attention_birnn_forward.1} parent=59 // pred_fallthru
          _
      $region60: #{attention_birnn_forward.1} parent=5 // pred_fallthru
        _
    $region6: #{attention_birnn_forward.1} parent=1 // loop_footer
      %s24 = sadd.s32 1, %s20
    $region7: #{attention_birnn_forward.1} parent=1 // loop_footer_branch
      %19 = sbr.rel target = $region3
    $region8: #{attention_birnn_forward.1} parent=1 // loop_exit
      _
    %6166 = vsyncpa [#allocation3], 1
    %s6167 = scalar_lea.sflag [#allocation3], 1
    %6168 = vsyncpa %s6167, 1
    %6169 = vsyncpa [#allocation4], 1
    %s6170 = scalar_lea.sflag [#allocation4], 1
    %6171 = vsyncpa %s6170, 1

</llo_original>
